<compile_context>
chip_gen: v7x
topology: tpu7x:2x2x1
jax: 0.10.0
libtpu: 0.0.40
codegen_flags: <defaults>
</compile_context>

<pallas_src>
import jax
import jax.numpy as jnp
from jax import lax
from jax.experimental import pallas as pl
from jax.experimental.pallas import tpu as pltpu


def _round_up(x, m):
    return ((x + m - 1) // m) * m


def _choose_time_chunk(T, Bt, KP, OP):
    """Largest time chunk whose double-buffered streamed slabs stay within a
    conservative ~12 MiB VMEM budget (fits the 16/32 MiB scoped defaults on
    v5e/v6e/v7x and v7x's 64 MiB physical VMEM, leaving room for weights)."""
    budget = 12 * 1024 * 1024
    per_step = Bt * (2 * KP + OP) * 4          # lc in + h out + a out (f32)
    tc = max(1, budget // (2 * per_step))      # x2: double-buffered pipeline
    return int(min(T, tc))


def _make_rnn2_chunk_kernel(Tc):
    # Modest unroll: lets the LLO scheduler overlap the V matmul + log-softmax
    # (EUP exp/log, XLU lane reduce) of step t with the U-path matmul of step
    # t+1; bounded unroll keeps vreg pressure under the 64-vreg file.
    unroll = True if Tc <= 16 else 8

    def kernel(lc_ref, s0_ref, w_ref, beff_ref, vt_ref, vb_ref,
               a_ref, h_ref, s_scr):
        f32 = jnp.float32

        # Reset the recurrent state at the first time-chunk of every batch tile.
        @pl.when(pl.program_id(1) == 0)
        def _():
            s_scr[...] = s0_ref[...]

        def step(t, carry):
            # Merged single U-path dot: the scratch state already carries h at
            # lane offset F_OFF (disjoint from the lc lanes, which are zero
            # there), so the combined [Bt, KP] operand is just an add.
            xs = lc_ref[t] + s_scr[...]
            # Weight refs passed inline (not hoisted) to avoid keeping ~48
            # weight vregs live across the unrolled loop.
            s = jnp.dot(xs, w_ref[...], preferred_element_type=f32) + beff_ref[...]
            h = jnp.tanh(s)                    # real lanes at F_OFF..F_OFF+H-1
            z = jnp.dot(h, vt_ref[...], preferred_element_type=f32) + vb_ref[...]

            # log_softmax over lanes; padded logit columns carry a -1e30 bias so
            # exp underflows to 0 in f32 and they vanish from the sum.
            zmax = jnp.max(z, axis=1, keepdims=True)
            shifted = z - zmax
            lse = jnp.log(jnp.sum(jnp.exp(shifted), axis=1, keepdims=True))

            a_ref[t] = (shifted - lse).astype(a_ref.dtype)
            h_ref[t] = h.astype(h_ref.dtype)
            s_scr[...] = h                     # recurrence carry (pre-positioned)
            return carry

        lax.fori_loop(0, Tc, step, 0, unroll=unroll)

    return kernel


def rnn2_forward_sequence(language_seq, name_char_seq, s0, params):
    """Run the full sequence in one pallas_call.

    language_seq:  [T, B, n_lang]
    name_char_seq: [T, B, input_size]
    s0:            [B, hidden]
    Returns (a_seq [T, B, output], h_seq [T, B, hidden]).
    """
    language_seq = jnp.asarray(language_seq, jnp.float32)
    name_char_seq = jnp.asarray(name_char_seq, jnp.float32)
    s0 = jnp.asarray(s0, jnp.float32)

    T, B, n_lang = language_seq.shape
    in_sz = name_char_seq.shape[2]
    hidden = s0.shape[1]
    out_sz = params["V_w"].shape[0]

    F_real = n_lang + in_sz
    F_OFF = F_real                               # hidden lanes live right after lc lanes
    KP = _round_up(F_real + hidden, 128)         # merged operand / h lane width
    OP = _round_up(out_sz, 128)

    # Batch padding / tiling.  Batch tiles are an independent ("parallel") grid
    # axis -> on v7x the two TensorCores each run a batch shard of the recurrence.
    if B <= 128:
        Bt = _round_up(max(B, 8), 8)
        Bp = Bt
    else:
        Bt = 128
        Bp = _round_up(B, Bt)
    n_btiles = Bp // Bt

    # Time chunking (VMEM-budgeted).
    Tc = _choose_time_chunk(T, Bt, KP, OP)
    n_chunks = int(pl.cdiv(T, Tc))
    Tp = n_chunks * Tc

    U_w, U_b = params["U_w"], params["U_b"]
    W_w, W_b = params["W_w"], params["W_b"]
    V_w, V_b = params["V_w"], params["V_b"]

    # ---- Host-side weight prep ------------------------------------------------
    # Fold W into U_h:  s_prev @ W.T @ U_h.T == s_prev @ (U_h @ W).T,
    # and W_b @ U_h.T folds into the U bias.  Then merge the lc block and the
    # folded recurrent block into ONE [KP, KP] weight whose output columns are
    # shifted to F_OFF.., so h is produced already positioned for the next
    # step's merged operand (one MXU pass/step on the recurrence-critical path).
    U_lc = U_w[:, :F_real]                       # [hidden, F_real]
    U_h = U_w[:, F_real:]                        # [hidden, hidden]
    M = U_h @ W_w                                # [hidden, hidden]
    b_eff = U_b + W_b @ U_h.T                    # [hidden]

    w_comb = (
        jnp.zeros((KP, KP), jnp.float32)
        .at[:F_real, F_OFF:F_OFF + hidden].set(U_lc.T)
        .at[F_OFF:F_OFF + hidden, F_OFF:F_OFF + hidden].set(M.T)
    )
    beff = jnp.zeros((1, KP), jnp.float32).at[0, F_OFF:F_OFF + hidden].set(b_eff)
    v_t = jnp.zeros((KP, OP), jnp.float32).at[F_OFF:F_OFF + hidden, :out_sz].set(V_w.T)
    # -1e30 padded-logit bias is f32-only; use a dtype-aware constant if bf16.
    vb = jnp.full((1, OP), -1e30, jnp.float32).at[0, :out_sz].set(V_b)

    # ---- Activation prep ------------------------------------------------------
    lc_cat = jnp.concatenate([language_seq, name_char_seq], axis=2)   # [T,B,F_real]
    lc_seq = jnp.zeros((Tp, Bp, KP), jnp.float32).at[:T, :B, :F_real].set(lc_cat)
    s0_p = jnp.zeros((Bp, KP), jnp.float32).at[:B, F_OFF:F_OFF + hidden].set(s0)
    # Padded batch rows / trailing padded time steps compute row-independent
    # garbage that is stripped below and never feeds real rows.

    out_shape = (
        jax.ShapeDtypeStruct((Tp, Bp, OP), jnp.float32),
        jax.ShapeDtypeStruct((Tp, Bp, KP), jnp.float32),
    )

    def run(single_buffer_residents):
        def resident(shape, index_map):
            if single_buffer_residents:
                # Constant-block residents don't need double buffers; matters if
                # hidden / Tc scale up (esp. v7x's 64 MiB VMEM).
                return pl.BlockSpec(shape, index_map, pipeline_mode=pl.Buffered(1))
            return pl.BlockSpec(shape, index_map)

        in_specs = [
            pl.BlockSpec((Tc, Bt, KP), lambda b, c: (c, b, 0)),   # lc time chunk
            resident((Bt, KP), lambda b, c: (b, 0)),              # s0 (per batch tile)
            resident((KP, KP), lambda b, c: (0, 0)),              # merged U/W weight
            resident((1, KP), lambda b, c: (0, 0)),               # effective bias
            resident((KP, OP), lambda b, c: (0, 0)),              # V.T (row-shifted)
            resident((1, OP), lambda b, c: (0, 0)),               # V bias (-1e30 pads)
        ]
        out_specs = (
            pl.BlockSpec((Tc, Bt, OP), lambda b, c: (c, b, 0)),
            pl.BlockSpec((Tc, Bt, KP), lambda b, c: (c, b, 0)),
        )
        return pl.pallas_call(
            _make_rnn2_chunk_kernel(Tc),
            grid=(n_btiles, n_chunks),
            in_specs=in_specs,
            out_specs=out_specs,
            out_shape=out_shape,
            scratch_shapes=[pltpu.VMEM((Bt, KP), jnp.float32)],
            compiler_params=pltpu.CompilerParams(
                # batch tiles are independent; time chunks are a serial recurrence
                dimension_semantics=("parallel", "arbitrary"),
            ),
        )(lc_seq, s0_p, w_comb, beff, v_t, vb)

    try:
        a_seq, h_seq = run(True)
    except Exception:
        # pipeline_mode=pl.Buffered(1) unsupported on this jax version; fall back
        # to default double-buffered resident specs (identical semantics).
        a_seq, h_seq = run(False)

    return a_seq[:T, :B, :out_sz], h_seq[:T, :B, F_OFF:F_OFF + hidden]


def rnn2_forward(language, name_char, s_prev, params):
    """Single-step forward matching the PyTorch module's forward()."""
    a_seq, h_seq = rnn2_forward_sequence(
        language[None], name_char[None], s_prev, params
    )
    return a_seq[0], h_seq[0]


def init_params(key, n_languages, input_size, hidden_size, output_size):
    """Deterministic init mimicking torch.nn.Linear (uniform +-1/sqrt(fan_in))."""
    def linear(key, out_f, in_f):
        k1, k2 = jax.random.split(key)
        bound = 1.0 / jnp.sqrt(jnp.float32(in_f))
        w = jax.random.uniform(k1, (out_f, in_f), jnp.float32, -bound, bound)
        b = jax.random.uniform(k2, (out_f,), jnp.float32, -bound, bound)
        return w, b

    kU, kW, kV = jax.random.split(key, 3)
    U_w, U_b = linear(kU, hidden_size, n_languages + input_size + hidden_size)
    W_w, W_b = linear(kW, hidden_size, hidden_size)
    V_w, V_b = linear(kV, output_size, hidden_size)
    return dict(U_w=U_w, U_b=U_b, W_w=W_w, W_b=W_b, V_w=V_w, V_b=V_b)


def rnn2_reference_step(language, name_char, s_prev, params):
    h_prev = s_prev @ params["W_w"].T + params["W_b"]
    hcx = jnp.concatenate([language, name_char, h_prev], axis=1)
    s = hcx @ params["U_w"].T + params["U_b"]
    h = jnp.tanh(s)
    z = h @ params["V_w"].T + params["V_b"]
    a = jax.nn.log_softmax(z, axis=1)
    return a, h


if __name__ == "__main__":
    n_languages, input_size, hidden_size, output_size = 8, 16, 32, 8
    batch, seq_len = 2, 8

    key = jax.random.PRNGKey(0)
    kp, k1, k2 = jax.random.split(key, 3)
    params = init_params(kp, n_languages, input_size, hidden_size, output_size)

    lang_ids = jax.random.randint(k1, (seq_len, batch), 0, n_languages)
    char_ids = jax.random.randint(k2, (seq_len, batch), 0, input_size)
    language_seq = jax.nn.one_hot(lang_ids, n_languages, dtype=jnp.float32)
    name_char_seq = jax.nn.one_hot(char_ids, input_size, dtype=jnp.float32)
    s0 = jnp.zeros((batch, hidden_size), jnp.float32)

    # Whole sequence in one pallas_call (time-chunked, state in VMEM scratch).
    a_seq, h_seq = rnn2_forward_sequence(language_seq, name_char_seq, s0, params)
    jax.block_until_ready((a_seq, h_seq))
    assert a_seq.shape == (seq_len, batch, output_size)
    assert h_seq.shape == (seq_len, batch, hidden_size)

    # Check every step against a pure-JAX reference of the original module.
    s = s0
    for t in range(seq_len):
        a_ref, h_ref = rnn2_reference_step(language_seq[t], name_char_seq[t], s, params)
        assert jnp.allclose(a_seq[t], a_ref, atol=1e-4, rtol=1e-4)
        assert jnp.allclose(h_seq[t], h_ref, atol=1e-4, rtol=1e-4)
        s = h_ref

    # Single-step path (exact module forward signature).
    a1, h1 = rnn2_forward(language_seq[0], name_char_seq[0], s0, params)
    jax.block_until_ready((a1, h1))
    a1_ref, h1_ref = rnn2_reference_step(language_seq[0], name_char_seq[0], s0, params)
    assert jnp.allclose(a1, a1_ref, atol=1e-4, rtol=1e-4)
    assert jnp.allclose(h1, h1_ref, atol=1e-4, rtol=1e-4)

    print("KERNEL_OK")
</pallas_src>

<mosaic_0001>
module attributes {stable_mosaic.version = 11 : i64} {
  func.func @kernel(%arg0: i32, %arg1: i32, %arg2: memref<8x8x128xf32, #tpu.memory_space<vmem>>, %arg3: memref<8x128xf32, #tpu.memory_space<vmem>>, %arg4: memref<128x128xf32, #tpu.memory_space<vmem>>, %arg5: memref<1x128xf32, #tpu.memory_space<vmem>>, %arg6: memref<128x128xf32, #tpu.memory_space<vmem>>, %arg7: memref<1x128xf32, #tpu.memory_space<vmem>>, %arg8: memref<8x8x128xf32, #tpu.memory_space<vmem>>, %arg9: memref<8x8x128xf32, #tpu.memory_space<vmem>>, %arg10: memref<8x128xf32, #tpu.memory_space<vmem>>) attributes {dimension_semantics = [#tpu.dimension_semantics<parallel>, #tpu.dimension_semantics<arbitrary>], iteration_bounds = array<i64: 1, 1>, scalar_prefetch = 0 : i64, scratch_operands = 1 : i64, tpu.core_type = #tpu.core_type<tc>, window_params = [{transform_indices = @transform_0, window_bounds = array<i64: 8, 8, 128>}, {pipeline_mode = #tpu.pipeline_mode<synchronous>, transform_indices = @transform_1, window_bounds = array<i64: 8, 128>}, {pipeline_mode = #tpu.pipeline_mode<synchronous>, transform_indices = @transform_2, window_bounds = array<i64: 128, 128>}, {pipeline_mode = #tpu.pipeline_mode<synchronous>, transform_indices = @transform_3, window_bounds = array<i64: 1, 128>}, {pipeline_mode = #tpu.pipeline_mode<synchronous>, transform_indices = @transform_4, window_bounds = array<i64: 128, 128>}, {pipeline_mode = #tpu.pipeline_mode<synchronous>, transform_indices = @transform_5, window_bounds = array<i64: 1, 128>}, {transform_indices = @transform_6, window_bounds = array<i64: 8, 8, 128>}, {transform_indices = @transform_7, window_bounds = array<i64: 8, 8, 128>}]} {
    %c0_i32 = arith.constant 0 : i32
    %0 = arith.cmpi eq, %arg1, %c0_i32 : i32
    %1 = arith.extui %0 : i1 to i32
    %c0_i32_0 = arith.constant 0 : i32
    %2 = arith.cmpi ne, %1, %c0_i32_0 : i32
    scf.if %2 {
      %c0_176 = arith.constant 0 : index
      %c0_177 = arith.constant 0 : index
      %283 = vector.load %arg3[%c0_176, %c0_177] : memref<8x128xf32, #tpu.memory_space<vmem>>, vector<8x128xf32>
      %c0_178 = arith.constant 0 : index
      %c0_179 = arith.constant 0 : index
      %284 = vector.load %arg10[%c0_178, %c0_179] : memref<8x128xf32, #tpu.memory_space<vmem>>, vector<8x128xf32>
      tpu.vector_store %arg10[%c0_178, %c0_179], %283 {strides = array<i32>} : memref<8x128xf32, #tpu.memory_space<vmem>>, vector<8x128xf32>,
    } else {
    }
    %c0_i32_1 = arith.constant 0 : i32
    %3 = arith.index_cast %c0_i32_1 : i32 to index
    %c0 = arith.constant 0 : index
    %c0_2 = arith.constant 0 : index
    %4 = vector.load %arg2[%3, %c0, %c0_2] : memref<8x8x128xf32, #tpu.memory_space<vmem>>, vector<1x8x128xf32>
    %5 = vector.shape_cast %4 : vector<1x8x128xf32> to vector<8x128xf32>
    %c0_3 = arith.constant 0 : index
    %c0_4 = arith.constant 0 : index
    %6 = vector.load %arg10[%c0_3, %c0_4] : memref<8x128xf32, #tpu.memory_space<vmem>>, vector<8x128xf32>
    %7 = arith.addf %5, %6 : vector<8x128xf32>
    %c0_5 = arith.constant 0 : index
    %c0_6 = arith.constant 0 : index
    %8 = vector.load %arg4[%c0_5, %c0_6] : memref<128x128xf32, #tpu.memory_space<vmem>>, vector<128x128xf32>
    %cst = arith.constant dense<0.000000e+00> : vector<8x128xf32>
    %9 = tpu.matmul %7, %8, %cst {dimension_numbers = #tpu.dot_dimension_numbers<[1], [0], [0], [1], [0, 0, 1, 1], [], []>} : vector<8x128xf32>, vector<128x128xf32>, vector<8x128xf32> -> vector<8x128xf32>
    %c0_7 = arith.constant 0 : index
    %c0_8 = arith.constant 0 : index
    %10 = vector.load %arg5[%c0_7, %c0_8] : memref<1x128xf32, #tpu.memory_space<vmem>>, vector<1x128xf32>
    %11 = vector.broadcast %10 : vector<1x128xf32> to vector<8x128xf32>
    %12 = arith.addf %9, %11 : vector<8x128xf32>
    %13 = math.tanh %12 : vector<8x128xf32>
    %c0_9 = arith.constant 0 : index
    %c0_10 = arith.constant 0 : index
    %14 = vector.load %arg6[%c0_9, %c0_10] : memref<128x128xf32, #tpu.memory_space<vmem>>, vector<128x128xf32>
    %cst_11 = arith.constant dense<0.000000e+00> : vector<8x128xf32>
    %15 = tpu.matmul %13, %14, %cst_11 {dimension_numbers = #tpu.dot_dimension_numbers<[1], [0], [0], [1], [0, 0, 1, 1], [], []>} : vector<8x128xf32>, vector<128x128xf32>, vector<8x128xf32> -> vector<8x128xf32>
    %c0_12 = arith.constant 0 : index
    %c0_13 = arith.constant 0 : index
    %16 = vector.load %arg7[%c0_12, %c0_13] : memref<1x128xf32, #tpu.memory_space<vmem>>, vector<1x128xf32>
    %17 = vector.broadcast %16 : vector<1x128xf32> to vector<8x128xf32>
    %18 = arith.addf %15, %17 : vector<8x128xf32>
    %cst_14 = arith.constant dense<0xFF800000> : vector<8xf32>
    %19 = vector.multi_reduction <maximumf>, %18, %cst_14 [1] : vector<8x128xf32> to vector<8xf32>
    %20 = vector.shape_cast %19 : vector<8xf32> to vector<8x1xf32>
    %21 = vector.broadcast %20 : vector<8x1xf32> to vector<8x128xf32>
    %22 = arith.subf %18, %21 : vector<8x128xf32>
    %23 = math.exp %22 : vector<8x128xf32>
    %cst_15 = arith.constant dense<0.000000e+00> : vector<8xf32>
    %24 = vector.multi_reduction <add>, %23, %cst_15 [1] : vector<8x128xf32> to vector<8xf32>
    %25 = vector.shape_cast %24 : vector<8xf32> to vector<8x1xf32>
    %26 = math.log %25 : vector<8x1xf32>
    %27 = vector.broadcast %26 : vector<8x1xf32> to vector<8x128xf32>
    %28 = arith.subf %22, %27 : vector<8x128xf32>
    %29 = arith.index_cast %c0_i32_1 : i32 to index
    %c0_16 = arith.constant 0 : index
    %c0_17 = arith.constant 0 : index
    %30 = vector.load %arg8[%29, %c0_16, %c0_17] : memref<8x8x128xf32, #tpu.memory_space<vmem>>, vector<1x8x128xf32>
    %31 = vector.shape_cast %30 : vector<1x8x128xf32> to vector<8x128xf32>
    %32 = vector.shape_cast %28 : vector<8x128xf32> to vector<1x8x128xf32>
    tpu.vector_store %arg8[%29, %c0_16, %c0_17], %32 {strides = array<i32>} : memref<8x8x128xf32, #tpu.memory_space<vmem>>, vector<1x8x128xf32>,
    %33 = arith.index_cast %c0_i32_1 : i32 to index
    %c0_18 = arith.constant 0 : index
    %c0_19 = arith.constant 0 : index
    %34 = vector.load %arg9[%33, %c0_18, %c0_19] : memref<8x8x128xf32, #tpu.memory_space<vmem>>, vector<1x8x128xf32>
    %35 = vector.shape_cast %34 : vector<1x8x128xf32> to vector<8x128xf32>
    %36 = vector.shape_cast %13 : vector<8x128xf32> to vector<1x8x128xf32>
    tpu.vector_store %arg9[%33, %c0_18, %c0_19], %36 {strides = array<i32>} : memref<8x8x128xf32, #tpu.memory_space<vmem>>, vector<1x8x128xf32>,
    %c0_20 = arith.constant 0 : index
    %c0_21 = arith.constant 0 : index
    %37 = vector.load %arg10[%c0_20, %c0_21] : memref<8x128xf32, #tpu.memory_space<vmem>>, vector<8x128xf32>
    tpu.vector_store %arg10[%c0_20, %c0_21], %13 {strides = array<i32>} : memref<8x128xf32, #tpu.memory_space<vmem>>, vector<8x128xf32>,
    %c1_i32 = arith.constant 1 : i32
    %38 = arith.index_cast %c1_i32 : i32 to index
    %c0_22 = arith.constant 0 : index
    %c0_23 = arith.constant 0 : index
    %39 = vector.load %arg2[%38, %c0_22, %c0_23] : memref<8x8x128xf32, #tpu.memory_space<vmem>>, vector<1x8x128xf32>
    %40 = vector.shape_cast %39 : vector<1x8x128xf32> to vector<8x128xf32>
    %c0_24 = arith.constant 0 : index
    %c0_25 = arith.constant 0 : index
    %41 = vector.load %arg10[%c0_24, %c0_25] : memref<8x128xf32, #tpu.memory_space<vmem>>, vector<8x128xf32>
    %42 = arith.addf %40, %41 : vector<8x128xf32>
    %c0_26 = arith.constant 0 : index
    %c0_27 = arith.constant 0 : index
    %43 = vector.load %arg4[%c0_26, %c0_27] : memref<128x128xf32, #tpu.memory_space<vmem>>, vector<128x128xf32>
    %cst_28 = arith.constant dense<0.000000e+00> : vector<8x128xf32>
    %44 = tpu.matmul %42, %43, %cst_28 {dimension_numbers = #tpu.dot_dimension_numbers<[1], [0], [0], [1], [0, 0, 1, 1], [], []>} : vector<8x128xf32>, vector<128x128xf32>, vector<8x128xf32> -> vector<8x128xf32>
    %c0_29 = arith.constant 0 : index
    %c0_30 = arith.constant 0 : index
    %45 = vector.load %arg5[%c0_29, %c0_30] : memref<1x128xf32, #tpu.memory_space<vmem>>, vector<1x128xf32>
    %46 = vector.broadcast %45 : vector<1x128xf32> to vector<8x128xf32>
    %47 = arith.addf %44, %46 : vector<8x128xf32>
    %48 = math.tanh %47 : vector<8x128xf32>
    %c0_31 = arith.constant 0 : index
    %c0_32 = arith.constant 0 : index
    %49 = vector.load %arg6[%c0_31, %c0_32] : memref<128x128xf32, #tpu.memory_space<vmem>>, vector<128x128xf32>
    %cst_33 = arith.constant dense<0.000000e+00> : vector<8x128xf32>
    %50 = tpu.matmul %48, %49, %cst_33 {dimension_numbers = #tpu.dot_dimension_numbers<[1], [0], [0], [1], [0, 0, 1, 1], [], []>} : vector<8x128xf32>, vector<128x128xf32>, vector<8x128xf32> -> vector<8x128xf32>
    %c0_34 = arith.constant 0 : index
    %c0_35 = arith.constant 0 : index
    %51 = vector.load %arg7[%c0_34, %c0_35] : memref<1x128xf32, #tpu.memory_space<vmem>>, vector<1x128xf32>
    %52 = vector.broadcast %51 : vector<1x128xf32> to vector<8x128xf32>
    %53 = arith.addf %50, %52 : vector<8x128xf32>
    %cst_36 = arith.constant dense<0xFF800000> : vector<8xf32>
    %54 = vector.multi_reduction <maximumf>, %53, %cst_36 [1] : vector<8x128xf32> to vector<8xf32>
    %55 = vector.shape_cast %54 : vector<8xf32> to vector<8x1xf32>
    %56 = vector.broadcast %55 : vector<8x1xf32> to vector<8x128xf32>
    %57 = arith.subf %53, %56 : vector<8x128xf32>
    %58 = math.exp %57 : vector<8x128xf32>
    %cst_37 = arith.constant dense<0.000000e+00> : vector<8xf32>
    %59 = vector.multi_reduction <add>, %58, %cst_37 [1] : vector<8x128xf32> to vector<8xf32>
    %60 = vector.shape_cast %59 : vector<8xf32> to vector<8x1xf32>
    %61 = math.log %60 : vector<8x1xf32>
    %62 = vector.broadcast %61 : vector<8x1xf32> to vector<8x128xf32>
    %63 = arith.subf %57, %62 : vector<8x128xf32>
    %64 = arith.index_cast %c1_i32 : i32 to index
    %c0_38 = arith.constant 0 : index
    %c0_39 = arith.constant 0 : index
    %65 = vector.load %arg8[%64, %c0_38, %c0_39] : memref<8x8x128xf32, #tpu.memory_space<vmem>>, vector<1x8x128xf32>
    %66 = vector.shape_cast %65 : vector<1x8x128xf32> to vector<8x128xf32>
    %67 = vector.shape_cast %63 : vector<8x128xf32> to vector<1x8x128xf32>
    tpu.vector_store %arg8[%64, %c0_38, %c0_39], %67 {strides = array<i32>} : memref<8x8x128xf32, #tpu.memory_space<vmem>>, vector<1x8x128xf32>,
    %68 = arith.index_cast %c1_i32 : i32 to index
    %c0_40 = arith.constant 0 : index
    %c0_41 = arith.constant 0 : index
    %69 = vector.load %arg9[%68, %c0_40, %c0_41] : memref<8x8x128xf32, #tpu.memory_space<vmem>>, vector<1x8x128xf32>
    %70 = vector.shape_cast %69 : vector<1x8x128xf32> to vector<8x128xf32>
    %71 = vector.shape_cast %48 : vector<8x128xf32> to vector<1x8x128xf32>
    tpu.vector_store %arg9[%68, %c0_40, %c0_41], %71 {strides = array<i32>} : memref<8x8x128xf32, #tpu.memory_space<vmem>>, vector<1x8x128xf32>,
    %c0_42 = arith.constant 0 : index
    %c0_43 = arith.constant 0 : index
    %72 = vector.load %arg10[%c0_42, %c0_43] : memref<8x128xf32, #tpu.memory_space<vmem>>, vector<8x128xf32>
    tpu.vector_store %arg10[%c0_42, %c0_43], %48 {strides = array<i32>} : memref<8x128xf32, #tpu.memory_space<vmem>>, vector<8x128xf32>,
    %c2_i32 = arith.constant 2 : i32
    %73 = arith.index_cast %c2_i32 : i32 to index
    %c0_44 = arith.constant 0 : index
    %c0_45 = arith.constant 0 : index
    %74 = vector.load %arg2[%73, %c0_44, %c0_45] : memref<8x8x128xf32, #tpu.memory_space<vmem>>, vector<1x8x128xf32>
    %75 = vector.shape_cast %74 : vector<1x8x128xf32> to vector<8x128xf32>
    %c0_46 = arith.constant 0 : index
    %c0_47 = arith.constant 0 : index
    %76 = vector.load %arg10[%c0_46, %c0_47] : memref<8x128xf32, #tpu.memory_space<vmem>>, vector<8x128xf32>
    %77 = arith.addf %75, %76 : vector<8x128xf32>
    %c0_48 = arith.constant 0 : index
    %c0_49 = arith.constant 0 : index
    %78 = vector.load %arg4[%c0_48, %c0_49] : memref<128x128xf32, #tpu.memory_space<vmem>>, vector<128x128xf32>
    %cst_50 = arith.constant dense<0.000000e+00> : vector<8x128xf32>
    %79 = tpu.matmul %77, %78, %cst_50 {dimension_numbers = #tpu.dot_dimension_numbers<[1], [0], [0], [1], [0, 0, 1, 1], [], []>} : vector<8x128xf32>, vector<128x128xf32>, vector<8x128xf32> -> vector<8x128xf32>
    %c0_51 = arith.constant 0 : index
    %c0_52 = arith.constant 0 : index
    %80 = vector.load %arg5[%c0_51, %c0_52] : memref<1x128xf32, #tpu.memory_space<vmem>>, vector<1x128xf32>
    %81 = vector.broadcast %80 : vector<1x128xf32> to vector<8x128xf32>
    %82 = arith.addf %79, %81 : vector<8x128xf32>
    %83 = math.tanh %82 : vector<8x128xf32>
    %c0_53 = arith.constant 0 : index
    %c0_54 = arith.constant 0 : index
    %84 = vector.load %arg6[%c0_53, %c0_54] : memref<128x128xf32, #tpu.memory_space<vmem>>, vector<128x128xf32>
    %cst_55 = arith.constant dense<0.000000e+00> : vector<8x128xf32>
    %85 = tpu.matmul %83, %84, %cst_55 {dimension_numbers = #tpu.dot_dimension_numbers<[1], [0], [0], [1], [0, 0, 1, 1], [], []>} : vector<8x128xf32>, vector<128x128xf32>, vector<8x128xf32> -> vector<8x128xf32>
    %c0_56 = arith.constant 0 : index
    %c0_57 = arith.constant 0 : index
    %86 = vector.load %arg7[%c0_56, %c0_57] : memref<1x128xf32, #tpu.memory_space<vmem>>, vector<1x128xf32>
    %87 = vector.broadcast %86 : vector<1x128xf32> to vector<8x128xf32>
    %88 = arith.addf %85, %87 : vector<8x128xf32>
    %cst_58 = arith.constant dense<0xFF800000> : vector<8xf32>
    %89 = vector.multi_reduction <maximumf>, %88, %cst_58 [1] : vector<8x128xf32> to vector<8xf32>
    %90 = vector.shape_cast %89 : vector<8xf32> to vector<8x1xf32>
    %91 = vector.broadcast %90 : vector<8x1xf32> to vector<8x128xf32>
    %92 = arith.subf %88, %91 : vector<8x128xf32>
    %93 = math.exp %92 : vector<8x128xf32>
    %cst_59 = arith.constant dense<0.000000e+00> : vector<8xf32>
    %94 = vector.multi_reduction <add>, %93, %cst_59 [1] : vector<8x128xf32> to vector<8xf32>
    %95 = vector.shape_cast %94 : vector<8xf32> to vector<8x1xf32>
    %96 = math.log %95 : vector<8x1xf32>
    %97 = vector.broadcast %96 : vector<8x1xf32> to vector<8x128xf32>
    %98 = arith.subf %92, %97 : vector<8x128xf32>
    %99 = arith.index_cast %c2_i32 : i32 to index
    %c0_60 = arith.constant 0 : index
    %c0_61 = arith.constant 0 : index
    %100 = vector.load %arg8[%99, %c0_60, %c0_61] : memref<8x8x128xf32, #tpu.memory_space<vmem>>, vector<1x8x128xf32>
    %101 = vector.shape_cast %100 : vector<1x8x128xf32> to vector<8x128xf32>
    %102 = vector.shape_cast %98 : vector<8x128xf32> to vector<1x8x128xf32>
    tpu.vector_store %arg8[%99, %c0_60, %c0_61], %102 {strides = array<i32>} : memref<8x8x128xf32, #tpu.memory_space<vmem>>, vector<1x8x128xf32>,
    %103 = arith.index_cast %c2_i32 : i32 to index
    %c0_62 = arith.constant 0 : index
    %c0_63 = arith.constant 0 : index
    %104 = vector.load %arg9[%103, %c0_62, %c0_63] : memref<8x8x128xf32, #tpu.memory_space<vmem>>, vector<1x8x128xf32>
    %105 = vector.shape_cast %104 : vector<1x8x128xf32> to vector<8x128xf32>
    %106 = vector.shape_cast %83 : vector<8x128xf32> to vector<1x8x128xf32>
    tpu.vector_store %arg9[%103, %c0_62, %c0_63], %106 {strides = array<i32>} : memref<8x8x128xf32, #tpu.memory_space<vmem>>, vector<1x8x128xf32>,
    %c0_64 = arith.constant 0 : index
    %c0_65 = arith.constant 0 : index
    %107 = vector.load %arg10[%c0_64, %c0_65] : memref<8x128xf32, #tpu.memory_space<vmem>>, vector<8x128xf32>
    tpu.vector_store %arg10[%c0_64, %c0_65], %83 {strides = array<i32>} : memref<8x128xf32, #tpu.memory_space<vmem>>, vector<8x128xf32>,
    %c3_i32 = arith.constant 3 : i32
    %108 = arith.index_cast %c3_i32 : i32 to index
    %c0_66 = arith.constant 0 : index
    %c0_67 = arith.constant 0 : index
    %109 = vector.load %arg2[%108, %c0_66, %c0_67] : memref<8x8x128xf32, #tpu.memory_space<vmem>>, vector<1x8x128xf32>
    %110 = vector.shape_cast %109 : vector<1x8x128xf32> to vector<8x128xf32>
    %c0_68 = arith.constant 0 : index
    %c0_69 = arith.constant 0 : index
    %111 = vector.load %arg10[%c0_68, %c0_69] : memref<8x128xf32, #tpu.memory_space<vmem>>, vector<8x128xf32>
    %112 = arith.addf %110, %111 : vector<8x128xf32>
    %c0_70 = arith.constant 0 : index
    %c0_71 = arith.constant 0 : index
    %113 = vector.load %arg4[%c0_70, %c0_71] : memref<128x128xf32, #tpu.memory_space<vmem>>, vector<128x128xf32>
    %cst_72 = arith.constant dense<0.000000e+00> : vector<8x128xf32>
    %114 = tpu.matmul %112, %113, %cst_72 {dimension_numbers = #tpu.dot_dimension_numbers<[1], [0], [0], [1], [0, 0, 1, 1], [], []>} : vector<8x128xf32>, vector<128x128xf32>, vector<8x128xf32> -> vector<8x128xf32>
    %c0_73 = arith.constant 0 : index
    %c0_74 = arith.constant 0 : index
    %115 = vector.load %arg5[%c0_73, %c0_74] : memref<1x128xf32, #tpu.memory_space<vmem>>, vector<1x128xf32>
    %116 = vector.broadcast %115 : vector<1x128xf32> to vector<8x128xf32>
    %117 = arith.addf %114, %116 : vector<8x128xf32>
    %118 = math.tanh %117 : vector<8x128xf32>
    %c0_75 = arith.constant 0 : index
    %c0_76 = arith.constant 0 : index
    %119 = vector.load %arg6[%c0_75, %c0_76] : memref<128x128xf32, #tpu.memory_space<vmem>>, vector<128x128xf32>
    %cst_77 = arith.constant dense<0.000000e+00> : vector<8x128xf32>
    %120 = tpu.matmul %118, %119, %cst_77 {dimension_numbers = #tpu.dot_dimension_numbers<[1], [0], [0], [1], [0, 0, 1, 1], [], []>} : vector<8x128xf32>, vector<128x128xf32>, vector<8x128xf32> -> vector<8x128xf32>
    %c0_78 = arith.constant 0 : index
    %c0_79 = arith.constant 0 : index
    %121 = vector.load %arg7[%c0_78, %c0_79] : memref<1x128xf32, #tpu.memory_space<vmem>>, vector<1x128xf32>
    %122 = vector.broadcast %121 : vector<1x128xf32> to vector<8x128xf32>
    %123 = arith.addf %120, %122 : vector<8x128xf32>
    %cst_80 = arith.constant dense<0xFF800000> : vector<8xf32>
    %124 = vector.multi_reduction <maximumf>, %123, %cst_80 [1] : vector<8x128xf32> to vector<8xf32>
    %125 = vector.shape_cast %124 : vector<8xf32> to vector<8x1xf32>
    %126 = vector.broadcast %125 : vector<8x1xf32> to vector<8x128xf32>
    %127 = arith.subf %123, %126 : vector<8x128xf32>
    %128 = math.exp %127 : vector<8x128xf32>
    %cst_81 = arith.constant dense<0.000000e+00> : vector<8xf32>
    %129 = vector.multi_reduction <add>, %128, %cst_81 [1] : vector<8x128xf32> to vector<8xf32>
    %130 = vector.shape_cast %129 : vector<8xf32> to vector<8x1xf32>
    %131 = math.log %130 : vector<8x1xf32>
    %132 = vector.broadcast %131 : vector<8x1xf32> to vector<8x128xf32>
    %133 = arith.subf %127, %132 : vector<8x128xf32>
    %134 = arith.index_cast %c3_i32 : i32 to index
    %c0_82 = arith.constant 0 : index
    %c0_83 = arith.constant 0 : index
    %135 = vector.load %arg8[%134, %c0_82, %c0_83] : memref<8x8x128xf32, #tpu.memory_space<vmem>>, vector<1x8x128xf32>
    %136 = vector.shape_cast %135 : vector<1x8x128xf32> to vector<8x128xf32>
    %137 = vector.shape_cast %133 : vector<8x128xf32> to vector<1x8x128xf32>
    tpu.vector_store %arg8[%134, %c0_82, %c0_83], %137 {strides = array<i32>} : memref<8x8x128xf32, #tpu.memory_space<vmem>>, vector<1x8x128xf32>,
    %138 = arith.index_cast %c3_i32 : i32 to index
    %c0_84 = arith.constant 0 : index
    %c0_85 = arith.constant 0 : index
    %139 = vector.load %arg9[%138, %c0_84, %c0_85] : memref<8x8x128xf32, #tpu.memory_space<vmem>>, vector<1x8x128xf32>
    %140 = vector.shape_cast %139 : vector<1x8x128xf32> to vector<8x128xf32>
    %141 = vector.shape_cast %118 : vector<8x128xf32> to vector<1x8x128xf32>
    tpu.vector_store %arg9[%138, %c0_84, %c0_85], %141 {strides = array<i32>} : memref<8x8x128xf32, #tpu.memory_space<vmem>>, vector<1x8x128xf32>,
    %c0_86 = arith.constant 0 : index
    %c0_87 = arith.constant 0 : index
    %142 = vector.load %arg10[%c0_86, %c0_87] : memref<8x128xf32, #tpu.memory_space<vmem>>, vector<8x128xf32>
    tpu.vector_store %arg10[%c0_86, %c0_87], %118 {strides = array<i32>} : memref<8x128xf32, #tpu.memory_space<vmem>>, vector<8x128xf32>,
    %c4_i32 = arith.constant 4 : i32
    %143 = arith.index_cast %c4_i32 : i32 to index
    %c0_88 = arith.constant 0 : index
    %c0_89 = arith.constant 0 : index
    %144 = vector.load %arg2[%143, %c0_88, %c0_89] : memref<8x8x128xf32, #tpu.memory_space<vmem>>, vector<1x8x128xf32>
    %145 = vector.shape_cast %144 : vector<1x8x128xf32> to vector<8x128xf32>
    %c0_90 = arith.constant 0 : index
    %c0_91 = arith.constant 0 : index
    %146 = vector.load %arg10[%c0_90, %c0_91] : memref<8x128xf32, #tpu.memory_space<vmem>>, vector<8x128xf32>
    %147 = arith.addf %145, %146 : vector<8x128xf32>
    %c0_92 = arith.constant 0 : index
    %c0_93 = arith.constant 0 : index
    %148 = vector.load %arg4[%c0_92, %c0_93] : memref<128x128xf32, #tpu.memory_space<vmem>>, vector<128x128xf32>
    %cst_94 = arith.constant dense<0.000000e+00> : vector<8x128xf32>
    %149 = tpu.matmul %147, %148, %cst_94 {dimension_numbers = #tpu.dot_dimension_numbers<[1], [0], [0], [1], [0, 0, 1, 1], [], []>} : vector<8x128xf32>, vector<128x128xf32>, vector<8x128xf32> -> vector<8x128xf32>
    %c0_95 = arith.constant 0 : index
    %c0_96 = arith.constant 0 : index
    %150 = vector.load %arg5[%c0_95, %c0_96] : memref<1x128xf32, #tpu.memory_space<vmem>>, vector<1x128xf32>
    %151 = vector.broadcast %150 : vector<1x128xf32> to vector<8x128xf32>
    %152 = arith.addf %149, %151 : vector<8x128xf32>
    %153 = math.tanh %152 : vector<8x128xf32>
    %c0_97 = arith.constant 0 : index
    %c0_98 = arith.constant 0 : index
    %154 = vector.load %arg6[%c0_97, %c0_98] : memref<128x128xf32, #tpu.memory_space<vmem>>, vector<128x128xf32>
    %cst_99 = arith.constant dense<0.000000e+00> : vector<8x128xf32>
    %155 = tpu.matmul %153, %154, %cst_99 {dimension_numbers = #tpu.dot_dimension_numbers<[1], [0], [0], [1], [0, 0, 1, 1], [], []>} : vector<8x128xf32>, vector<128x128xf32>, vector<8x128xf32> -> vector<8x128xf32>
    %c0_100 = arith.constant 0 : index
    %c0_101 = arith.constant 0 : index
    %156 = vector.load %arg7[%c0_100, %c0_101] : memref<1x128xf32, #tpu.memory_space<vmem>>, vector<1x128xf32>
    %157 = vector.broadcast %156 : vector<1x128xf32> to vector<8x128xf32>
    %158 = arith.addf %155, %157 : vector<8x128xf32>
    %cst_102 = arith.constant dense<0xFF800000> : vector<8xf32>
    %159 = vector.multi_reduction <maximumf>, %158, %cst_102 [1] : vector<8x128xf32> to vector<8xf32>
    %160 = vector.shape_cast %159 : vector<8xf32> to vector<8x1xf32>
    %161 = vector.broadcast %160 : vector<8x1xf32> to vector<8x128xf32>
    %162 = arith.subf %158, %161 : vector<8x128xf32>
    %163 = math.exp %162 : vector<8x128xf32>
    %cst_103 = arith.constant dense<0.000000e+00> : vector<8xf32>
    %164 = vector.multi_reduction <add>, %163, %cst_103 [1] : vector<8x128xf32> to vector<8xf32>
    %165 = vector.shape_cast %164 : vector<8xf32> to vector<8x1xf32>
    %166 = math.log %165 : vector<8x1xf32>
    %167 = vector.broadcast %166 : vector<8x1xf32> to vector<8x128xf32>
    %168 = arith.subf %162, %167 : vector<8x128xf32>
    %169 = arith.index_cast %c4_i32 : i32 to index
    %c0_104 = arith.constant 0 : index
    %c0_105 = arith.constant 0 : index
    %170 = vector.load %arg8[%169, %c0_104, %c0_105] : memref<8x8x128xf32, #tpu.memory_space<vmem>>, vector<1x8x128xf32>
    %171 = vector.shape_cast %170 : vector<1x8x128xf32> to vector<8x128xf32>
    %172 = vector.shape_cast %168 : vector<8x128xf32> to vector<1x8x128xf32>
    tpu.vector_store %arg8[%169, %c0_104, %c0_105], %172 {strides = array<i32>} : memref<8x8x128xf32, #tpu.memory_space<vmem>>, vector<1x8x128xf32>,
    %173 = arith.index_cast %c4_i32 : i32 to index
    %c0_106 = arith.constant 0 : index
    %c0_107 = arith.constant 0 : index
    %174 = vector.load %arg9[%173, %c0_106, %c0_107] : memref<8x8x128xf32, #tpu.memory_space<vmem>>, vector<1x8x128xf32>
    %175 = vector.shape_cast %174 : vector<1x8x128xf32> to vector<8x128xf32>
    %176 = vector.shape_cast %153 : vector<8x128xf32> to vector<1x8x128xf32>
    tpu.vector_store %arg9[%173, %c0_106, %c0_107], %176 {strides = array<i32>} : memref<8x8x128xf32, #tpu.memory_space<vmem>>, vector<1x8x128xf32>,
    %c0_108 = arith.constant 0 : index
    %c0_109 = arith.constant 0 : index
    %177 = vector.load %arg10[%c0_108, %c0_109] : memref<8x128xf32, #tpu.memory_space<vmem>>, vector<8x128xf32>
    tpu.vector_store %arg10[%c0_108, %c0_109], %153 {strides = array<i32>} : memref<8x128xf32, #tpu.memory_space<vmem>>, vector<8x128xf32>,
    %c5_i32 = arith.constant 5 : i32
    %178 = arith.index_cast %c5_i32 : i32 to index
    %c0_110 = arith.constant 0 : index
    %c0_111 = arith.constant 0 : index
    %179 = vector.load %arg2[%178, %c0_110, %c0_111] : memref<8x8x128xf32, #tpu.memory_space<vmem>>, vector<1x8x128xf32>
    %180 = vector.shape_cast %179 : vector<1x8x128xf32> to vector<8x128xf32>
    %c0_112 = arith.constant 0 : index
    %c0_113 = arith.constant 0 : index
    %181 = vector.load %arg10[%c0_112, %c0_113] : memref<8x128xf32, #tpu.memory_space<vmem>>, vector<8x128xf32>
    %182 = arith.addf %180, %181 : vector<8x128xf32>
    %c0_114 = arith.constant 0 : index
    %c0_115 = arith.constant 0 : index
    %183 = vector.load %arg4[%c0_114, %c0_115] : memref<128x128xf32, #tpu.memory_space<vmem>>, vector<128x128xf32>
    %cst_116 = arith.constant dense<0.000000e+00> : vector<8x128xf32>
    %184 = tpu.matmul %182, %183, %cst_116 {dimension_numbers = #tpu.dot_dimension_numbers<[1], [0], [0], [1], [0, 0, 1, 1], [], []>} : vector<8x128xf32>, vector<128x128xf32>, vector<8x128xf32> -> vector<8x128xf32>
    %c0_117 = arith.constant 0 : index
    %c0_118 = arith.constant 0 : index
    %185 = vector.load %arg5[%c0_117, %c0_118] : memref<1x128xf32, #tpu.memory_space<vmem>>, vector<1x128xf32>
    %186 = vector.broadcast %185 : vector<1x128xf32> to vector<8x128xf32>
    %187 = arith.addf %184, %186 : vector<8x128xf32>
    %188 = math.tanh %187 : vector<8x128xf32>
    %c0_119 = arith.constant 0 : index
    %c0_120 = arith.constant 0 : index
    %189 = vector.load %arg6[%c0_119, %c0_120] : memref<128x128xf32, #tpu.memory_space<vmem>>, vector<128x128xf32>
    %cst_121 = arith.constant dense<0.000000e+00> : vector<8x128xf32>
    %190 = tpu.matmul %188, %189, %cst_121 {dimension_numbers = #tpu.dot_dimension_numbers<[1], [0], [0], [1], [0, 0, 1, 1], [], []>} : vector<8x128xf32>, vector<128x128xf32>, vector<8x128xf32> -> vector<8x128xf32>
    %c0_122 = arith.constant 0 : index
    %c0_123 = arith.constant 0 : index
    %191 = vector.load %arg7[%c0_122, %c0_123] : memref<1x128xf32, #tpu.memory_space<vmem>>, vector<1x128xf32>
    %192 = vector.broadcast %191 : vector<1x128xf32> to vector<8x128xf32>
    %193 = arith.addf %190, %192 : vector<8x128xf32>
    %cst_124 = arith.constant dense<0xFF800000> : vector<8xf32>
    %194 = vector.multi_reduction <maximumf>, %193, %cst_124 [1] : vector<8x128xf32> to vector<8xf32>
    %195 = vector.shape_cast %194 : vector<8xf32> to vector<8x1xf32>
    %196 = vector.broadcast %195 : vector<8x1xf32> to vector<8x128xf32>
    %197 = arith.subf %193, %196 : vector<8x128xf32>
    %198 = math.exp %197 : vector<8x128xf32>
    %cst_125 = arith.constant dense<0.000000e+00> : vector<8xf32>
    %199 = vector.multi_reduction <add>, %198, %cst_125 [1] : vector<8x128xf32> to vector<8xf32>
    %200 = vector.shape_cast %199 : vector<8xf32> to vector<8x1xf32>
    %201 = math.log %200 : vector<8x1xf32>
    %202 = vector.broadcast %201 : vector<8x1xf32> to vector<8x128xf32>
    %203 = arith.subf %197, %202 : vector<8x128xf32>
    %204 = arith.index_cast %c5_i32 : i32 to index
    %c0_126 = arith.constant 0 : index
    %c0_127 = arith.constant 0 : index
    %205 = vector.load %arg8[%204, %c0_126, %c0_127] : memref<8x8x128xf32, #tpu.memory_space<vmem>>, vector<1x8x128xf32>
    %206 = vector.shape_cast %205 : vector<1x8x128xf32> to vector<8x128xf32>
    %207 = vector.shape_cast %203 : vector<8x128xf32> to vector<1x8x128xf32>
    tpu.vector_store %arg8[%204, %c0_126, %c0_127], %207 {strides = array<i32>} : memref<8x8x128xf32, #tpu.memory_space<vmem>>, vector<1x8x128xf32>,
    %208 = arith.index_cast %c5_i32 : i32 to index
    %c0_128 = arith.constant 0 : index
    %c0_129 = arith.constant 0 : index
    %209 = vector.load %arg9[%208, %c0_128, %c0_129] : memref<8x8x128xf32, #tpu.memory_space<vmem>>, vector<1x8x128xf32>
    %210 = vector.shape_cast %209 : vector<1x8x128xf32> to vector<8x128xf32>
    %211 = vector.shape_cast %188 : vector<8x128xf32> to vector<1x8x128xf32>
    tpu.vector_store %arg9[%208, %c0_128, %c0_129], %211 {strides = array<i32>} : memref<8x8x128xf32, #tpu.memory_space<vmem>>, vector<1x8x128xf32>,
    %c0_130 = arith.constant 0 : index
    %c0_131 = arith.constant 0 : index
    %212 = vector.load %arg10[%c0_130, %c0_131] : memref<8x128xf32, #tpu.memory_space<vmem>>, vector<8x128xf32>
    tpu.vector_store %arg10[%c0_130, %c0_131], %188 {strides = array<i32>} : memref<8x128xf32, #tpu.memory_space<vmem>>, vector<8x128xf32>,
    %c6_i32 = arith.constant 6 : i32
    %213 = arith.index_cast %c6_i32 : i32 to index
    %c0_132 = arith.constant 0 : index
    %c0_133 = arith.constant 0 : index
    %214 = vector.load %arg2[%213, %c0_132, %c0_133] : memref<8x8x128xf32, #tpu.memory_space<vmem>>, vector<1x8x128xf32>
    %215 = vector.shape_cast %214 : vector<1x8x128xf32> to vector<8x128xf32>
    %c0_134 = arith.constant 0 : index
    %c0_135 = arith.constant 0 : index
    %216 = vector.load %arg10[%c0_134, %c0_135] : memref<8x128xf32, #tpu.memory_space<vmem>>, vector<8x128xf32>
    %217 = arith.addf %215, %216 : vector<8x128xf32>
    %c0_136 = arith.constant 0 : index
    %c0_137 = arith.constant 0 : index
    %218 = vector.load %arg4[%c0_136, %c0_137] : memref<128x128xf32, #tpu.memory_space<vmem>>, vector<128x128xf32>
    %cst_138 = arith.constant dense<0.000000e+00> : vector<8x128xf32>
    %219 = tpu.matmul %217, %218, %cst_138 {dimension_numbers = #tpu.dot_dimension_numbers<[1], [0], [0], [1], [0, 0, 1, 1], [], []>} : vector<8x128xf32>, vector<128x128xf32>, vector<8x128xf32> -> vector<8x128xf32>
    %c0_139 = arith.constant 0 : index
    %c0_140 = arith.constant 0 : index
    %220 = vector.load %arg5[%c0_139, %c0_140] : memref<1x128xf32, #tpu.memory_space<vmem>>, vector<1x128xf32>
    %221 = vector.broadcast %220 : vector<1x128xf32> to vector<8x128xf32>
    %222 = arith.addf %219, %221 : vector<8x128xf32>
    %223 = math.tanh %222 : vector<8x128xf32>
    %c0_141 = arith.constant 0 : index
    %c0_142 = arith.constant 0 : index
    %224 = vector.load %arg6[%c0_141, %c0_142] : memref<128x128xf32, #tpu.memory_space<vmem>>, vector<128x128xf32>
    %cst_143 = arith.constant dense<0.000000e+00> : vector<8x128xf32>
    %225 = tpu.matmul %223, %224, %cst_143 {dimension_numbers = #tpu.dot_dimension_numbers<[1], [0], [0], [1], [0, 0, 1, 1], [], []>} : vector<8x128xf32>, vector<128x128xf32>, vector<8x128xf32> -> vector<8x128xf32>
    %c0_144 = arith.constant 0 : index
    %c0_145 = arith.constant 0 : index
    %226 = vector.load %arg7[%c0_144, %c0_145] : memref<1x128xf32, #tpu.memory_space<vmem>>, vector<1x128xf32>
    %227 = vector.broadcast %226 : vector<1x128xf32> to vector<8x128xf32>
    %228 = arith.addf %225, %227 : vector<8x128xf32>
    %cst_146 = arith.constant dense<0xFF800000> : vector<8xf32>
    %229 = vector.multi_reduction <maximumf>, %228, %cst_146 [1] : vector<8x128xf32> to vector<8xf32>
    %230 = vector.shape_cast %229 : vector<8xf32> to vector<8x1xf32>
    %231 = vector.broadcast %230 : vector<8x1xf32> to vector<8x128xf32>
    %232 = arith.subf %228, %231 : vector<8x128xf32>
    %233 = math.exp %232 : vector<8x128xf32>
    %cst_147 = arith.constant dense<0.000000e+00> : vector<8xf32>
    %234 = vector.multi_reduction <add>, %233, %cst_147 [1] : vector<8x128xf32> to vector<8xf32>
    %235 = vector.shape_cast %234 : vector<8xf32> to vector<8x1xf32>
    %236 = math.log %235 : vector<8x1xf32>
    %237 = vector.broadcast %236 : vector<8x1xf32> to vector<8x128xf32>
    %238 = arith.subf %232, %237 : vector<8x128xf32>
    %239 = arith.index_cast %c6_i32 : i32 to index
    %c0_148 = arith.constant 0 : index
    %c0_149 = arith.constant 0 : index
    %240 = vector.load %arg8[%239, %c0_148, %c0_149] : memref<8x8x128xf32, #tpu.memory_space<vmem>>, vector<1x8x128xf32>
    %241 = vector.shape_cast %240 : vector<1x8x128xf32> to vector<8x128xf32>
    %242 = vector.shape_cast %238 : vector<8x128xf32> to vector<1x8x128xf32>
    tpu.vector_store %arg8[%239, %c0_148, %c0_149], %242 {strides = array<i32>} : memref<8x8x128xf32, #tpu.memory_space<vmem>>, vector<1x8x128xf32>,
    %243 = arith.index_cast %c6_i32 : i32 to index
    %c0_150 = arith.constant 0 : index
    %c0_151 = arith.constant 0 : index
    %244 = vector.load %arg9[%243, %c0_150, %c0_151] : memref<8x8x128xf32, #tpu.memory_space<vmem>>, vector<1x8x128xf32>
    %245 = vector.shape_cast %244 : vector<1x8x128xf32> to vector<8x128xf32>
    %246 = vector.shape_cast %223 : vector<8x128xf32> to vector<1x8x128xf32>
    tpu.vector_store %arg9[%243, %c0_150, %c0_151], %246 {strides = array<i32>} : memref<8x8x128xf32, #tpu.memory_space<vmem>>, vector<1x8x128xf32>,
    %c0_152 = arith.constant 0 : index
    %c0_153 = arith.constant 0 : index
    %247 = vector.load %arg10[%c0_152, %c0_153] : memref<8x128xf32, #tpu.memory_space<vmem>>, vector<8x128xf32>
    tpu.vector_store %arg10[%c0_152, %c0_153], %223 {strides = array<i32>} : memref<8x128xf32, #tpu.memory_space<vmem>>, vector<8x128xf32>,
    %c7_i32 = arith.constant 7 : i32
    %248 = arith.index_cast %c7_i32 : i32 to index
    %c0_154 = arith.constant 0 : index
    %c0_155 = arith.constant 0 : index
    %249 = vector.load %arg2[%248, %c0_154, %c0_155] : memref<8x8x128xf32, #tpu.memory_space<vmem>>, vector<1x8x128xf32>
    %250 = vector.shape_cast %249 : vector<1x8x128xf32> to vector<8x128xf32>
    %c0_156 = arith.constant 0 : index
    %c0_157 = arith.constant 0 : index
    %251 = vector.load %arg10[%c0_156, %c0_157] : memref<8x128xf32, #tpu.memory_space<vmem>>, vector<8x128xf32>
    %252 = arith.addf %250, %251 : vector<8x128xf32>
    %c0_158 = arith.constant 0 : index
    %c0_159 = arith.constant 0 : index
    %253 = vector.load %arg4[%c0_158, %c0_159] : memref<128x128xf32, #tpu.memory_space<vmem>>, vector<128x128xf32>
    %cst_160 = arith.constant dense<0.000000e+00> : vector<8x128xf32>
    %254 = tpu.matmul %252, %253, %cst_160 {dimension_numbers = #tpu.dot_dimension_numbers<[1], [0], [0], [1], [0, 0, 1, 1], [], []>} : vector<8x128xf32>, vector<128x128xf32>, vector<8x128xf32> -> vector<8x128xf32>
    %c0_161 = arith.constant 0 : index
    %c0_162 = arith.constant 0 : index
    %255 = vector.load %arg5[%c0_161, %c0_162] : memref<1x128xf32, #tpu.memory_space<vmem>>, vector<1x128xf32>
    %256 = vector.broadcast %255 : vector<1x128xf32> to vector<8x128xf32>
    %257 = arith.addf %254, %256 : vector<8x128xf32>
    %258 = math.tanh %257 : vector<8x128xf32>
    %c0_163 = arith.constant 0 : index
    %c0_164 = arith.constant 0 : index
    %259 = vector.load %arg6[%c0_163, %c0_164] : memref<128x128xf32, #tpu.memory_space<vmem>>, vector<128x128xf32>
    %cst_165 = arith.constant dense<0.000000e+00> : vector<8x128xf32>
    %260 = tpu.matmul %258, %259, %cst_165 {dimension_numbers = #tpu.dot_dimension_numbers<[1], [0], [0], [1], [0, 0, 1, 1], [], []>} : vector<8x128xf32>, vector<128x128xf32>, vector<8x128xf32> -> vector<8x128xf32>
    %c0_166 = arith.constant 0 : index
    %c0_167 = arith.constant 0 : index
    %261 = vector.load %arg7[%c0_166, %c0_167] : memref<1x128xf32, #tpu.memory_space<vmem>>, vector<1x128xf32>
    %262 = vector.broadcast %261 : vector<1x128xf32> to vector<8x128xf32>
    %263 = arith.addf %260, %262 : vector<8x128xf32>
    %cst_168 = arith.constant dense<0xFF800000> : vector<8xf32>
    %264 = vector.multi_reduction <maximumf>, %263, %cst_168 [1] : vector<8x128xf32> to vector<8xf32>
    %265 = vector.shape_cast %264 : vector<8xf32> to vector<8x1xf32>
    %266 = vector.broadcast %265 : vector<8x1xf32> to vector<8x128xf32>
    %267 = arith.subf %263, %266 : vector<8x128xf32>
    %268 = math.exp %267 : vector<8x128xf32>
    %cst_169 = arith.constant dense<0.000000e+00> : vector<8xf32>
    %269 = vector.multi_reduction <add>, %268, %cst_169 [1] : vector<8x128xf32> to vector<8xf32>
    %270 = vector.shape_cast %269 : vector<8xf32> to vector<8x1xf32>
    %271 = math.log %270 : vector<8x1xf32>
    %272 = vector.broadcast %271 : vector<8x1xf32> to vector<8x128xf32>
    %273 = arith.subf %267, %272 : vector<8x128xf32>
    %274 = arith.index_cast %c7_i32 : i32 to index
    %c0_170 = arith.constant 0 : index
    %c0_171 = arith.constant 0 : index
    %275 = vector.load %arg8[%274, %c0_170, %c0_171] : memref<8x8x128xf32, #tpu.memory_space<vmem>>, vector<1x8x128xf32>
    %276 = vector.shape_cast %275 : vector<1x8x128xf32> to vector<8x128xf32>
    %277 = vector.shape_cast %273 : vector<8x128xf32> to vector<1x8x128xf32>
    tpu.vector_store %arg8[%274, %c0_170, %c0_171], %277 {strides = array<i32>} : memref<8x8x128xf32, #tpu.memory_space<vmem>>, vector<1x8x128xf32>,
    %278 = arith.index_cast %c7_i32 : i32 to index
    %c0_172 = arith.constant 0 : index
    %c0_173 = arith.constant 0 : index
    %279 = vector.load %arg9[%278, %c0_172, %c0_173] : memref<8x8x128xf32, #tpu.memory_space<vmem>>, vector<1x8x128xf32>
    %280 = vector.shape_cast %279 : vector<1x8x128xf32> to vector<8x128xf32>
    %281 = vector.shape_cast %258 : vector<8x128xf32> to vector<1x8x128xf32>
    tpu.vector_store %arg9[%278, %c0_172, %c0_173], %281 {strides = array<i32>} : memref<8x8x128xf32, #tpu.memory_space<vmem>>, vector<1x8x128xf32>,
    %c0_174 = arith.constant 0 : index
    %c0_175 = arith.constant 0 : index
    %282 = vector.load %arg10[%c0_174, %c0_175] : memref<8x128xf32, #tpu.memory_space<vmem>>, vector<8x128xf32>
    tpu.vector_store %arg10[%c0_174, %c0_175], %258 {strides = array<i32>} : memref<8x128xf32, #tpu.memory_space<vmem>>, vector<8x128xf32>,
    %c8_i32 = arith.constant 8 : i32
    return
  }
  func.func @transform_0(%arg0: i32, %arg1: i32) -> (i32, i32, i32) {
    %c0_i32 = arith.constant 0 : i32
    %c0_i32_0 = arith.constant 0 : i32
    return %arg1, %arg0, %c0_i32 : i32, i32, i32
  }
  func.func @transform_1(%arg0: i32, %arg1: i32) -> (i32, i32) {
    %c0_i32 = arith.constant 0 : i32
    %c0_i32_0 = arith.constant 0 : i32
    return %arg0, %c0_i32 : i32, i32
  }
  func.func @transform_2(%arg0: i32, %arg1: i32) -> (i32, i32) {
    %c0_i32 = arith.constant 0 : i32
    %c0_i32_0 = arith.constant 0 : i32
    %c0_i32_1 = arith.constant 0 : i32
    return %c0_i32, %c0_i32_0 : i32, i32
  }
  func.func @transform_3(%arg0: i32, %arg1: i32) -> (i32, i32) {
    %c0_i32 = arith.constant 0 : i32
    %c0_i32_0 = arith.constant 0 : i32
    %c0_i32_1 = arith.constant 0 : i32
    return %c0_i32, %c0_i32_0 : i32, i32
  }
  func.func @transform_4(%arg0: i32, %arg1: i32) -> (i32, i32) {
    %c0_i32 = arith.constant 0 : i32
    %c0_i32_0 = arith.constant 0 : i32
    %c0_i32_1 = arith.constant 0 : i32
    return %c0_i32, %c0_i32_0 : i32, i32
  }
  func.func @transform_5(%arg0: i32, %arg1: i32) -> (i32, i32) {
    %c0_i32 = arith.constant 0 : i32
    %c0_i32_0 = arith.constant 0 : i32
    %c0_i32_1 = arith.constant 0 : i32
    return %c0_i32, %c0_i32_0 : i32, i32
  }
  func.func @transform_6(%arg0: i32, %arg1: i32) -> (i32, i32, i32) {
    %c0_i32 = arith.constant 0 : i32
    %c0_i32_0 = arith.constant 0 : i32
    return %arg1, %arg0, %c0_i32 : i32, i32, i32
  }
  func.func @transform_7(%arg0: i32, %arg1: i32) -> (i32, i32, i32) {
    %c0_i32 = arith.constant 0 : i32
    %c0_i32_0 = arith.constant 0 : i32
    return %arg1, %arg0, %c0_i32 : i32, i32, i32
  }
}

module attributes {stable_mosaic.version = 11 : i64} {
  func.func @kernel(%arg0: i32, %arg1: i32, %arg2: memref<8x8x128xf32, #tpu.memory_space<vmem>>, %arg3: memref<8x128xf32, #tpu.memory_space<vmem>>, %arg4: memref<128x128xf32, #tpu.memory_space<vmem>>, %arg5: memref<1x128xf32, #tpu.memory_space<vmem>>, %arg6: memref<128x128xf32, #tpu.memory_space<vmem>>, %arg7: memref<1x128xf32, #tpu.memory_space<vmem>>, %arg8: memref<8x8x128xf32, #tpu.memory_space<vmem>>, %arg9: memref<8x8x128xf32, #tpu.memory_space<vmem>>, %arg10: memref<8x128xf32, #tpu.memory_space<vmem>>) attributes {dimension_semantics = [#tpu.dimension_semantics<parallel>, #tpu.dimension_semantics<arbitrary>], iteration_bounds = array<i64: 1, 1>, scalar_prefetch = 0 : i64, scratch_operands = 1 : i64, tpu.core_type = #tpu.core_type<tc>, window_params = [{transform_indices = @transform_0, window_bounds = array<i64: 8, 8, 128>}, {transform_indices = @transform_1, window_bounds = array<i64: 8, 128>}, {pipeline_mode = #tpu.pipeline_mode<synchronous>, transform_indices = @transform_2, window_bounds = array<i64: 128, 128>}, {pipeline_mode = #tpu.pipeline_mode<synchronous>, transform_indices = @transform_3, window_bounds = array<i64: 1, 128>}, {pipeline_mode = #tpu.pipeline_mode<synchronous>, transform_indices = @transform_4, window_bounds = array<i64: 128, 128>}, {pipeline_mode = #tpu.pipeline_mode<synchronous>, transform_indices = @transform_5, window_bounds = array<i64: 1, 128>}, {transform_indices = @transform_6, window_bounds = array<i64: 8, 8, 128>}, {transform_indices = @transform_7, window_bounds = array<i64: 8, 8, 128>}]} {
    %c0_i32 = arith.constant 0 : i32
    %0 = arith.cmpi eq, %arg1, %c0_i32 : i32
    %1 = arith.extui %0 : i1 to i32
    %c0_i32_0 = arith.constant 0 : i32
    %2 = arith.cmpi ne, %1, %c0_i32_0 : i32
    scf.if %2 {
      %c0_176 = arith.constant 0 : index
      %c0_177 = arith.constant 0 : index
      %283 = vector.load %arg3[%c0_176, %c0_177] : memref<8x128xf32, #tpu.memory_space<vmem>>, vector<8x128xf32>
      %c0_178 = arith.constant 0 : index
      %c0_179 = arith.constant 0 : index
      %284 = vector.load %arg10[%c0_178, %c0_179] : memref<8x128xf32, #tpu.memory_space<vmem>>, vector<8x128xf32>
      tpu.vector_store %arg10[%c0_178, %c0_179], %283 {strides = array<i32>} : memref<8x128xf32, #tpu.memory_space<vmem>>, vector<8x128xf32>,
    } else {
    }
    %c0_i32_1 = arith.constant 0 : i32
    %3 = arith.index_cast %c0_i32_1 : i32 to index
    %c0 = arith.constant 0 : index
    %c0_2 = arith.constant 0 : index
    %4 = vector.load %arg2[%3, %c0, %c0_2] : memref<8x8x128xf32, #tpu.memory_space<vmem>>, vector<1x8x128xf32>
    %5 = vector.shape_cast %4 : vector<1x8x128xf32> to vector<8x128xf32>
    %c0_3 = arith.constant 0 : index
    %c0_4 = arith.constant 0 : index
    %6 = vector.load %arg10[%c0_3, %c0_4] : memref<8x128xf32, #tpu.memory_space<vmem>>, vector<8x128xf32>
    %7 = arith.addf %5, %6 : vector<8x128xf32>
    %c0_5 = arith.constant 0 : index
    %c0_6 = arith.constant 0 : index
    %8 = vector.load %arg4[%c0_5, %c0_6] : memref<128x128xf32, #tpu.memory_space<vmem>>, vector<128x128xf32>
    %cst = arith.constant dense<0.000000e+00> : vector<8x128xf32>
    %9 = tpu.matmul %7, %8, %cst {dimension_numbers = #tpu.dot_dimension_numbers<[1], [0], [0], [1], [0, 0, 1, 1], [], []>} : vector<8x128xf32>, vector<128x128xf32>, vector<8x128xf32> -> vector<8x128xf32>
    %c0_7 = arith.constant 0 : index
    %c0_8 = arith.constant 0 : index
    %10 = vector.load %arg5[%c0_7, %c0_8] : memref<1x128xf32, #tpu.memory_space<vmem>>, vector<1x128xf32>
    %11 = vector.broadcast %10 : vector<1x128xf32> to vector<8x128xf32>
    %12 = arith.addf %9, %11 : vector<8x128xf32>
    %13 = math.tanh %12 : vector<8x128xf32>
    %c0_9 = arith.constant 0 : index
    %c0_10 = arith.constant 0 : index
    %14 = vector.load %arg6[%c0_9, %c0_10] : memref<128x128xf32, #tpu.memory_space<vmem>>, vector<128x128xf32>
    %cst_11 = arith.constant dense<0.000000e+00> : vector<8x128xf32>
    %15 = tpu.matmul %13, %14, %cst_11 {dimension_numbers = #tpu.dot_dimension_numbers<[1], [0], [0], [1], [0, 0, 1, 1], [], []>} : vector<8x128xf32>, vector<128x128xf32>, vector<8x128xf32> -> vector<8x128xf32>
    %c0_12 = arith.constant 0 : index
    %c0_13 = arith.constant 0 : index
    %16 = vector.load %arg7[%c0_12, %c0_13] : memref<1x128xf32, #tpu.memory_space<vmem>>, vector<1x128xf32>
    %17 = vector.broadcast %16 : vector<1x128xf32> to vector<8x128xf32>
    %18 = arith.addf %15, %17 : vector<8x128xf32>
    %cst_14 = arith.constant dense<0xFF800000> : vector<8xf32>
    %19 = vector.multi_reduction <maximumf>, %18, %cst_14 [1] : vector<8x128xf32> to vector<8xf32>
    %20 = vector.shape_cast %19 : vector<8xf32> to vector<8x1xf32>
    %21 = vector.broadcast %20 : vector<8x1xf32> to vector<8x128xf32>
    %22 = arith.subf %18, %21 : vector<8x128xf32>
    %23 = math.exp %22 : vector<8x128xf32>
    %cst_15 = arith.constant dense<0.000000e+00> : vector<8xf32>
    %24 = vector.multi_reduction <add>, %23, %cst_15 [1] : vector<8x128xf32> to vector<8xf32>
    %25 = vector.shape_cast %24 : vector<8xf32> to vector<8x1xf32>
    %26 = math.log %25 : vector<8x1xf32>
    %27 = vector.broadcast %26 : vector<8x1xf32> to vector<8x128xf32>
    %28 = arith.subf %22, %27 : vector<8x128xf32>
    %29 = arith.index_cast %c0_i32_1 : i32 to index
    %c0_16 = arith.constant 0 : index
    %c0_17 = arith.constant 0 : index
    %30 = vector.load %arg8[%29, %c0_16, %c0_17] : memref<8x8x128xf32, #tpu.memory_space<vmem>>, vector<1x8x128xf32>
    %31 = vector.shape_cast %30 : vector<1x8x128xf32> to vector<8x128xf32>
    %32 = vector.shape_cast %28 : vector<8x128xf32> to vector<1x8x128xf32>
    tpu.vector_store %arg8[%29, %c0_16, %c0_17], %32 {strides = array<i32>} : memref<8x8x128xf32, #tpu.memory_space<vmem>>, vector<1x8x128xf32>,
    %33 = arith.index_cast %c0_i32_1 : i32 to index
    %c0_18 = arith.constant 0 : index
    %c0_19 = arith.constant 0 : index
    %34 = vector.load %arg9[%33, %c0_18, %c0_19] : memref<8x8x128xf32, #tpu.memory_space<vmem>>, vector<1x8x128xf32>
    %35 = vector.shape_cast %34 : vector<1x8x128xf32> to vector<8x128xf32>
    %36 = vector.shape_cast %13 : vector<8x128xf32> to vector<1x8x128xf32>
    tpu.vector_store %arg9[%33, %c0_18, %c0_19], %36 {strides = array<i32>} : memref<8x8x128xf32, #tpu.memory_space<vmem>>, vector<1x8x128xf32>,
    %c0_20 = arith.constant 0 : index
    %c0_21 = arith.constant 0 : index
    %37 = vector.load %arg10[%c0_20, %c0_21] : memref<8x128xf32, #tpu.memory_space<vmem>>, vector<8x128xf32>
    tpu.vector_store %arg10[%c0_20, %c0_21], %13 {strides = array<i32>} : memref<8x128xf32, #tpu.memory_space<vmem>>, vector<8x128xf32>,
    %c1_i32 = arith.constant 1 : i32
    %38 = arith.index_cast %c1_i32 : i32 to index
    %c0_22 = arith.constant 0 : index
    %c0_23 = arith.constant 0 : index
    %39 = vector.load %arg2[%38, %c0_22, %c0_23] : memref<8x8x128xf32, #tpu.memory_space<vmem>>, vector<1x8x128xf32>
    %40 = vector.shape_cast %39 : vector<1x8x128xf32> to vector<8x128xf32>
    %c0_24 = arith.constant 0 : index
    %c0_25 = arith.constant 0 : index
    %41 = vector.load %arg10[%c0_24, %c0_25] : memref<8x128xf32, #tpu.memory_space<vmem>>, vector<8x128xf32>
    %42 = arith.addf %40, %41 : vector<8x128xf32>
    %c0_26 = arith.constant 0 : index
    %c0_27 = arith.constant 0 : index
    %43 = vector.load %arg4[%c0_26, %c0_27] : memref<128x128xf32, #tpu.memory_space<vmem>>, vector<128x128xf32>
    %cst_28 = arith.constant dense<0.000000e+00> : vector<8x128xf32>
    %44 = tpu.matmul %42, %43, %cst_28 {dimension_numbers = #tpu.dot_dimension_numbers<[1], [0], [0], [1], [0, 0, 1, 1], [], []>} : vector<8x128xf32>, vector<128x128xf32>, vector<8x128xf32> -> vector<8x128xf32>
    %c0_29 = arith.constant 0 : index
    %c0_30 = arith.constant 0 : index
    %45 = vector.load %arg5[%c0_29, %c0_30] : memref<1x128xf32, #tpu.memory_space<vmem>>, vector<1x128xf32>
    %46 = vector.broadcast %45 : vector<1x128xf32> to vector<8x128xf32>
    %47 = arith.addf %44, %46 : vector<8x128xf32>
    %48 = math.tanh %47 : vector<8x128xf32>
    %c0_31 = arith.constant 0 : index
    %c0_32 = arith.constant 0 : index
    %49 = vector.load %arg6[%c0_31, %c0_32] : memref<128x128xf32, #tpu.memory_space<vmem>>, vector<128x128xf32>
    %cst_33 = arith.constant dense<0.000000e+00> : vector<8x128xf32>
    %50 = tpu.matmul %48, %49, %cst_33 {dimension_numbers = #tpu.dot_dimension_numbers<[1], [0], [0], [1], [0, 0, 1, 1], [], []>} : vector<8x128xf32>, vector<128x128xf32>, vector<8x128xf32> -> vector<8x128xf32>
    %c0_34 = arith.constant 0 : index
    %c0_35 = arith.constant 0 : index
    %51 = vector.load %arg7[%c0_34, %c0_35] : memref<1x128xf32, #tpu.memory_space<vmem>>, vector<1x128xf32>
    %52 = vector.broadcast %51 : vector<1x128xf32> to vector<8x128xf32>
    %53 = arith.addf %50, %52 : vector<8x128xf32>
    %cst_36 = arith.constant dense<0xFF800000> : vector<8xf32>
    %54 = vector.multi_reduction <maximumf>, %53, %cst_36 [1] : vector<8x128xf32> to vector<8xf32>
    %55 = vector.shape_cast %54 : vector<8xf32> to vector<8x1xf32>
    %56 = vector.broadcast %55 : vector<8x1xf32> to vector<8x128xf32>
    %57 = arith.subf %53, %56 : vector<8x128xf32>
    %58 = math.exp %57 : vector<8x128xf32>
    %cst_37 = arith.constant dense<0.000000e+00> : vector<8xf32>
    %59 = vector.multi_reduction <add>, %58, %cst_37 [1] : vector<8x128xf32> to vector<8xf32>
    %60 = vector.shape_cast %59 : vector<8xf32> to vector<8x1xf32>
    %61 = math.log %60 : vector<8x1xf32>
    %62 = vector.broadcast %61 : vector<8x1xf32> to vector<8x128xf32>
    %63 = arith.subf %57, %62 : vector<8x128xf32>
    %64 = arith.index_cast %c1_i32 : i32 to index
    %c0_38 = arith.constant 0 : index
    %c0_39 = arith.constant 0 : index
    %65 = vector.load %arg8[%64, %c0_38, %c0_39] : memref<8x8x128xf32, #tpu.memory_space<vmem>>, vector<1x8x128xf32>
    %66 = vector.shape_cast %65 : vector<1x8x128xf32> to vector<8x128xf32>
    %67 = vector.shape_cast %63 : vector<8x128xf32> to vector<1x8x128xf32>
    tpu.vector_store %arg8[%64, %c0_38, %c0_39], %67 {strides = array<i32>} : memref<8x8x128xf32, #tpu.memory_space<vmem>>, vector<1x8x128xf32>,
    %68 = arith.index_cast %c1_i32 : i32 to index
    %c0_40 = arith.constant 0 : index
    %c0_41 = arith.constant 0 : index
    %69 = vector.load %arg9[%68, %c0_40, %c0_41] : memref<8x8x128xf32, #tpu.memory_space<vmem>>, vector<1x8x128xf32>
    %70 = vector.shape_cast %69 : vector<1x8x128xf32> to vector<8x128xf32>
    %71 = vector.shape_cast %48 : vector<8x128xf32> to vector<1x8x128xf32>
    tpu.vector_store %arg9[%68, %c0_40, %c0_41], %71 {strides = array<i32>} : memref<8x8x128xf32, #tpu.memory_space<vmem>>, vector<1x8x128xf32>,
    %c0_42 = arith.constant 0 : index
    %c0_43 = arith.constant 0 : index
    %72 = vector.load %arg10[%c0_42, %c0_43] : memref<8x128xf32, #tpu.memory_space<vmem>>, vector<8x128xf32>
    tpu.vector_store %arg10[%c0_42, %c0_43], %48 {strides = array<i32>} : memref<8x128xf32, #tpu.memory_space<vmem>>, vector<8x128xf32>,
    %c2_i32 = arith.constant 2 : i32
    %73 = arith.index_cast %c2_i32 : i32 to index
    %c0_44 = arith.constant 0 : index
    %c0_45 = arith.constant 0 : index
    %74 = vector.load %arg2[%73, %c0_44, %c0_45] : memref<8x8x128xf32, #tpu.memory_space<vmem>>, vector<1x8x128xf32>
    %75 = vector.shape_cast %74 : vector<1x8x128xf32> to vector<8x128xf32>
    %c0_46 = arith.constant 0 : index
    %c0_47 = arith.constant 0 : index
    %76 = vector.load %arg10[%c0_46, %c0_47] : memref<8x128xf32, #tpu.memory_space<vmem>>, vector<8x128xf32>
    %77 = arith.addf %75, %76 : vector<8x128xf32>
    %c0_48 = arith.constant 0 : index
    %c0_49 = arith.constant 0 : index
    %78 = vector.load %arg4[%c0_48, %c0_49] : memref<128x128xf32, #tpu.memory_space<vmem>>, vector<128x128xf32>
    %cst_50 = arith.constant dense<0.000000e+00> : vector<8x128xf32>
    %79 = tpu.matmul %77, %78, %cst_50 {dimension_numbers = #tpu.dot_dimension_numbers<[1], [0], [0], [1], [0, 0, 1, 1], [], []>} : vector<8x128xf32>, vector<128x128xf32>, vector<8x128xf32> -> vector<8x128xf32>
    %c0_51 = arith.constant 0 : index
    %c0_52 = arith.constant 0 : index
    %80 = vector.load %arg5[%c0_51, %c0_52] : memref<1x128xf32, #tpu.memory_space<vmem>>, vector<1x128xf32>
    %81 = vector.broadcast %80 : vector<1x128xf32> to vector<8x128xf32>
    %82 = arith.addf %79, %81 : vector<8x128xf32>
    %83 = math.tanh %82 : vector<8x128xf32>
    %c0_53 = arith.constant 0 : index
    %c0_54 = arith.constant 0 : index
    %84 = vector.load %arg6[%c0_53, %c0_54] : memref<128x128xf32, #tpu.memory_space<vmem>>, vector<128x128xf32>
    %cst_55 = arith.constant dense<0.000000e+00> : vector<8x128xf32>
    %85 = tpu.matmul %83, %84, %cst_55 {dimension_numbers = #tpu.dot_dimension_numbers<[1], [0], [0], [1], [0, 0, 1, 1], [], []>} : vector<8x128xf32>, vector<128x128xf32>, vector<8x128xf32> -> vector<8x128xf32>
    %c0_56 = arith.constant 0 : index
    %c0_57 = arith.constant 0 : index
    %86 = vector.load %arg7[%c0_56, %c0_57] : memref<1x128xf32, #tpu.memory_space<vmem>>, vector<1x128xf32>
    %87 = vector.broadcast %86 : vector<1x128xf32> to vector<8x128xf32>
    %88 = arith.addf %85, %87 : vector<8x128xf32>
    %cst_58 = arith.constant dense<0xFF800000> : vector<8xf32>
    %89 = vector.multi_reduction <maximumf>, %88, %cst_58 [1] : vector<8x128xf32> to vector<8xf32>
    %90 = vector.shape_cast %89 : vector<8xf32> to vector<8x1xf32>
    %91 = vector.broadcast %90 : vector<8x1xf32> to vector<8x128xf32>
    %92 = arith.subf %88, %91 : vector<8x128xf32>
    %93 = math.exp %92 : vector<8x128xf32>
    %cst_59 = arith.constant dense<0.000000e+00> : vector<8xf32>
    %94 = vector.multi_reduction <add>, %93, %cst_59 [1] : vector<8x128xf32> to vector<8xf32>
    %95 = vector.shape_cast %94 : vector<8xf32> to vector<8x1xf32>
    %96 = math.log %95 : vector<8x1xf32>
    %97 = vector.broadcast %96 : vector<8x1xf32> to vector<8x128xf32>
    %98 = arith.subf %92, %97 : vector<8x128xf32>
    %99 = arith.index_cast %c2_i32 : i32 to index
    %c0_60 = arith.constant 0 : index
    %c0_61 = arith.constant 0 : index
    %100 = vector.load %arg8[%99, %c0_60, %c0_61] : memref<8x8x128xf32, #tpu.memory_space<vmem>>, vector<1x8x128xf32>
    %101 = vector.shape_cast %100 : vector<1x8x128xf32> to vector<8x128xf32>
    %102 = vector.shape_cast %98 : vector<8x128xf32> to vector<1x8x128xf32>
    tpu.vector_store %arg8[%99, %c0_60, %c0_61], %102 {strides = array<i32>} : memref<8x8x128xf32, #tpu.memory_space<vmem>>, vector<1x8x128xf32>,
    %103 = arith.index_cast %c2_i32 : i32 to index
    %c0_62 = arith.constant 0 : index
    %c0_63 = arith.constant 0 : index
    %104 = vector.load %arg9[%103, %c0_62, %c0_63] : memref<8x8x128xf32, #tpu.memory_space<vmem>>, vector<1x8x128xf32>
    %105 = vector.shape_cast %104 : vector<1x8x128xf32> to vector<8x128xf32>
    %106 = vector.shape_cast %83 : vector<8x128xf32> to vector<1x8x128xf32>
    tpu.vector_store %arg9[%103, %c0_62, %c0_63], %106 {strides = array<i32>} : memref<8x8x128xf32, #tpu.memory_space<vmem>>, vector<1x8x128xf32>,
    %c0_64 = arith.constant 0 : index
    %c0_65 = arith.constant 0 : index
    %107 = vector.load %arg10[%c0_64, %c0_65] : memref<8x128xf32, #tpu.memory_space<vmem>>, vector<8x128xf32>
    tpu.vector_store %arg10[%c0_64, %c0_65], %83 {strides = array<i32>} : memref<8x128xf32, #tpu.memory_space<vmem>>, vector<8x128xf32>,
    %c3_i32 = arith.constant 3 : i32
    %108 = arith.index_cast %c3_i32 : i32 to index
    %c0_66 = arith.constant 0 : index
    %c0_67 = arith.constant 0 : index
    %109 = vector.load %arg2[%108, %c0_66, %c0_67] : memref<8x8x128xf32, #tpu.memory_space<vmem>>, vector<1x8x128xf32>
    %110 = vector.shape_cast %109 : vector<1x8x128xf32> to vector<8x128xf32>
    %c0_68 = arith.constant 0 : index
    %c0_69 = arith.constant 0 : index
    %111 = vector.load %arg10[%c0_68, %c0_69] : memref<8x128xf32, #tpu.memory_space<vmem>>, vector<8x128xf32>
    %112 = arith.addf %110, %111 : vector<8x128xf32>
    %c0_70 = arith.constant 0 : index
    %c0_71 = arith.constant 0 : index
    %113 = vector.load %arg4[%c0_70, %c0_71] : memref<128x128xf32, #tpu.memory_space<vmem>>, vector<128x128xf32>
    %cst_72 = arith.constant dense<0.000000e+00> : vector<8x128xf32>
    %114 = tpu.matmul %112, %113, %cst_72 {dimension_numbers = #tpu.dot_dimension_numbers<[1], [0], [0], [1], [0, 0, 1, 1], [], []>} : vector<8x128xf32>, vector<128x128xf32>, vector<8x128xf32> -> vector<8x128xf32>
    %c0_73 = arith.constant 0 : index
    %c0_74 = arith.constant 0 : index
    %115 = vector.load %arg5[%c0_73, %c0_74] : memref<1x128xf32, #tpu.memory_space<vmem>>, vector<1x128xf32>
    %116 = vector.broadcast %115 : vector<1x128xf32> to vector<8x128xf32>
    %117 = arith.addf %114, %116 : vector<8x128xf32>
    %118 = math.tanh %117 : vector<8x128xf32>
    %c0_75 = arith.constant 0 : index
    %c0_76 = arith.constant 0 : index
    %119 = vector.load %arg6[%c0_75, %c0_76] : memref<128x128xf32, #tpu.memory_space<vmem>>, vector<128x128xf32>
    %cst_77 = arith.constant dense<0.000000e+00> : vector<8x128xf32>
    %120 = tpu.matmul %118, %119, %cst_77 {dimension_numbers = #tpu.dot_dimension_numbers<[1], [0], [0], [1], [0, 0, 1, 1], [], []>} : vector<8x128xf32>, vector<128x128xf32>, vector<8x128xf32> -> vector<8x128xf32>
    %c0_78 = arith.constant 0 : index
    %c0_79 = arith.constant 0 : index
    %121 = vector.load %arg7[%c0_78, %c0_79] : memref<1x128xf32, #tpu.memory_space<vmem>>, vector<1x128xf32>
    %122 = vector.broadcast %121 : vector<1x128xf32> to vector<8x128xf32>
    %123 = arith.addf %120, %122 : vector<8x128xf32>
    %cst_80 = arith.constant dense<0xFF800000> : vector<8xf32>
    %124 = vector.multi_reduction <maximumf>, %123, %cst_80 [1] : vector<8x128xf32> to vector<8xf32>
    %125 = vector.shape_cast %124 : vector<8xf32> to vector<8x1xf32>
    %126 = vector.broadcast %125 : vector<8x1xf32> to vector<8x128xf32>
    %127 = arith.subf %123, %126 : vector<8x128xf32>
    %128 = math.exp %127 : vector<8x128xf32>
    %cst_81 = arith.constant dense<0.000000e+00> : vector<8xf32>
    %129 = vector.multi_reduction <add>, %128, %cst_81 [1] : vector<8x128xf32> to vector<8xf32>
    %130 = vector.shape_cast %129 : vector<8xf32> to vector<8x1xf32>
    %131 = math.log %130 : vector<8x1xf32>
    %132 = vector.broadcast %131 : vector<8x1xf32> to vector<8x128xf32>
    %133 = arith.subf %127, %132 : vector<8x128xf32>
    %134 = arith.index_cast %c3_i32 : i32 to index
    %c0_82 = arith.constant 0 : index
    %c0_83 = arith.constant 0 : index
    %135 = vector.load %arg8[%134, %c0_82, %c0_83] : memref<8x8x128xf32, #tpu.memory_space<vmem>>, vector<1x8x128xf32>
    %136 = vector.shape_cast %135 : vector<1x8x128xf32> to vector<8x128xf32>
    %137 = vector.shape_cast %133 : vector<8x128xf32> to vector<1x8x128xf32>
    tpu.vector_store %arg8[%134, %c0_82, %c0_83], %137 {strides = array<i32>} : memref<8x8x128xf32, #tpu.memory_space<vmem>>, vector<1x8x128xf32>,
    %138 = arith.index_cast %c3_i32 : i32 to index
    %c0_84 = arith.constant 0 : index
    %c0_85 = arith.constant 0 : index
    %139 = vector.load %arg9[%138, %c0_84, %c0_85] : memref<8x8x128xf32, #tpu.memory_space<vmem>>, vector<1x8x128xf32>
    %140 = vector.shape_cast %139 : vector<1x8x128xf32> to vector<8x128xf32>
    %141 = vector.shape_cast %118 : vector<8x128xf32> to vector<1x8x128xf32>
    tpu.vector_store %arg9[%138, %c0_84, %c0_85], %141 {strides = array<i32>} : memref<8x8x128xf32, #tpu.memory_space<vmem>>, vector<1x8x128xf32>,
    %c0_86 = arith.constant 0 : index
    %c0_87 = arith.constant 0 : index
    %142 = vector.load %arg10[%c0_86, %c0_87] : memref<8x128xf32, #tpu.memory_space<vmem>>, vector<8x128xf32>
    tpu.vector_store %arg10[%c0_86, %c0_87], %118 {strides = array<i32>} : memref<8x128xf32, #tpu.memory_space<vmem>>, vector<8x128xf32>,
    %c4_i32 = arith.constant 4 : i32
    %143 = arith.index_cast %c4_i32 : i32 to index
    %c0_88 = arith.constant 0 : index
    %c0_89 = arith.constant 0 : index
    %144 = vector.load %arg2[%143, %c0_88, %c0_89] : memref<8x8x128xf32, #tpu.memory_space<vmem>>, vector<1x8x128xf32>
    %145 = vector.shape_cast %144 : vector<1x8x128xf32> to vector<8x128xf32>
    %c0_90 = arith.constant 0 : index
    %c0_91 = arith.constant 0 : index
    %146 = vector.load %arg10[%c0_90, %c0_91] : memref<8x128xf32, #tpu.memory_space<vmem>>, vector<8x128xf32>
    %147 = arith.addf %145, %146 : vector<8x128xf32>
    %c0_92 = arith.constant 0 : index
    %c0_93 = arith.constant 0 : index
    %148 = vector.load %arg4[%c0_92, %c0_93] : memref<128x128xf32, #tpu.memory_space<vmem>>, vector<128x128xf32>
    %cst_94 = arith.constant dense<0.000000e+00> : vector<8x128xf32>
    %149 = tpu.matmul %147, %148, %cst_94 {dimension_numbers = #tpu.dot_dimension_numbers<[1], [0], [0], [1], [0, 0, 1, 1], [], []>} : vector<8x128xf32>, vector<128x128xf32>, vector<8x128xf32> -> vector<8x128xf32>
    %c0_95 = arith.constant 0 : index
    %c0_96 = arith.constant 0 : index
    %150 = vector.load %arg5[%c0_95, %c0_96] : memref<1x128xf32, #tpu.memory_space<vmem>>, vector<1x128xf32>
    %151 = vector.broadcast %150 : vector<1x128xf32> to vector<8x128xf32>
    %152 = arith.addf %149, %151 : vector<8x128xf32>
    %153 = math.tanh %152 : vector<8x128xf32>
    %c0_97 = arith.constant 0 : index
    %c0_98 = arith.constant 0 : index
    %154 = vector.load %arg6[%c0_97, %c0_98] : memref<128x128xf32, #tpu.memory_space<vmem>>, vector<128x128xf32>
    %cst_99 = arith.constant dense<0.000000e+00> : vector<8x128xf32>
    %155 = tpu.matmul %153, %154, %cst_99 {dimension_numbers = #tpu.dot_dimension_numbers<[1], [0], [0], [1], [0, 0, 1, 1], [], []>} : vector<8x128xf32>, vector<128x128xf32>, vector<8x128xf32> -> vector<8x128xf32>
    %c0_100 = arith.constant 0 : index
    %c0_101 = arith.constant 0 : index
    %156 = vector.load %arg7[%c0_100, %c0_101] : memref<1x128xf32, #tpu.memory_space<vmem>>, vector<1x128xf32>
    %157 = vector.broadcast %156 : vector<1x128xf32> to vector<8x128xf32>
    %158 = arith.addf %155, %157 : vector<8x128xf32>
    %cst_102 = arith.constant dense<0xFF800000> : vector<8xf32>
    %159 = vector.multi_reduction <maximumf>, %158, %cst_102 [1] : vector<8x128xf32> to vector<8xf32>
    %160 = vector.shape_cast %159 : vector<8xf32> to vector<8x1xf32>
    %161 = vector.broadcast %160 : vector<8x1xf32> to vector<8x128xf32>
    %162 = arith.subf %158, %161 : vector<8x128xf32>
    %163 = math.exp %162 : vector<8x128xf32>
    %cst_103 = arith.constant dense<0.000000e+00> : vector<8xf32>
    %164 = vector.multi_reduction <add>, %163, %cst_103 [1] : vector<8x128xf32> to vector<8xf32>
    %165 = vector.shape_cast %164 : vector<8xf32> to vector<8x1xf32>
    %166 = math.log %165 : vector<8x1xf32>
    %167 = vector.broadcast %166 : vector<8x1xf32> to vector<8x128xf32>
    %168 = arith.subf %162, %167 : vector<8x128xf32>
    %169 = arith.index_cast %c4_i32 : i32 to index
    %c0_104 = arith.constant 0 : index
    %c0_105 = arith.constant 0 : index
    %170 = vector.load %arg8[%169, %c0_104, %c0_105] : memref<8x8x128xf32, #tpu.memory_space<vmem>>, vector<1x8x128xf32>
    %171 = vector.shape_cast %170 : vector<1x8x128xf32> to vector<8x128xf32>
    %172 = vector.shape_cast %168 : vector<8x128xf32> to vector<1x8x128xf32>
    tpu.vector_store %arg8[%169, %c0_104, %c0_105], %172 {strides = array<i32>} : memref<8x8x128xf32, #tpu.memory_space<vmem>>, vector<1x8x128xf32>,
    %173 = arith.index_cast %c4_i32 : i32 to index
    %c0_106 = arith.constant 0 : index
    %c0_107 = arith.constant 0 : index
    %174 = vector.load %arg9[%173, %c0_106, %c0_107] : memref<8x8x128xf32, #tpu.memory_space<vmem>>, vector<1x8x128xf32>
    %175 = vector.shape_cast %174 : vector<1x8x128xf32> to vector<8x128xf32>
    %176 = vector.shape_cast %153 : vector<8x128xf32> to vector<1x8x128xf32>
    tpu.vector_store %arg9[%173, %c0_106, %c0_107], %176 {strides = array<i32>} : memref<8x8x128xf32, #tpu.memory_space<vmem>>, vector<1x8x128xf32>,
    %c0_108 = arith.constant 0 : index
    %c0_109 = arith.constant 0 : index
    %177 = vector.load %arg10[%c0_108, %c0_109] : memref<8x128xf32, #tpu.memory_space<vmem>>, vector<8x128xf32>
    tpu.vector_store %arg10[%c0_108, %c0_109], %153 {strides = array<i32>} : memref<8x128xf32, #tpu.memory_space<vmem>>, vector<8x128xf32>,
    %c5_i32 = arith.constant 5 : i32
    %178 = arith.index_cast %c5_i32 : i32 to index
    %c0_110 = arith.constant 0 : index
    %c0_111 = arith.constant 0 : index
    %179 = vector.load %arg2[%178, %c0_110, %c0_111] : memref<8x8x128xf32, #tpu.memory_space<vmem>>, vector<1x8x128xf32>
    %180 = vector.shape_cast %179 : vector<1x8x128xf32> to vector<8x128xf32>
    %c0_112 = arith.constant 0 : index
    %c0_113 = arith.constant 0 : index
    %181 = vector.load %arg10[%c0_112, %c0_113] : memref<8x128xf32, #tpu.memory_space<vmem>>, vector<8x128xf32>
    %182 = arith.addf %180, %181 : vector<8x128xf32>
    %c0_114 = arith.constant 0 : index
    %c0_115 = arith.constant 0 : index
    %183 = vector.load %arg4[%c0_114, %c0_115] : memref<128x128xf32, #tpu.memory_space<vmem>>, vector<128x128xf32>
    %cst_116 = arith.constant dense<0.000000e+00> : vector<8x128xf32>
    %184 = tpu.matmul %182, %183, %cst_116 {dimension_numbers = #tpu.dot_dimension_numbers<[1], [0], [0], [1], [0, 0, 1, 1], [], []>} : vector<8x128xf32>, vector<128x128xf32>, vector<8x128xf32> -> vector<8x128xf32>
    %c0_117 = arith.constant 0 : index
    %c0_118 = arith.constant 0 : index
    %185 = vector.load %arg5[%c0_117, %c0_118] : memref<1x128xf32, #tpu.memory_space<vmem>>, vector<1x128xf32>
    %186 = vector.broadcast %185 : vector<1x128xf32> to vector<8x128xf32>
    %187 = arith.addf %184, %186 : vector<8x128xf32>
    %188 = math.tanh %187 : vector<8x128xf32>
    %c0_119 = arith.constant 0 : index
    %c0_120 = arith.constant 0 : index
    %189 = vector.load %arg6[%c0_119, %c0_120] : memref<128x128xf32, #tpu.memory_space<vmem>>, vector<128x128xf32>
    %cst_121 = arith.constant dense<0.000000e+00> : vector<8x128xf32>
    %190 = tpu.matmul %188, %189, %cst_121 {dimension_numbers = #tpu.dot_dimension_numbers<[1], [0], [0], [1], [0, 0, 1, 1], [], []>} : vector<8x128xf32>, vector<128x128xf32>, vector<8x128xf32> -> vector<8x128xf32>
    %c0_122 = arith.constant 0 : index
    %c0_123 = arith.constant 0 : index
    %191 = vector.load %arg7[%c0_122, %c0_123] : memref<1x128xf32, #tpu.memory_space<vmem>>, vector<1x128xf32>
    %192 = vector.broadcast %191 : vector<1x128xf32> to vector<8x128xf32>
    %193 = arith.addf %190, %192 : vector<8x128xf32>
    %cst_124 = arith.constant dense<0xFF800000> : vector<8xf32>
    %194 = vector.multi_reduction <maximumf>, %193, %cst_124 [1] : vector<8x128xf32> to vector<8xf32>
    %195 = vector.shape_cast %194 : vector<8xf32> to vector<8x1xf32>
    %196 = vector.broadcast %195 : vector<8x1xf32> to vector<8x128xf32>
    %197 = arith.subf %193, %196 : vector<8x128xf32>
    %198 = math.exp %197 : vector<8x128xf32>
    %cst_125 = arith.constant dense<0.000000e+00> : vector<8xf32>
    %199 = vector.multi_reduction <add>, %198, %cst_125 [1] : vector<8x128xf32> to vector<8xf32>
    %200 = vector.shape_cast %199 : vector<8xf32> to vector<8x1xf32>
    %201 = math.log %200 : vector<8x1xf32>
    %202 = vector.broadcast %201 : vector<8x1xf32> to vector<8x128xf32>
    %203 = arith.subf %197, %202 : vector<8x128xf32>
    %204 = arith.index_cast %c5_i32 : i32 to index
    %c0_126 = arith.constant 0 : index
    %c0_127 = arith.constant 0 : index
    %205 = vector.load %arg8[%204, %c0_126, %c0_127] : memref<8x8x128xf32, #tpu.memory_space<vmem>>, vector<1x8x128xf32>
    %206 = vector.shape_cast %205 : vector<1x8x128xf32> to vector<8x128xf32>
    %207 = vector.shape_cast %203 : vector<8x128xf32> to vector<1x8x128xf32>
    tpu.vector_store %arg8[%204, %c0_126, %c0_127], %207 {strides = array<i32>} : memref<8x8x128xf32, #tpu.memory_space<vmem>>, vector<1x8x128xf32>,
    %208 = arith.index_cast %c5_i32 : i32 to index
    %c0_128 = arith.constant 0 : index
    %c0_129 = arith.constant 0 : index
    %209 = vector.load %arg9[%208, %c0_128, %c0_129] : memref<8x8x128xf32, #tpu.memory_space<vmem>>, vector<1x8x128xf32>
    %210 = vector.shape_cast %209 : vector<1x8x128xf32> to vector<8x128xf32>
    %211 = vector.shape_cast %188 : vector<8x128xf32> to vector<1x8x128xf32>
    tpu.vector_store %arg9[%208, %c0_128, %c0_129], %211 {strides = array<i32>} : memref<8x8x128xf32, #tpu.memory_space<vmem>>, vector<1x8x128xf32>,
    %c0_130 = arith.constant 0 : index
    %c0_131 = arith.constant 0 : index
    %212 = vector.load %arg10[%c0_130, %c0_131] : memref<8x128xf32, #tpu.memory_space<vmem>>, vector<8x128xf32>
    tpu.vector_store %arg10[%c0_130, %c0_131], %188 {strides = array<i32>} : memref<8x128xf32, #tpu.memory_space<vmem>>, vector<8x128xf32>,
    %c6_i32 = arith.constant 6 : i32
    %213 = arith.index_cast %c6_i32 : i32 to index
    %c0_132 = arith.constant 0 : index
    %c0_133 = arith.constant 0 : index
    %214 = vector.load %arg2[%213, %c0_132, %c0_133] : memref<8x8x128xf32, #tpu.memory_space<vmem>>, vector<1x8x128xf32>
    %215 = vector.shape_cast %214 : vector<1x8x128xf32> to vector<8x128xf32>
    %c0_134 = arith.constant 0 : index
    %c0_135 = arith.constant 0 : index
    %216 = vector.load %arg10[%c0_134, %c0_135] : memref<8x128xf32, #tpu.memory_space<vmem>>, vector<8x128xf32>
    %217 = arith.addf %215, %216 : vector<8x128xf32>
    %c0_136 = arith.constant 0 : index
    %c0_137 = arith.constant 0 : index
    %218 = vector.load %arg4[%c0_136, %c0_137] : memref<128x128xf32, #tpu.memory_space<vmem>>, vector<128x128xf32>
    %cst_138 = arith.constant dense<0.000000e+00> : vector<8x128xf32>
    %219 = tpu.matmul %217, %218, %cst_138 {dimension_numbers = #tpu.dot_dimension_numbers<[1], [0], [0], [1], [0, 0, 1, 1], [], []>} : vector<8x128xf32>, vector<128x128xf32>, vector<8x128xf32> -> vector<8x128xf32>
    %c0_139 = arith.constant 0 : index
    %c0_140 = arith.constant 0 : index
    %220 = vector.load %arg5[%c0_139, %c0_140] : memref<1x128xf32, #tpu.memory_space<vmem>>, vector<1x128xf32>
    %221 = vector.broadcast %220 : vector<1x128xf32> to vector<8x128xf32>
    %222 = arith.addf %219, %221 : vector<8x128xf32>
    %223 = math.tanh %222 : vector<8x128xf32>
    %c0_141 = arith.constant 0 : index
    %c0_142 = arith.constant 0 : index
    %224 = vector.load %arg6[%c0_141, %c0_142] : memref<128x128xf32, #tpu.memory_space<vmem>>, vector<128x128xf32>
    %cst_143 = arith.constant dense<0.000000e+00> : vector<8x128xf32>
    %225 = tpu.matmul %223, %224, %cst_143 {dimension_numbers = #tpu.dot_dimension_numbers<[1], [0], [0], [1], [0, 0, 1, 1], [], []>} : vector<8x128xf32>, vector<128x128xf32>, vector<8x128xf32> -> vector<8x128xf32>
    %c0_144 = arith.constant 0 : index
    %c0_145 = arith.constant 0 : index
    %226 = vector.load %arg7[%c0_144, %c0_145] : memref<1x128xf32, #tpu.memory_space<vmem>>, vector<1x128xf32>
    %227 = vector.broadcast %226 : vector<1x128xf32> to vector<8x128xf32>
    %228 = arith.addf %225, %227 : vector<8x128xf32>
    %cst_146 = arith.constant dense<0xFF800000> : vector<8xf32>
    %229 = vector.multi_reduction <maximumf>, %228, %cst_146 [1] : vector<8x128xf32> to vector<8xf32>
    %230 = vector.shape_cast %229 : vector<8xf32> to vector<8x1xf32>
    %231 = vector.broadcast %230 : vector<8x1xf32> to vector<8x128xf32>
    %232 = arith.subf %228, %231 : vector<8x128xf32>
    %233 = math.exp %232 : vector<8x128xf32>
    %cst_147 = arith.constant dense<0.000000e+00> : vector<8xf32>
    %234 = vector.multi_reduction <add>, %233, %cst_147 [1] : vector<8x128xf32> to vector<8xf32>
    %235 = vector.shape_cast %234 : vector<8xf32> to vector<8x1xf32>
    %236 = math.log %235 : vector<8x1xf32>
    %237 = vector.broadcast %236 : vector<8x1xf32> to vector<8x128xf32>
    %238 = arith.subf %232, %237 : vector<8x128xf32>
    %239 = arith.index_cast %c6_i32 : i32 to index
    %c0_148 = arith.constant 0 : index
    %c0_149 = arith.constant 0 : index
    %240 = vector.load %arg8[%239, %c0_148, %c0_149] : memref<8x8x128xf32, #tpu.memory_space<vmem>>, vector<1x8x128xf32>
    %241 = vector.shape_cast %240 : vector<1x8x128xf32> to vector<8x128xf32>
    %242 = vector.shape_cast %238 : vector<8x128xf32> to vector<1x8x128xf32>
    tpu.vector_store %arg8[%239, %c0_148, %c0_149], %242 {strides = array<i32>} : memref<8x8x128xf32, #tpu.memory_space<vmem>>, vector<1x8x128xf32>,
    %243 = arith.index_cast %c6_i32 : i32 to index
    %c0_150 = arith.constant 0 : index
    %c0_151 = arith.constant 0 : index
    %244 = vector.load %arg9[%243, %c0_150, %c0_151] : memref<8x8x128xf32, #tpu.memory_space<vmem>>, vector<1x8x128xf32>
    %245 = vector.shape_cast %244 : vector<1x8x128xf32> to vector<8x128xf32>
    %246 = vector.shape_cast %223 : vector<8x128xf32> to vector<1x8x128xf32>
    tpu.vector_store %arg9[%243, %c0_150, %c0_151], %246 {strides = array<i32>} : memref<8x8x128xf32, #tpu.memory_space<vmem>>, vector<1x8x128xf32>,
    %c0_152 = arith.constant 0 : index
    %c0_153 = arith.constant 0 : index
    %247 = vector.load %arg10[%c0_152, %c0_153] : memref<8x128xf32, #tpu.memory_space<vmem>>, vector<8x128xf32>
    tpu.vector_store %arg10[%c0_152, %c0_153], %223 {strides = array<i32>} : memref<8x128xf32, #tpu.memory_space<vmem>>, vector<8x128xf32>,
    %c7_i32 = arith.constant 7 : i32
    %248 = arith.index_cast %c7_i32 : i32 to index
    %c0_154 = arith.constant 0 : index
    %c0_155 = arith.constant 0 : index
    %249 = vector.load %arg2[%248, %c0_154, %c0_155] : memref<8x8x128xf32, #tpu.memory_space<vmem>>, vector<1x8x128xf32>
    %250 = vector.shape_cast %249 : vector<1x8x128xf32> to vector<8x128xf32>
    %c0_156 = arith.constant 0 : index
    %c0_157 = arith.constant 0 : index
    %251 = vector.load %arg10[%c0_156, %c0_157] : memref<8x128xf32, #tpu.memory_space<vmem>>, vector<8x128xf32>
    %252 = arith.addf %250, %251 : vector<8x128xf32>
    %c0_158 = arith.constant 0 : index
    %c0_159 = arith.constant 0 : index
    %253 = vector.load %arg4[%c0_158, %c0_159] : memref<128x128xf32, #tpu.memory_space<vmem>>, vector<128x128xf32>
    %cst_160 = arith.constant dense<0.000000e+00> : vector<8x128xf32>
    %254 = tpu.matmul %252, %253, %cst_160 {dimension_numbers = #tpu.dot_dimension_numbers<[1], [0], [0], [1], [0, 0, 1, 1], [], []>} : vector<8x128xf32>, vector<128x128xf32>, vector<8x128xf32> -> vector<8x128xf32>
    %c0_161 = arith.constant 0 : index
    %c0_162 = arith.constant 0 : index
    %255 = vector.load %arg5[%c0_161, %c0_162] : memref<1x128xf32, #tpu.memory_space<vmem>>, vector<1x128xf32>
    %256 = vector.broadcast %255 : vector<1x128xf32> to vector<8x128xf32>
    %257 = arith.addf %254, %256 : vector<8x128xf32>
    %258 = math.tanh %257 : vector<8x128xf32>
    %c0_163 = arith.constant 0 : index
    %c0_164 = arith.constant 0 : index
    %259 = vector.load %arg6[%c0_163, %c0_164] : memref<128x128xf32, #tpu.memory_space<vmem>>, vector<128x128xf32>
    %cst_165 = arith.constant dense<0.000000e+00> : vector<8x128xf32>
    %260 = tpu.matmul %258, %259, %cst_165 {dimension_numbers = #tpu.dot_dimension_numbers<[1], [0], [0], [1], [0, 0, 1, 1], [], []>} : vector<8x128xf32>, vector<128x128xf32>, vector<8x128xf32> -> vector<8x128xf32>
    %c0_166 = arith.constant 0 : index
    %c0_167 = arith.constant 0 : index
    %261 = vector.load %arg7[%c0_166, %c0_167] : memref<1x128xf32, #tpu.memory_space<vmem>>, vector<1x128xf32>
    %262 = vector.broadcast %261 : vector<1x128xf32> to vector<8x128xf32>
    %263 = arith.addf %260, %262 : vector<8x128xf32>
    %cst_168 = arith.constant dense<0xFF800000> : vector<8xf32>
    %264 = vector.multi_reduction <maximumf>, %263, %cst_168 [1] : vector<8x128xf32> to vector<8xf32>
    %265 = vector.shape_cast %264 : vector<8xf32> to vector<8x1xf32>
    %266 = vector.broadcast %265 : vector<8x1xf32> to vector<8x128xf32>
    %267 = arith.subf %263, %266 : vector<8x128xf32>
    %268 = math.exp %267 : vector<8x128xf32>
    %cst_169 = arith.constant dense<0.000000e+00> : vector<8xf32>
    %269 = vector.multi_reduction <add>, %268, %cst_169 [1] : vector<8x128xf32> to vector<8xf32>
    %270 = vector.shape_cast %269 : vector<8xf32> to vector<8x1xf32>
    %271 = math.log %270 : vector<8x1xf32>
    %272 = vector.broadcast %271 : vector<8x1xf32> to vector<8x128xf32>
    %273 = arith.subf %267, %272 : vector<8x128xf32>
    %274 = arith.index_cast %c7_i32 : i32 to index
    %c0_170 = arith.constant 0 : index
    %c0_171 = arith.constant 0 : index
    %275 = vector.load %arg8[%274, %c0_170, %c0_171] : memref<8x8x128xf32, #tpu.memory_space<vmem>>, vector<1x8x128xf32>
    %276 = vector.shape_cast %275 : vector<1x8x128xf32> to vector<8x128xf32>
    %277 = vector.shape_cast %273 : vector<8x128xf32> to vector<1x8x128xf32>
    tpu.vector_store %arg8[%274, %c0_170, %c0_171], %277 {strides = array<i32>} : memref<8x8x128xf32, #tpu.memory_space<vmem>>, vector<1x8x128xf32>,
    %278 = arith.index_cast %c7_i32 : i32 to index
    %c0_172 = arith.constant 0 : index
    %c0_173 = arith.constant 0 : index
    %279 = vector.load %arg9[%278, %c0_172, %c0_173] : memref<8x8x128xf32, #tpu.memory_space<vmem>>, vector<1x8x128xf32>
    %280 = vector.shape_cast %279 : vector<1x8x128xf32> to vector<8x128xf32>
    %281 = vector.shape_cast %258 : vector<8x128xf32> to vector<1x8x128xf32>
    tpu.vector_store %arg9[%278, %c0_172, %c0_173], %281 {strides = array<i32>} : memref<8x8x128xf32, #tpu.memory_space<vmem>>, vector<1x8x128xf32>,
    %c0_174 = arith.constant 0 : index
    %c0_175 = arith.constant 0 : index
    %282 = vector.load %arg10[%c0_174, %c0_175] : memref<8x128xf32, #tpu.memory_space<vmem>>, vector<8x128xf32>
    tpu.vector_store %arg10[%c0_174, %c0_175], %258 {strides = array<i32>} : memref<8x128xf32, #tpu.memory_space<vmem>>, vector<8x128xf32>,
    %c8_i32 = arith.constant 8 : i32
    return
  }
  func.func @transform_0(%arg0: i32, %arg1: i32) -> (i32, i32, i32) {
    %c0_i32 = arith.constant 0 : i32
    %c0_i32_0 = arith.constant 0 : i32
    return %arg1, %arg0, %c0_i32 : i32, i32, i32
  }
  func.func @transform_1(%arg0: i32, %arg1: i32) -> (i32, i32) {
    %c0_i32 = arith.constant 0 : i32
    %c0_i32_0 = arith.constant 0 : i32
    return %arg0, %c0_i32 : i32, i32
  }
  func.func @transform_2(%arg0: i32, %arg1: i32) -> (i32, i32) {
    %c0_i32 = arith.constant 0 : i32
    %c0_i32_0 = arith.constant 0 : i32
    %c0_i32_1 = arith.constant 0 : i32
    return %c0_i32, %c0_i32_0 : i32, i32
  }
  func.func @transform_3(%arg0: i32, %arg1: i32) -> (i32, i32) {
    %c0_i32 = arith.constant 0 : i32
    %c0_i32_0 = arith.constant 0 : i32
    %c0_i32_1 = arith.constant 0 : i32
    return %c0_i32, %c0_i32_0 : i32, i32
  }
  func.func @transform_4(%arg0: i32, %arg1: i32) -> (i32, i32) {
    %c0_i32 = arith.constant 0 : i32
    %c0_i32_0 = arith.constant 0 : i32
    %c0_i32_1 = arith.constant 0 : i32
    return %c0_i32, %c0_i32_0 : i32, i32
  }
  func.func @transform_5(%arg0: i32, %arg1: i32) -> (i32, i32) {
    %c0_i32 = arith.constant 0 : i32
    %c0_i32_0 = arith.constant 0 : i32
    %c0_i32_1 = arith.constant 0 : i32
    return %c0_i32, %c0_i32_0 : i32, i32
  }
  func.func @transform_6(%arg0: i32, %arg1: i32) -> (i32, i32, i32) {
    %c0_i32 = arith.constant 0 : i32
    %c0_i32_0 = arith.constant 0 : i32
    return %arg1, %arg0, %c0_i32 : i32, i32, i32
  }
  func.func @transform_7(%arg0: i32, %arg1: i32) -> (i32, i32, i32) {
    %c0_i32 = arith.constant 0 : i32
    %c0_i32_0 = arith.constant 0 : i32
    return %arg1, %arg0, %c0_i32 : i32, i32, i32
  }
}

</mosaic_0001>

<llo_original>
// kernel: tpu_custom_call.1
$region0: #{tpu_custom_call.1}
  #allocation0 [shape = 'u32[]', space=smem, size = 0x4, offset = 0x4, fixed_abs, tag = 'smem constant byte address 0x4 - core index']
  #allocation1 [shape = 'u32[144,128]{1,0:T(1,128)}', space=vmem, size = 0x12000, scoped, tag = 'internal scratch']
  #allocation2 [shape = 'f32[8,128]{1,0:T(8,128)}', space=vmem, size = 0x1000, scoped, tag = 'scratch operand']
  %s0 = inlined_call_operand.hbm [shape: f32[8,8,128], index: 0, kind: input, shape index: {}]
  %s1 = inlined_call_operand.hbm [shape: f32[8,128], index: 1, kind: input, shape index: {}]
  %s2 = inlined_call_operand.hbm [shape: f32[128,128], index: 2, kind: input, shape index: {}]
  %s3 = inlined_call_operand.vmem [shape: f32[1,128], index: 3, kind: input, shape index: {}]
  %s4 = inlined_call_operand.hbm [shape: f32[128,128], index: 4, kind: input, shape index: {}]
  %s5 = inlined_call_operand.vmem [shape: f32[1,128], index: 5, kind: input, shape index: {}]
  %s6 = inlined_call_operand.hbm [shape: f32[8,8,128], index: 6, kind: output, shape index: {0}]
  %s7 = inlined_call_operand.hbm [shape: f32[8,8,128], index: 7, kind: output, shape index: {1}]
  %8 = xla_tuple %s6, %s7
  %s9 = sld [smem:[#allocation0]]
  $region62: #{tpu_custom_call.1} parent=0
    _
  %s11 = ssub.s32 1, %s9
  %s12 = scalar_select 0, %s11, %s9
  $region1: #{tpu_custom_call.1} parent=0
    #allocation3 [shape = 'u8[32768]{0}', space=vmem, size = 0x8000, scoped, tag = 'input window, operand 0, single buffered']
    #allocation4 [shape = 's32[1]{0}', space=sflag, size = 0x4, scoped, tag = 'scoped memory for tpu_custom_call.1']
    #allocation5 [shape = 's32[1]{0}', space=sflag, size = 0x4, scoped, tag = 'scoped memory for tpu_custom_call.1']
    #allocation6 [shape = 'u8[4096]{0}', space=vmem, size = 0x1000, scoped, tag = 'input window, operand 1, single buffered']
    #allocation7 [shape = 's32[1]{0}', space=sflag, size = 0x4, scoped, tag = 'scoped memory for tpu_custom_call.1']
    #allocation8 [shape = 'u8[65536]{0}', space=vmem, size = 0x10000, scoped, tag = 'input window, operand 2, single buffered']
    #allocation9 [shape = 'u8[65536]{0}', space=vmem, size = 0x10000, scoped, tag = 'input window, operand 4, single buffered']
    #allocation10 [shape = 's32[1]{0}', space=sflag, size = 0x4, scoped, tag = 'scoped memory for tpu_custom_call.1']
    #allocation11 [shape = 'u8[32768]{0}', space=vmem, size = 0x8000, scoped, tag = 'output window, operand 0, single buffered']
    #allocation12 [shape = 'u8[32768]{0}', space=vmem, size = 0x8000, scoped, tag = 'output window, operand 1, single buffered']
    #allocation13 [shape = 's32[1]{0}', space=sflag, size = 0x4, scoped, tag = 'scoped memory for tpu_custom_call.1']
    %13 = vsyncpa [#allocation4], 0
    %14 = vsyncpa [#allocation7], 0
    %15 = vsyncpa [#allocation10], 0
    %16 = vsyncpa [#allocation5], 0
    %17 = vsyncpa [#allocation13], 0
    // Predicated region
    $region2: #{tpu_custom_call.1} parent=1 // pred_check
      _
    $region3: #{tpu_custom_call.1} parent=1 // pred_check_branch
      %19 = sbr.rel (0) target = $region5
    $region4: #{tpu_custom_call.1} parent=1 // pred_region
      %s21 = ssub.s32 1024, 1024
      %22 = vsyncadd [#allocation4], %s21
      %s23 = sshll.u32 [#allocation3], 4
      %s24 = int_to_ptr.vmem [resolvable:$true] %s23
      %29 = dma.hbm_to_vmem [thread:$0]  %s0, 1024, %s24, [#allocation4], 128, 128, 8
    $region5: #{tpu_custom_call.1} parent=1 // pred_fallthru
      _
    // Predicated region
    $region6: #{tpu_custom_call.1} parent=1 // pred_check
      _
    $region7: #{tpu_custom_call.1} parent=1 // pred_check_branch
      %31 = sbr.rel (0) target = $region9
    $region8: #{tpu_custom_call.1} parent=1 // pred_region
      %s33 = ssub.s32 128, 128
      %34 = vsyncadd [#allocation7], %s33
      %s36 = sshll.u32 [#allocation6], 4
      %s37 = int_to_ptr.vmem [resolvable:$true] %s36
      %39 = dma.hbm_to_vmem [thread:$0]  %s1, 128, %s37, [#allocation7]
    $region9: #{tpu_custom_call.1} parent=1 // pred_fallthru
      _
    // Predicated region
    $region10: #{tpu_custom_call.1} parent=1 // pred_check
      _
    $region11: #{tpu_custom_call.1} parent=1 // pred_check_branch
      %41 = sbr.rel (0) target = $region13
    $region12: #{tpu_custom_call.1} parent=1 // pred_region
      %s43 = ssub.s32 2048, 2048
      %44 = vsyncadd [#allocation7], %s43
      %s45 = sshll.u32 [#allocation8], 4
      %s46 = int_to_ptr.vmem [resolvable:$true] %s45
      %51 = dma.hbm_to_vmem [thread:$0]  %s2, 2048, %s46, [#allocation7], 128, 128, 8
    $region13: #{tpu_custom_call.1} parent=1 // pred_fallthru
      _
    // Predicated region
    $region14: #{tpu_custom_call.1} parent=1 // pred_check
      _
    $region15: #{tpu_custom_call.1} parent=1 // pred_check_branch
      %53 = sbr.rel (0) target = $region17
    $region16: #{tpu_custom_call.1} parent=1 // pred_region
      _
    $region17: #{tpu_custom_call.1} parent=1 // pred_fallthru
      _
    // Predicated region
    $region18: #{tpu_custom_call.1} parent=1 // pred_check
      _
    $region19: #{tpu_custom_call.1} parent=1 // pred_check_branch
      %55 = sbr.rel (0) target = $region21
    $region20: #{tpu_custom_call.1} parent=1 // pred_region
      %s57 = ssub.s32 2048, 2048
      %58 = vsyncadd [#allocation10], %s57
      %s59 = sshll.u32 [#allocation9], 4
      %s60 = int_to_ptr.vmem [resolvable:$true] %s59
      %65 = dma.hbm_to_vmem [thread:$0]  %s4, 2048, %s60, [#allocation10], 128, 128, 8
    $region21: #{tpu_custom_call.1} parent=1 // pred_fallthru
      _
    // Predicated region
    $region22: #{tpu_custom_call.1} parent=1 // pred_check
      _
    $region23: #{tpu_custom_call.1} parent=1 // pred_check_branch
      %67 = sbr.rel (0) target = $region25
    $region24: #{tpu_custom_call.1} parent=1 // pred_region
      _
    $region25: #{tpu_custom_call.1} parent=1 // pred_fallthru
      _
    // Predicated region
    $region26: #{tpu_custom_call.1} parent=1 // pred_check
      _
    $region27: #{tpu_custom_call.1} parent=1 // pred_check_branch
      %69 = sbr.rel (0) target = $region29
    $region28: #{tpu_custom_call.1} parent=1 // pred_region
      %70 = dma.done [#allocation4], 1024
    $region29: #{tpu_custom_call.1} parent=1 // pred_fallthru
      _
    // Predicated region
    $region30: #{tpu_custom_call.1} parent=1 // pred_check
      _
    $region31: #{tpu_custom_call.1} parent=1 // pred_check_branch
      %72 = sbr.rel (0) target = $region33
    $region32: #{tpu_custom_call.1} parent=1 // pred_region
      %73 = dma.done [#allocation7], 128
    $region33: #{tpu_custom_call.1} parent=1 // pred_fallthru
      _
    // Predicated region
    $region34: #{tpu_custom_call.1} parent=1 // pred_check
      _
    $region35: #{tpu_custom_call.1} parent=1 // pred_check_branch
      %75 = sbr.rel (0) target = $region37
    $region36: #{tpu_custom_call.1} parent=1 // pred_region
      %76 = dma.done [#allocation7], 2048
    $region37: #{tpu_custom_call.1} parent=1 // pred_fallthru
      _
    // Predicated region
    $region38: #{tpu_custom_call.1} parent=1 // pred_check
      _
    $region39: #{tpu_custom_call.1} parent=1 // pred_check_branch
      %78 = sbr.rel (0) target = $region41
    $region40: #{tpu_custom_call.1} parent=1 // pred_region
      %79 = dma.done [#allocation10], 2048
    $region41: #{tpu_custom_call.1} parent=1 // pred_fallthru
      _
    %p80 = scmp.eq.s32.totalorder 0, 0
    // Predicated region
    $region42: #{tpu_custom_call.1} parent=1 // pred_check
      %p81 = pneg %p80
    $region43: #{tpu_custom_call.1} parent=1 // pred_check_branch
      %83 = sbr.rel (%p81) target = $region45
    $region44: #{tpu_custom_call.1} parent=1 // pred_region
      %v84 = vld [vmem:[#allocation6] sm:$0xff]
      %85 = vst [vmem:[#allocation2] sm:$0xff] %v84
    $region45: #{tpu_custom_call.1} parent=1 // pred_fallthru
      _
    %v86 = vld [vmem:[#allocation3] sm:$0xff]
    %v87 = vld [vmem:[#allocation2] sm:$0xff]
    %v88 = vadd.f32 %v86, %v87
    %v89 = vld [vmem:[#allocation8] sm:$0xff]
    %v90 = vld [vmem:[#allocation8 + $0x8] sm:$0xff]
    %v91 = vld [vmem:[#allocation8 + $0x10] sm:$0xff]
    %v92 = vld [vmem:[#allocation8 + $0x18] sm:$0xff]
    %v93 = vld [vmem:[#allocation8 + $0x20] sm:$0xff]
    %v94 = vld [vmem:[#allocation8 + $0x28] sm:$0xff]
    %v95 = vld [vmem:[#allocation8 + $0x30] sm:$0xff]
    %v96 = vld [vmem:[#allocation8 + $0x38] sm:$0xff]
    %v97 = vld [vmem:[#allocation8 + $0x40] sm:$0xff]
    %v98 = vld [vmem:[#allocation8 + $0x48] sm:$0xff]
    %v99 = vld [vmem:[#allocation8 + $0x50] sm:$0xff]
    %v100 = vld [vmem:[#allocation8 + $0x58] sm:$0xff]
    %v101 = vld [vmem:[#allocation8 + $0x60] sm:$0xff]
    %v102 = vld [vmem:[#allocation8 + $0x68] sm:$0xff]
    %v103 = vld [vmem:[#allocation8 + $0x70] sm:$0xff]
    %v104 = vld [vmem:[#allocation8 + $0x78] sm:$0xff]
    %v105 = vld [vmem:[%s3] sm:$0x1]
    %v107 = vlaneseq
    %v108 = vshrl.u32 %v107, 7
    %v109 = vsub.s32 0, %v108
    %v110 = vrot.slane %v105, %v109
    %112 = vmatprep.subr.mxu0 0.0
    %113 = vmatpush1.msra.mxu0 %v89
    %114 = vmatprep.subr.mxu0 0.0
    %115 = vmatpush1.msra.mxu0 %v90
    %116 = vmatprep.subr.mxu0 0.0
    %117 = vmatpush1.msra.mxu0 %v91
    %118 = vmatprep.subr.mxu0 0.0
    %119 = vmatpush1.msra.mxu0 %v92
    %120 = vmatprep.subr.mxu0 0.0
    %121 = vmatpush1.msra.mxu0 %v93
    %122 = vmatprep.subr.mxu0 0.0
    %123 = vmatpush1.msra.mxu0 %v94
    %124 = vmatprep.subr.mxu0 0.0
    %125 = vmatpush1.msra.mxu0 %v95
    %126 = vmatprep.subr.mxu0 0.0
    %127 = vmatpush1.msra.mxu0 %v96
    %128 = vmatprep.subr.mxu0 0.0
    %129 = vmatpush1.msra.mxu0 %v97
    %130 = vmatprep.subr.mxu0 0.0
    %131 = vmatpush1.msra.mxu0 %v98
    %132 = vmatprep.subr.mxu0 0.0
    %133 = vmatpush1.msra.mxu0 %v99
    %134 = vmatprep.subr.mxu0 0.0
    %135 = vmatpush1.msra.mxu0 %v100
    %136 = vmatprep.subr.mxu0 0.0
    %137 = vmatpush1.msra.mxu0 %v101
    %138 = vmatprep.subr.mxu0 0.0
    %139 = vmatpush1.msra.mxu0 %v102
    %140 = vmatprep.subr.mxu0 0.0
    %141 = vmatpush1.msra.mxu0 %v103
    %142 = vmatprep.subr.mxu0 0.0
    %143 = vmatpush1.msra.mxu0 %v104
    %144 = vmatprep.subr.mxu0 0.0
    %145 = vmatpush1.msra.mxu0 0.0
    %146 = vmatprep.subr.mxu0 0.0
    %147 = vmatpush1.msra.mxu0 0.0
    %148 = vmatprep.subr.mxu0 0.0
    %149 = vmatpush1.msra.mxu0 0.0
    %150 = vmatprep.subr.mxu0 0.0
    %151 = vmatpush1.msra.mxu0 0.0
    %152 = vmatprep.subr.mxu0 0.0
    %153 = vmatpush1.msra.mxu0 0.0
    %154 = vmatprep.subr.mxu0 0.0
    %155 = vmatpush1.msra.mxu0 0.0
    %156 = vmatprep.subr.mxu0 0.0
    %157 = vmatpush1.msra.mxu0 0.0
    %158 = vmatprep.subr.mxu0 0.0
    %159 = vmatpush1.msra.mxu0 0.0
    %160 = vmatprep.subr.mxu0 0.0
    %161 = vmatpush1.msra.mxu0 0.0
    %162 = vmatprep.subr.mxu0 0.0
    %163 = vmatpush1.msra.mxu0 0.0
    %164 = vmatprep.subr.mxu0 0.0
    %165 = vmatpush1.msra.mxu0 0.0
    %166 = vmatprep.subr.mxu0 0.0
    %167 = vmatpush1.msra.mxu0 0.0
    %168 = vmatprep.subr.mxu0 0.0
    %169 = vmatpush1.msra.mxu0 0.0
    %170 = vmatprep.subr.mxu0 0.0
    %171 = vmatpush1.msra.mxu0 0.0
    %172 = vmatprep.subr.mxu0 0.0
    %173 = vmatpush1.msra.mxu0 0.0
    %174 = vmatprep.subr.mxu0 0.0
    %175 = vmatpush1.msra.mxu0 0.0
    %176 = vmatprep.mubr.f32.mxu0 0.0
    %177 = vmatmul.mubr.f32.gmra.mrb[0].mxu0 %v88
    %v178 = vpop.f32.mrb[0].mxu0
    %v179 = vadd.f32 %v110, %v178
    %v180 = vpop.f32.mrb[0].mxu0
    %181 = vdwg.mxu0
    %v182 = vtanh.pop %v179
    %v183 = vld [vmem:[#allocation9] sm:$0xff]
    %v184 = vld [vmem:[#allocation9 + $0x8] sm:$0xff]
    %v185 = vld [vmem:[#allocation9 + $0x10] sm:$0xff]
    %v186 = vld [vmem:[#allocation9 + $0x18] sm:$0xff]
    %v187 = vld [vmem:[#allocation9 + $0x20] sm:$0xff]
    %v188 = vld [vmem:[#allocation9 + $0x28] sm:$0xff]
    %v189 = vld [vmem:[#allocation9 + $0x30] sm:$0xff]
    %v190 = vld [vmem:[#allocation9 + $0x38] sm:$0xff]
    %v191 = vld [vmem:[#allocation9 + $0x40] sm:$0xff]
    %v192 = vld [vmem:[#allocation9 + $0x48] sm:$0xff]
    %v193 = vld [vmem:[#allocation9 + $0x50] sm:$0xff]
    %v194 = vld [vmem:[#allocation9 + $0x58] sm:$0xff]
    %v195 = vld [vmem:[#allocation9 + $0x60] sm:$0xff]
    %v196 = vld [vmem:[#allocation9 + $0x68] sm:$0xff]
    %v197 = vld [vmem:[#allocation9 + $0x70] sm:$0xff]
    %v198 = vld [vmem:[#allocation9 + $0x78] sm:$0xff]
    %v199 = vld [vmem:[%s5] sm:$0x1]
    %v201 = vlaneseq
    %v202 = vshrl.u32 %v201, 7
    %v203 = vsub.s32 0, %v202
    %v204 = vrot.slane %v199, %v203
    %206 = vmatprep.subr.mxu0 0.0
    %207 = vmatpush1.msra.mxu0 %v183
    %208 = vmatprep.subr.mxu0 0.0
    %209 = vmatpush1.msra.mxu0 %v184
    %210 = vmatprep.subr.mxu0 0.0
    %211 = vmatpush1.msra.mxu0 %v185
    %212 = vmatprep.subr.mxu0 0.0
    %213 = vmatpush1.msra.mxu0 %v186
    %214 = vmatprep.subr.mxu0 0.0
    %215 = vmatpush1.msra.mxu0 %v187
    %216 = vmatprep.subr.mxu0 0.0
    %217 = vmatpush1.msra.mxu0 %v188
    %218 = vmatprep.subr.mxu0 0.0
    %219 = vmatpush1.msra.mxu0 %v189
    %220 = vmatprep.subr.mxu0 0.0
    %221 = vmatpush1.msra.mxu0 %v190
    %222 = vmatprep.subr.mxu0 0.0
    %223 = vmatpush1.msra.mxu0 %v191
    %224 = vmatprep.subr.mxu0 0.0
    %225 = vmatpush1.msra.mxu0 %v192
    %226 = vmatprep.subr.mxu0 0.0
    %227 = vmatpush1.msra.mxu0 %v193
    %228 = vmatprep.subr.mxu0 0.0
    %229 = vmatpush1.msra.mxu0 %v194
    %230 = vmatprep.subr.mxu0 0.0
    %231 = vmatpush1.msra.mxu0 %v195
    %232 = vmatprep.subr.mxu0 0.0
    %233 = vmatpush1.msra.mxu0 %v196
    %234 = vmatprep.subr.mxu0 0.0
    %235 = vmatpush1.msra.mxu0 %v197
    %236 = vmatprep.subr.mxu0 0.0
    %237 = vmatpush1.msra.mxu0 %v198
    %238 = vmatprep.subr.mxu0 0.0
    %239 = vmatpush1.msra.mxu0 0.0
    %240 = vmatprep.subr.mxu0 0.0
    %241 = vmatpush1.msra.mxu0 0.0
    %242 = vmatprep.subr.mxu0 0.0
    %243 = vmatpush1.msra.mxu0 0.0
    %244 = vmatprep.subr.mxu0 0.0
    %245 = vmatpush1.msra.mxu0 0.0
    %246 = vmatprep.subr.mxu0 0.0
    %247 = vmatpush1.msra.mxu0 0.0
    %248 = vmatprep.subr.mxu0 0.0
    %249 = vmatpush1.msra.mxu0 0.0
    %250 = vmatprep.subr.mxu0 0.0
    %251 = vmatpush1.msra.mxu0 0.0
    %252 = vmatprep.subr.mxu0 0.0
    %253 = vmatpush1.msra.mxu0 0.0
    %254 = vmatprep.subr.mxu0 0.0
    %255 = vmatpush1.msra.mxu0 0.0
    %256 = vmatprep.subr.mxu0 0.0
    %257 = vmatpush1.msra.mxu0 0.0
    %258 = vmatprep.subr.mxu0 0.0
    %259 = vmatpush1.msra.mxu0 0.0
    %260 = vmatprep.subr.mxu0 0.0
    %261 = vmatpush1.msra.mxu0 0.0
    %262 = vmatprep.subr.mxu0 0.0
    %263 = vmatpush1.msra.mxu0 0.0
    %264 = vmatprep.subr.mxu0 0.0
    %265 = vmatpush1.msra.mxu0 0.0
    %266 = vmatprep.subr.mxu0 0.0
    %267 = vmatpush1.msra.mxu0 0.0
    %268 = vmatprep.subr.mxu0 0.0
    %269 = vmatpush1.msra.mxu0 0.0
    %270 = vmatprep.mubr.f32.mxu0 0.0
    %271 = vmatmul.mubr.f32.gmra.mrb[0].mxu0 %v182
    %v272 = vpop.f32.mrb[0].mxu0
    %v273 = vadd.f32 %v204, %v272
    %v274 = vpop.f32.mrb[0].mxu0
    %275 = vdwg.mxu0
    %276 = vmax.xlane.f32.xlu0 %v273
    %v277 = vpop.xlane.xlu0 %276
    %v278 = vsub.f32 %v273, %v277
    %v279 = vmul.f32 %v278, 1.442695
    %v280 = vpow.pop %v279
    %281 = vadd.xlane.f32.xlu0 %v280
    %v282 = vpop.xlane.xlu0 %281
    %v283 = vlog2.pop %v282
    %v284 = vmul.f32 %v283, 0.6931472
    %v285 = vsub.f32 %v278, %v284
    %286 = vst [vmem:[#allocation11] sm:$0xff] %v285
    %287 = vst [vmem:[#allocation12] sm:$0xff] %v182
    %288 = vst [vmem:[#allocation2] sm:$0xff] %v182
    %s289 = scalar_lea.vmem [#allocation3], 8
    %v290 = vld [vmem:[%s289] sm:$0xff]
    %v291 = vld [vmem:[#allocation2] sm:$0xff]
    %v292 = vadd.f32 %v290, %v291
    %v293 = vld [vmem:[#allocation8] sm:$0xff]
    %v294 = vld [vmem:[#allocation8 + $0x8] sm:$0xff]
    %v295 = vld [vmem:[#allocation8 + $0x10] sm:$0xff]
    %v296 = vld [vmem:[#allocation8 + $0x18] sm:$0xff]
    %v297 = vld [vmem:[#allocation8 + $0x20] sm:$0xff]
    %v298 = vld [vmem:[#allocation8 + $0x28] sm:$0xff]
    %v299 = vld [vmem:[#allocation8 + $0x30] sm:$0xff]
    %v300 = vld [vmem:[#allocation8 + $0x38] sm:$0xff]
    %v301 = vld [vmem:[#allocation8 + $0x40] sm:$0xff]
    %v302 = vld [vmem:[#allocation8 + $0x48] sm:$0xff]
    %v303 = vld [vmem:[#allocation8 + $0x50] sm:$0xff]
    %v304 = vld [vmem:[#allocation8 + $0x58] sm:$0xff]
    %v305 = vld [vmem:[#allocation8 + $0x60] sm:$0xff]
    %v306 = vld [vmem:[#allocation8 + $0x68] sm:$0xff]
    %v307 = vld [vmem:[#allocation8 + $0x70] sm:$0xff]
    %v308 = vld [vmem:[#allocation8 + $0x78] sm:$0xff]
    %v309 = vld [vmem:[%s3] sm:$0x1]
    %v311 = vlaneseq
    %v312 = vshrl.u32 %v311, 7
    %v313 = vsub.s32 0, %v312
    %v314 = vrot.slane %v309, %v313
    %316 = vmatprep.subr.mxu0 0.0
    %317 = vmatpush1.msra.mxu0 %v293
    %318 = vmatprep.subr.mxu0 0.0
    %319 = vmatpush1.msra.mxu0 %v294
    %320 = vmatprep.subr.mxu0 0.0
    %321 = vmatpush1.msra.mxu0 %v295
    %322 = vmatprep.subr.mxu0 0.0
    %323 = vmatpush1.msra.mxu0 %v296
    %324 = vmatprep.subr.mxu0 0.0
    %325 = vmatpush1.msra.mxu0 %v297
    %326 = vmatprep.subr.mxu0 0.0
    %327 = vmatpush1.msra.mxu0 %v298
    %328 = vmatprep.subr.mxu0 0.0
    %329 = vmatpush1.msra.mxu0 %v299
    %330 = vmatprep.subr.mxu0 0.0
    %331 = vmatpush1.msra.mxu0 %v300
    %332 = vmatprep.subr.mxu0 0.0
    %333 = vmatpush1.msra.mxu0 %v301
    %334 = vmatprep.subr.mxu0 0.0
    %335 = vmatpush1.msra.mxu0 %v302
    %336 = vmatprep.subr.mxu0 0.0
    %337 = vmatpush1.msra.mxu0 %v303
    %338 = vmatprep.subr.mxu0 0.0
    %339 = vmatpush1.msra.mxu0 %v304
    %340 = vmatprep.subr.mxu0 0.0
    %341 = vmatpush1.msra.mxu0 %v305
    %342 = vmatprep.subr.mxu0 0.0
    %343 = vmatpush1.msra.mxu0 %v306
    %344 = vmatprep.subr.mxu0 0.0
    %345 = vmatpush1.msra.mxu0 %v307
    %346 = vmatprep.subr.mxu0 0.0
    %347 = vmatpush1.msra.mxu0 %v308
    %348 = vmatprep.subr.mxu0 0.0
    %349 = vmatpush1.msra.mxu0 0.0
    %350 = vmatprep.subr.mxu0 0.0
    %351 = vmatpush1.msra.mxu0 0.0
    %352 = vmatprep.subr.mxu0 0.0
    %353 = vmatpush1.msra.mxu0 0.0
    %354 = vmatprep.subr.mxu0 0.0
    %355 = vmatpush1.msra.mxu0 0.0
    %356 = vmatprep.subr.mxu0 0.0
    %357 = vmatpush1.msra.mxu0 0.0
    %358 = vmatprep.subr.mxu0 0.0
    %359 = vmatpush1.msra.mxu0 0.0
    %360 = vmatprep.subr.mxu0 0.0
    %361 = vmatpush1.msra.mxu0 0.0
    %362 = vmatprep.subr.mxu0 0.0
    %363 = vmatpush1.msra.mxu0 0.0
    %364 = vmatprep.subr.mxu0 0.0
    %365 = vmatpush1.msra.mxu0 0.0
    %366 = vmatprep.subr.mxu0 0.0
    %367 = vmatpush1.msra.mxu0 0.0
    %368 = vmatprep.subr.mxu0 0.0
    %369 = vmatpush1.msra.mxu0 0.0
    %370 = vmatprep.subr.mxu0 0.0
    %371 = vmatpush1.msra.mxu0 0.0
    %372 = vmatprep.subr.mxu0 0.0
    %373 = vmatpush1.msra.mxu0 0.0
    %374 = vmatprep.subr.mxu0 0.0
    %375 = vmatpush1.msra.mxu0 0.0
    %376 = vmatprep.subr.mxu0 0.0
    %377 = vmatpush1.msra.mxu0 0.0
    %378 = vmatprep.subr.mxu0 0.0
    %379 = vmatpush1.msra.mxu0 0.0
    %380 = vmatprep.mubr.f32.mxu0 0.0
    %381 = vmatmul.mubr.f32.gmra.mrb[0].mxu0 %v292
    %v382 = vpop.f32.mrb[0].mxu0
    %v383 = vadd.f32 %v314, %v382
    %v384 = vpop.f32.mrb[0].mxu0
    %385 = vdwg.mxu0
    %v386 = vtanh.pop %v383
    %v387 = vld [vmem:[#allocation9] sm:$0xff]
    %v388 = vld [vmem:[#allocation9 + $0x8] sm:$0xff]
    %v389 = vld [vmem:[#allocation9 + $0x10] sm:$0xff]
    %v390 = vld [vmem:[#allocation9 + $0x18] sm:$0xff]
    %v391 = vld [vmem:[#allocation9 + $0x20] sm:$0xff]
    %v392 = vld [vmem:[#allocation9 + $0x28] sm:$0xff]
    %v393 = vld [vmem:[#allocation9 + $0x30] sm:$0xff]
    %v394 = vld [vmem:[#allocation9 + $0x38] sm:$0xff]
    %v395 = vld [vmem:[#allocation9 + $0x40] sm:$0xff]
    %v396 = vld [vmem:[#allocation9 + $0x48] sm:$0xff]
    %v397 = vld [vmem:[#allocation9 + $0x50] sm:$0xff]
    %v398 = vld [vmem:[#allocation9 + $0x58] sm:$0xff]
    %v399 = vld [vmem:[#allocation9 + $0x60] sm:$0xff]
    %v400 = vld [vmem:[#allocation9 + $0x68] sm:$0xff]
    %v401 = vld [vmem:[#allocation9 + $0x70] sm:$0xff]
    %v402 = vld [vmem:[#allocation9 + $0x78] sm:$0xff]
    %v403 = vld [vmem:[%s5] sm:$0x1]
    %v405 = vlaneseq
    %v406 = vshrl.u32 %v405, 7
    %v407 = vsub.s32 0, %v406
    %v408 = vrot.slane %v403, %v407
    %410 = vmatprep.subr.mxu0 0.0
    %411 = vmatpush1.msra.mxu0 %v387
    %412 = vmatprep.subr.mxu0 0.0
    %413 = vmatpush1.msra.mxu0 %v388
    %414 = vmatprep.subr.mxu0 0.0
    %415 = vmatpush1.msra.mxu0 %v389
    %416 = vmatprep.subr.mxu0 0.0
    %417 = vmatpush1.msra.mxu0 %v390
    %418 = vmatprep.subr.mxu0 0.0
    %419 = vmatpush1.msra.mxu0 %v391
    %420 = vmatprep.subr.mxu0 0.0
    %421 = vmatpush1.msra.mxu0 %v392
    %422 = vmatprep.subr.mxu0 0.0
    %423 = vmatpush1.msra.mxu0 %v393
    %424 = vmatprep.subr.mxu0 0.0
    %425 = vmatpush1.msra.mxu0 %v394
    %426 = vmatprep.subr.mxu0 0.0
    %427 = vmatpush1.msra.mxu0 %v395
    %428 = vmatprep.subr.mxu0 0.0
    %429 = vmatpush1.msra.mxu0 %v396
    %430 = vmatprep.subr.mxu0 0.0
    %431 = vmatpush1.msra.mxu0 %v397
    %432 = vmatprep.subr.mxu0 0.0
    %433 = vmatpush1.msra.mxu0 %v398
    %434 = vmatprep.subr.mxu0 0.0
    %435 = vmatpush1.msra.mxu0 %v399
    %436 = vmatprep.subr.mxu0 0.0
    %437 = vmatpush1.msra.mxu0 %v400
    %438 = vmatprep.subr.mxu0 0.0
    %439 = vmatpush1.msra.mxu0 %v401
    %440 = vmatprep.subr.mxu0 0.0
    %441 = vmatpush1.msra.mxu0 %v402
    %442 = vmatprep.subr.mxu0 0.0
    %443 = vmatpush1.msra.mxu0 0.0
    %444 = vmatprep.subr.mxu0 0.0
    %445 = vmatpush1.msra.mxu0 0.0
    %446 = vmatprep.subr.mxu0 0.0
    %447 = vmatpush1.msra.mxu0 0.0
    %448 = vmatprep.subr.mxu0 0.0
    %449 = vmatpush1.msra.mxu0 0.0
    %450 = vmatprep.subr.mxu0 0.0
    %451 = vmatpush1.msra.mxu0 0.0
    %452 = vmatprep.subr.mxu0 0.0
    %453 = vmatpush1.msra.mxu0 0.0
    %454 = vmatprep.subr.mxu0 0.0
    %455 = vmatpush1.msra.mxu0 0.0
    %456 = vmatprep.subr.mxu0 0.0
    %457 = vmatpush1.msra.mxu0 0.0
    %458 = vmatprep.subr.mxu0 0.0
    %459 = vmatpush1.msra.mxu0 0.0
    %460 = vmatprep.subr.mxu0 0.0
    %461 = vmatpush1.msra.mxu0 0.0
    %462 = vmatprep.subr.mxu0 0.0
    %463 = vmatpush1.msra.mxu0 0.0
    %464 = vmatprep.subr.mxu0 0.0
    %465 = vmatpush1.msra.mxu0 0.0
    %466 = vmatprep.subr.mxu0 0.0
    %467 = vmatpush1.msra.mxu0 0.0
    %468 = vmatprep.subr.mxu0 0.0
    %469 = vmatpush1.msra.mxu0 0.0
    %470 = vmatprep.subr.mxu0 0.0
    %471 = vmatpush1.msra.mxu0 0.0
    %472 = vmatprep.subr.mxu0 0.0
    %473 = vmatpush1.msra.mxu0 0.0
    %474 = vmatprep.mubr.f32.mxu0 0.0
    %475 = vmatmul.mubr.f32.gmra.mrb[0].mxu0 %v386
    %v476 = vpop.f32.mrb[0].mxu0
    %v477 = vadd.f32 %v408, %v476
    %v478 = vpop.f32.mrb[0].mxu0
    %479 = vdwg.mxu0
    %480 = vmax.xlane.f32.xlu0 %v477
    %v481 = vpop.xlane.xlu0 %480
    %v482 = vsub.f32 %v477, %v481
    %v483 = vmul.f32 %v482, 1.442695
    %v484 = vpow.pop %v483
    %485 = vadd.xlane.f32.xlu0 %v484
    %v486 = vpop.xlane.xlu0 %485
    %v487 = vlog2.pop %v486
    %v488 = vmul.f32 %v487, 0.6931472
    %v489 = vsub.f32 %v482, %v488
    %s490 = scalar_lea.vmem [#allocation11], 8
    %491 = vst [vmem:[%s490] sm:$0xff] %v489
    %s492 = scalar_lea.vmem [#allocation12], 8
    %493 = vst [vmem:[%s492] sm:$0xff] %v386
    %494 = vst [vmem:[#allocation2] sm:$0xff] %v386
    %s495 = scalar_lea.vmem [#allocation3], 16
    %v496 = vld [vmem:[%s495] sm:$0xff]
    %v497 = vld [vmem:[#allocation2] sm:$0xff]
    %v498 = vadd.f32 %v496, %v497
    %v499 = vld [vmem:[#allocation8] sm:$0xff]
    %v500 = vld [vmem:[#allocation8 + $0x8] sm:$0xff]
    %v501 = vld [vmem:[#allocation8 + $0x10] sm:$0xff]
    %v502 = vld [vmem:[#allocation8 + $0x18] sm:$0xff]
    %v503 = vld [vmem:[#allocation8 + $0x20] sm:$0xff]
    %v504 = vld [vmem:[#allocation8 + $0x28] sm:$0xff]
    %v505 = vld [vmem:[#allocation8 + $0x30] sm:$0xff]
    %v506 = vld [vmem:[#allocation8 + $0x38] sm:$0xff]
    %v507 = vld [vmem:[#allocation8 + $0x40] sm:$0xff]
    %v508 = vld [vmem:[#allocation8 + $0x48] sm:$0xff]
    %v509 = vld [vmem:[#allocation8 + $0x50] sm:$0xff]
    %v510 = vld [vmem:[#allocation8 + $0x58] sm:$0xff]
    %v511 = vld [vmem:[#allocation8 + $0x60] sm:$0xff]
    %v512 = vld [vmem:[#allocation8 + $0x68] sm:$0xff]
    %v513 = vld [vmem:[#allocation8 + $0x70] sm:$0xff]
    %v514 = vld [vmem:[#allocation8 + $0x78] sm:$0xff]
    %v515 = vld [vmem:[%s3] sm:$0x1]
    %v517 = vlaneseq
    %v518 = vshrl.u32 %v517, 7
    %v519 = vsub.s32 0, %v518
    %v520 = vrot.slane %v515, %v519
    %522 = vmatprep.subr.mxu0 0.0
    %523 = vmatpush1.msra.mxu0 %v499
    %524 = vmatprep.subr.mxu0 0.0
    %525 = vmatpush1.msra.mxu0 %v500
    %526 = vmatprep.subr.mxu0 0.0
    %527 = vmatpush1.msra.mxu0 %v501
    %528 = vmatprep.subr.mxu0 0.0
    %529 = vmatpush1.msra.mxu0 %v502
    %530 = vmatprep.subr.mxu0 0.0
    %531 = vmatpush1.msra.mxu0 %v503
    %532 = vmatprep.subr.mxu0 0.0
    %533 = vmatpush1.msra.mxu0 %v504
    %534 = vmatprep.subr.mxu0 0.0
    %535 = vmatpush1.msra.mxu0 %v505
    %536 = vmatprep.subr.mxu0 0.0
    %537 = vmatpush1.msra.mxu0 %v506
    %538 = vmatprep.subr.mxu0 0.0
    %539 = vmatpush1.msra.mxu0 %v507
    %540 = vmatprep.subr.mxu0 0.0
    %541 = vmatpush1.msra.mxu0 %v508
    %542 = vmatprep.subr.mxu0 0.0
    %543 = vmatpush1.msra.mxu0 %v509
    %544 = vmatprep.subr.mxu0 0.0
    %545 = vmatpush1.msra.mxu0 %v510
    %546 = vmatprep.subr.mxu0 0.0
    %547 = vmatpush1.msra.mxu0 %v511
    %548 = vmatprep.subr.mxu0 0.0
    %549 = vmatpush1.msra.mxu0 %v512
    %550 = vmatprep.subr.mxu0 0.0
    %551 = vmatpush1.msra.mxu0 %v513
    %552 = vmatprep.subr.mxu0 0.0
    %553 = vmatpush1.msra.mxu0 %v514
    %554 = vmatprep.subr.mxu0 0.0
    %555 = vmatpush1.msra.mxu0 0.0
    %556 = vmatprep.subr.mxu0 0.0
    %557 = vmatpush1.msra.mxu0 0.0
    %558 = vmatprep.subr.mxu0 0.0
    %559 = vmatpush1.msra.mxu0 0.0
    %560 = vmatprep.subr.mxu0 0.0
    %561 = vmatpush1.msra.mxu0 0.0
    %562 = vmatprep.subr.mxu0 0.0
    %563 = vmatpush1.msra.mxu0 0.0
    %564 = vmatprep.subr.mxu0 0.0
    %565 = vmatpush1.msra.mxu0 0.0
    %566 = vmatprep.subr.mxu0 0.0
    %567 = vmatpush1.msra.mxu0 0.0
    %568 = vmatprep.subr.mxu0 0.0
    %569 = vmatpush1.msra.mxu0 0.0
    %570 = vmatprep.subr.mxu0 0.0
    %571 = vmatpush1.msra.mxu0 0.0
    %572 = vmatprep.subr.mxu0 0.0
    %573 = vmatpush1.msra.mxu0 0.0
    %574 = vmatprep.subr.mxu0 0.0
    %575 = vmatpush1.msra.mxu0 0.0
    %576 = vmatprep.subr.mxu0 0.0
    %577 = vmatpush1.msra.mxu0 0.0
    %578 = vmatprep.subr.mxu0 0.0
    %579 = vmatpush1.msra.mxu0 0.0
    %580 = vmatprep.subr.mxu0 0.0
    %581 = vmatpush1.msra.mxu0 0.0
    %582 = vmatprep.subr.mxu0 0.0
    %583 = vmatpush1.msra.mxu0 0.0
    %584 = vmatprep.subr.mxu0 0.0
    %585 = vmatpush1.msra.mxu0 0.0
    %586 = vmatprep.mubr.f32.mxu0 0.0
    %587 = vmatmul.mubr.f32.gmra.mrb[0].mxu0 %v498
    %v588 = vpop.f32.mrb[0].mxu0
    %v589 = vadd.f32 %v520, %v588
    %v590 = vpop.f32.mrb[0].mxu0
    %591 = vdwg.mxu0
    %v592 = vtanh.pop %v589
    %v593 = vld [vmem:[#allocation9] sm:$0xff]
    %v594 = vld [vmem:[#allocation9 + $0x8] sm:$0xff]
    %v595 = vld [vmem:[#allocation9 + $0x10] sm:$0xff]
    %v596 = vld [vmem:[#allocation9 + $0x18] sm:$0xff]
    %v597 = vld [vmem:[#allocation9 + $0x20] sm:$0xff]
    %v598 = vld [vmem:[#allocation9 + $0x28] sm:$0xff]
    %v599 = vld [vmem:[#allocation9 + $0x30] sm:$0xff]
    %v600 = vld [vmem:[#allocation9 + $0x38] sm:$0xff]
    %v601 = vld [vmem:[#allocation9 + $0x40] sm:$0xff]
    %v602 = vld [vmem:[#allocation9 + $0x48] sm:$0xff]
    %v603 = vld [vmem:[#allocation9 + $0x50] sm:$0xff]
    %v604 = vld [vmem:[#allocation9 + $0x58] sm:$0xff]
    %v605 = vld [vmem:[#allocation9 + $0x60] sm:$0xff]
    %v606 = vld [vmem:[#allocation9 + $0x68] sm:$0xff]
    %v607 = vld [vmem:[#allocation9 + $0x70] sm:$0xff]
    %v608 = vld [vmem:[#allocation9 + $0x78] sm:$0xff]
    %v609 = vld [vmem:[%s5] sm:$0x1]
    %v611 = vlaneseq
    %v612 = vshrl.u32 %v611, 7
    %v613 = vsub.s32 0, %v612
    %v614 = vrot.slane %v609, %v613
    %616 = vmatprep.subr.mxu0 0.0
    %617 = vmatpush1.msra.mxu0 %v593
    %618 = vmatprep.subr.mxu0 0.0
    %619 = vmatpush1.msra.mxu0 %v594
    %620 = vmatprep.subr.mxu0 0.0
    %621 = vmatpush1.msra.mxu0 %v595
    %622 = vmatprep.subr.mxu0 0.0
    %623 = vmatpush1.msra.mxu0 %v596
    %624 = vmatprep.subr.mxu0 0.0
    %625 = vmatpush1.msra.mxu0 %v597
    %626 = vmatprep.subr.mxu0 0.0
    %627 = vmatpush1.msra.mxu0 %v598
    %628 = vmatprep.subr.mxu0 0.0
    %629 = vmatpush1.msra.mxu0 %v599
    %630 = vmatprep.subr.mxu0 0.0
    %631 = vmatpush1.msra.mxu0 %v600
    %632 = vmatprep.subr.mxu0 0.0
    %633 = vmatpush1.msra.mxu0 %v601
    %634 = vmatprep.subr.mxu0 0.0
    %635 = vmatpush1.msra.mxu0 %v602
    %636 = vmatprep.subr.mxu0 0.0
    %637 = vmatpush1.msra.mxu0 %v603
    %638 = vmatprep.subr.mxu0 0.0
    %639 = vmatpush1.msra.mxu0 %v604
    %640 = vmatprep.subr.mxu0 0.0
    %641 = vmatpush1.msra.mxu0 %v605
    %642 = vmatprep.subr.mxu0 0.0
    %643 = vmatpush1.msra.mxu0 %v606
    %644 = vmatprep.subr.mxu0 0.0
    %645 = vmatpush1.msra.mxu0 %v607
    %646 = vmatprep.subr.mxu0 0.0
    %647 = vmatpush1.msra.mxu0 %v608
    %648 = vmatprep.subr.mxu0 0.0
    %649 = vmatpush1.msra.mxu0 0.0
    %650 = vmatprep.subr.mxu0 0.0
    %651 = vmatpush1.msra.mxu0 0.0
    %652 = vmatprep.subr.mxu0 0.0
    %653 = vmatpush1.msra.mxu0 0.0
    %654 = vmatprep.subr.mxu0 0.0
    %655 = vmatpush1.msra.mxu0 0.0
    %656 = vmatprep.subr.mxu0 0.0
    %657 = vmatpush1.msra.mxu0 0.0
    %658 = vmatprep.subr.mxu0 0.0
    %659 = vmatpush1.msra.mxu0 0.0
    %660 = vmatprep.subr.mxu0 0.0
    %661 = vmatpush1.msra.mxu0 0.0
    %662 = vmatprep.subr.mxu0 0.0
    %663 = vmatpush1.msra.mxu0 0.0
    %664 = vmatprep.subr.mxu0 0.0
    %665 = vmatpush1.msra.mxu0 0.0
    %666 = vmatprep.subr.mxu0 0.0
    %667 = vmatpush1.msra.mxu0 0.0
    %668 = vmatprep.subr.mxu0 0.0
    %669 = vmatpush1.msra.mxu0 0.0
    %670 = vmatprep.subr.mxu0 0.0
    %671 = vmatpush1.msra.mxu0 0.0
    %672 = vmatprep.subr.mxu0 0.0
    %673 = vmatpush1.msra.mxu0 0.0
    %674 = vmatprep.subr.mxu0 0.0
    %675 = vmatpush1.msra.mxu0 0.0
    %676 = vmatprep.subr.mxu0 0.0
    %677 = vmatpush1.msra.mxu0 0.0
    %678 = vmatprep.subr.mxu0 0.0
    %679 = vmatpush1.msra.mxu0 0.0
    %680 = vmatprep.mubr.f32.mxu0 0.0
    %681 = vmatmul.mubr.f32.gmra.mrb[0].mxu0 %v592
    %v682 = vpop.f32.mrb[0].mxu0
    %v683 = vadd.f32 %v614, %v682
    %v684 = vpop.f32.mrb[0].mxu0
    %685 = vdwg.mxu0
    %686 = vmax.xlane.f32.xlu0 %v683
    %v687 = vpop.xlane.xlu0 %686
    %v688 = vsub.f32 %v683, %v687
    %v689 = vmul.f32 %v688, 1.442695
    %v690 = vpow.pop %v689
    %691 = vadd.xlane.f32.xlu0 %v690
    %v692 = vpop.xlane.xlu0 %691
    %v693 = vlog2.pop %v692
    %v694 = vmul.f32 %v693, 0.6931472
    %v695 = vsub.f32 %v688, %v694
    %s696 = scalar_lea.vmem [#allocation11], 16
    %697 = vst [vmem:[%s696] sm:$0xff] %v695
    %s698 = scalar_lea.vmem [#allocation12], 16
    %699 = vst [vmem:[%s698] sm:$0xff] %v592
    %700 = vst [vmem:[#allocation2] sm:$0xff] %v592
    %s701 = scalar_lea.vmem [#allocation3], 24
    %v702 = vld [vmem:[%s701] sm:$0xff]
    %v703 = vld [vmem:[#allocation2] sm:$0xff]
    %v704 = vadd.f32 %v702, %v703
    %v705 = vld [vmem:[#allocation8] sm:$0xff]
    %v706 = vld [vmem:[#allocation8 + $0x8] sm:$0xff]
    %v707 = vld [vmem:[#allocation8 + $0x10] sm:$0xff]
    %v708 = vld [vmem:[#allocation8 + $0x18] sm:$0xff]
    %v709 = vld [vmem:[#allocation8 + $0x20] sm:$0xff]
    %v710 = vld [vmem:[#allocation8 + $0x28] sm:$0xff]
    %v711 = vld [vmem:[#allocation8 + $0x30] sm:$0xff]
    %v712 = vld [vmem:[#allocation8 + $0x38] sm:$0xff]
    %v713 = vld [vmem:[#allocation8 + $0x40] sm:$0xff]
    %v714 = vld [vmem:[#allocation8 + $0x48] sm:$0xff]
    %v715 = vld [vmem:[#allocation8 + $0x50] sm:$0xff]
    %v716 = vld [vmem:[#allocation8 + $0x58] sm:$0xff]
    %v717 = vld [vmem:[#allocation8 + $0x60] sm:$0xff]
    %v718 = vld [vmem:[#allocation8 + $0x68] sm:$0xff]
    %v719 = vld [vmem:[#allocation8 + $0x70] sm:$0xff]
    %v720 = vld [vmem:[#allocation8 + $0x78] sm:$0xff]
    %v721 = vld [vmem:[%s3] sm:$0x1]
    %v723 = vlaneseq
    %v724 = vshrl.u32 %v723, 7
    %v725 = vsub.s32 0, %v724
    %v726 = vrot.slane %v721, %v725
    %728 = vmatprep.subr.mxu0 0.0
    %729 = vmatpush1.msra.mxu0 %v705
    %730 = vmatprep.subr.mxu0 0.0
    %731 = vmatpush1.msra.mxu0 %v706
    %732 = vmatprep.subr.mxu0 0.0
    %733 = vmatpush1.msra.mxu0 %v707
    %734 = vmatprep.subr.mxu0 0.0
    %735 = vmatpush1.msra.mxu0 %v708
    %736 = vmatprep.subr.mxu0 0.0
    %737 = vmatpush1.msra.mxu0 %v709
    %738 = vmatprep.subr.mxu0 0.0
    %739 = vmatpush1.msra.mxu0 %v710
    %740 = vmatprep.subr.mxu0 0.0
    %741 = vmatpush1.msra.mxu0 %v711
    %742 = vmatprep.subr.mxu0 0.0
    %743 = vmatpush1.msra.mxu0 %v712
    %744 = vmatprep.subr.mxu0 0.0
    %745 = vmatpush1.msra.mxu0 %v713
    %746 = vmatprep.subr.mxu0 0.0
    %747 = vmatpush1.msra.mxu0 %v714
    %748 = vmatprep.subr.mxu0 0.0
    %749 = vmatpush1.msra.mxu0 %v715
    %750 = vmatprep.subr.mxu0 0.0
    %751 = vmatpush1.msra.mxu0 %v716
    %752 = vmatprep.subr.mxu0 0.0
    %753 = vmatpush1.msra.mxu0 %v717
    %754 = vmatprep.subr.mxu0 0.0
    %755 = vmatpush1.msra.mxu0 %v718
    %756 = vmatprep.subr.mxu0 0.0
    %757 = vmatpush1.msra.mxu0 %v719
    %758 = vmatprep.subr.mxu0 0.0
    %759 = vmatpush1.msra.mxu0 %v720
    %760 = vmatprep.subr.mxu0 0.0
    %761 = vmatpush1.msra.mxu0 0.0
    %762 = vmatprep.subr.mxu0 0.0
    %763 = vmatpush1.msra.mxu0 0.0
    %764 = vmatprep.subr.mxu0 0.0
    %765 = vmatpush1.msra.mxu0 0.0
    %766 = vmatprep.subr.mxu0 0.0
    %767 = vmatpush1.msra.mxu0 0.0
    %768 = vmatprep.subr.mxu0 0.0
    %769 = vmatpush1.msra.mxu0 0.0
    %770 = vmatprep.subr.mxu0 0.0
    %771 = vmatpush1.msra.mxu0 0.0
    %772 = vmatprep.subr.mxu0 0.0
    %773 = vmatpush1.msra.mxu0 0.0
    %774 = vmatprep.subr.mxu0 0.0
    %775 = vmatpush1.msra.mxu0 0.0
    %776 = vmatprep.subr.mxu0 0.0
    %777 = vmatpush1.msra.mxu0 0.0
    %778 = vmatprep.subr.mxu0 0.0
    %779 = vmatpush1.msra.mxu0 0.0
    %780 = vmatprep.subr.mxu0 0.0
    %781 = vmatpush1.msra.mxu0 0.0
    %782 = vmatprep.subr.mxu0 0.0
    %783 = vmatpush1.msra.mxu0 0.0
    %784 = vmatprep.subr.mxu0 0.0
    %785 = vmatpush1.msra.mxu0 0.0
    %786 = vmatprep.subr.mxu0 0.0
    %787 = vmatpush1.msra.mxu0 0.0
    %788 = vmatprep.subr.mxu0 0.0
    %789 = vmatpush1.msra.mxu0 0.0
    %790 = vmatprep.subr.mxu0 0.0
    %791 = vmatpush1.msra.mxu0 0.0
    %792 = vmatprep.mubr.f32.mxu0 0.0
    %793 = vmatmul.mubr.f32.gmra.mrb[0].mxu0 %v704
    %v794 = vpop.f32.mrb[0].mxu0
    %v795 = vadd.f32 %v726, %v794
    %v796 = vpop.f32.mrb[0].mxu0
    %797 = vdwg.mxu0
    %v798 = vtanh.pop %v795
    %v799 = vld [vmem:[#allocation9] sm:$0xff]
    %v800 = vld [vmem:[#allocation9 + $0x8] sm:$0xff]
    %v801 = vld [vmem:[#allocation9 + $0x10] sm:$0xff]
    %v802 = vld [vmem:[#allocation9 + $0x18] sm:$0xff]
    %v803 = vld [vmem:[#allocation9 + $0x20] sm:$0xff]
    %v804 = vld [vmem:[#allocation9 + $0x28] sm:$0xff]
    %v805 = vld [vmem:[#allocation9 + $0x30] sm:$0xff]
    %v806 = vld [vmem:[#allocation9 + $0x38] sm:$0xff]
    %v807 = vld [vmem:[#allocation9 + $0x40] sm:$0xff]
    %v808 = vld [vmem:[#allocation9 + $0x48] sm:$0xff]
    %v809 = vld [vmem:[#allocation9 + $0x50] sm:$0xff]
    %v810 = vld [vmem:[#allocation9 + $0x58] sm:$0xff]
    %v811 = vld [vmem:[#allocation9 + $0x60] sm:$0xff]
    %v812 = vld [vmem:[#allocation9 + $0x68] sm:$0xff]
    %v813 = vld [vmem:[#allocation9 + $0x70] sm:$0xff]
    %v814 = vld [vmem:[#allocation9 + $0x78] sm:$0xff]
    %v815 = vld [vmem:[%s5] sm:$0x1]
    %v817 = vlaneseq
    %v818 = vshrl.u32 %v817, 7
    %v819 = vsub.s32 0, %v818
    %v820 = vrot.slane %v815, %v819
    %822 = vmatprep.subr.mxu0 0.0
    %823 = vmatpush1.msra.mxu0 %v799
    %824 = vmatprep.subr.mxu0 0.0
    %825 = vmatpush1.msra.mxu0 %v800
    %826 = vmatprep.subr.mxu0 0.0
    %827 = vmatpush1.msra.mxu0 %v801
    %828 = vmatprep.subr.mxu0 0.0
    %829 = vmatpush1.msra.mxu0 %v802
    %830 = vmatprep.subr.mxu0 0.0
    %831 = vmatpush1.msra.mxu0 %v803
    %832 = vmatprep.subr.mxu0 0.0
    %833 = vmatpush1.msra.mxu0 %v804
    %834 = vmatprep.subr.mxu0 0.0
    %835 = vmatpush1.msra.mxu0 %v805
    %836 = vmatprep.subr.mxu0 0.0
    %837 = vmatpush1.msra.mxu0 %v806
    %838 = vmatprep.subr.mxu0 0.0
    %839 = vmatpush1.msra.mxu0 %v807
    %840 = vmatprep.subr.mxu0 0.0
    %841 = vmatpush1.msra.mxu0 %v808
    %842 = vmatprep.subr.mxu0 0.0
    %843 = vmatpush1.msra.mxu0 %v809
    %844 = vmatprep.subr.mxu0 0.0
    %845 = vmatpush1.msra.mxu0 %v810
    %846 = vmatprep.subr.mxu0 0.0
    %847 = vmatpush1.msra.mxu0 %v811
    %848 = vmatprep.subr.mxu0 0.0
    %849 = vmatpush1.msra.mxu0 %v812
    %850 = vmatprep.subr.mxu0 0.0
    %851 = vmatpush1.msra.mxu0 %v813
    %852 = vmatprep.subr.mxu0 0.0
    %853 = vmatpush1.msra.mxu0 %v814
    %854 = vmatprep.subr.mxu0 0.0
    %855 = vmatpush1.msra.mxu0 0.0
    %856 = vmatprep.subr.mxu0 0.0
    %857 = vmatpush1.msra.mxu0 0.0
    %858 = vmatprep.subr.mxu0 0.0
    %859 = vmatpush1.msra.mxu0 0.0
    %860 = vmatprep.subr.mxu0 0.0
    %861 = vmatpush1.msra.mxu0 0.0
    %862 = vmatprep.subr.mxu0 0.0
    %863 = vmatpush1.msra.mxu0 0.0
    %864 = vmatprep.subr.mxu0 0.0
    %865 = vmatpush1.msra.mxu0 0.0
    %866 = vmatprep.subr.mxu0 0.0
    %867 = vmatpush1.msra.mxu0 0.0
    %868 = vmatprep.subr.mxu0 0.0
    %869 = vmatpush1.msra.mxu0 0.0
    %870 = vmatprep.subr.mxu0 0.0
    %871 = vmatpush1.msra.mxu0 0.0
    %872 = vmatprep.subr.mxu0 0.0
    %873 = vmatpush1.msra.mxu0 0.0
    %874 = vmatprep.subr.mxu0 0.0
    %875 = vmatpush1.msra.mxu0 0.0
    %876 = vmatprep.subr.mxu0 0.0
    %877 = vmatpush1.msra.mxu0 0.0
    %878 = vmatprep.subr.mxu0 0.0
    %879 = vmatpush1.msra.mxu0 0.0
    %880 = vmatprep.subr.mxu0 0.0
    %881 = vmatpush1.msra.mxu0 0.0
    %882 = vmatprep.subr.mxu0 0.0
    %883 = vmatpush1.msra.mxu0 0.0
    %884 = vmatprep.subr.mxu0 0.0
    %885 = vmatpush1.msra.mxu0 0.0
    %886 = vmatprep.mubr.f32.mxu0 0.0
    %887 = vmatmul.mubr.f32.gmra.mrb[0].mxu0 %v798
    %v888 = vpop.f32.mrb[0].mxu0
    %v889 = vadd.f32 %v820, %v888
    %v890 = vpop.f32.mrb[0].mxu0
    %891 = vdwg.mxu0
    %892 = vmax.xlane.f32.xlu0 %v889
    %v893 = vpop.xlane.xlu0 %892
    %v894 = vsub.f32 %v889, %v893
    %v895 = vmul.f32 %v894, 1.442695
    %v896 = vpow.pop %v895
    %897 = vadd.xlane.f32.xlu0 %v896
    %v898 = vpop.xlane.xlu0 %897
    %v899 = vlog2.pop %v898
    %v900 = vmul.f32 %v899, 0.6931472
    %v901 = vsub.f32 %v894, %v900
    %s902 = scalar_lea.vmem [#allocation11], 24
    %903 = vst [vmem:[%s902] sm:$0xff] %v901
    %s904 = scalar_lea.vmem [#allocation12], 24
    %905 = vst [vmem:[%s904] sm:$0xff] %v798
    %906 = vst [vmem:[#allocation2] sm:$0xff] %v798
    %s907 = scalar_lea.vmem [#allocation3], 32
    %v908 = vld [vmem:[%s907] sm:$0xff]
    %v909 = vld [vmem:[#allocation2] sm:$0xff]
    %v910 = vadd.f32 %v908, %v909
    %v911 = vld [vmem:[#allocation8] sm:$0xff]
    %v912 = vld [vmem:[#allocation8 + $0x8] sm:$0xff]
    %v913 = vld [vmem:[#allocation8 + $0x10] sm:$0xff]
    %v914 = vld [vmem:[#allocation8 + $0x18] sm:$0xff]
    %v915 = vld [vmem:[#allocation8 + $0x20] sm:$0xff]
    %v916 = vld [vmem:[#allocation8 + $0x28] sm:$0xff]
    %v917 = vld [vmem:[#allocation8 + $0x30] sm:$0xff]
    %v918 = vld [vmem:[#allocation8 + $0x38] sm:$0xff]
    %v919 = vld [vmem:[#allocation8 + $0x40] sm:$0xff]
    %v920 = vld [vmem:[#allocation8 + $0x48] sm:$0xff]
    %v921 = vld [vmem:[#allocation8 + $0x50] sm:$0xff]
    %v922 = vld [vmem:[#allocation8 + $0x58] sm:$0xff]
    %v923 = vld [vmem:[#allocation8 + $0x60] sm:$0xff]
    %v924 = vld [vmem:[#allocation8 + $0x68] sm:$0xff]
    %v925 = vld [vmem:[#allocation8 + $0x70] sm:$0xff]
    %v926 = vld [vmem:[#allocation8 + $0x78] sm:$0xff]
    %v927 = vld [vmem:[%s3] sm:$0x1]
    %v929 = vlaneseq
    %v930 = vshrl.u32 %v929, 7
    %v931 = vsub.s32 0, %v930
    %v932 = vrot.slane %v927, %v931
    %934 = vmatprep.subr.mxu0 0.0
    %935 = vmatpush1.msra.mxu0 %v911
    %936 = vmatprep.subr.mxu0 0.0
    %937 = vmatpush1.msra.mxu0 %v912
    %938 = vmatprep.subr.mxu0 0.0
    %939 = vmatpush1.msra.mxu0 %v913
    %940 = vmatprep.subr.mxu0 0.0
    %941 = vmatpush1.msra.mxu0 %v914
    %942 = vmatprep.subr.mxu0 0.0
    %943 = vmatpush1.msra.mxu0 %v915
    %944 = vmatprep.subr.mxu0 0.0
    %945 = vmatpush1.msra.mxu0 %v916
    %946 = vmatprep.subr.mxu0 0.0
    %947 = vmatpush1.msra.mxu0 %v917
    %948 = vmatprep.subr.mxu0 0.0
    %949 = vmatpush1.msra.mxu0 %v918
    %950 = vmatprep.subr.mxu0 0.0
    %951 = vmatpush1.msra.mxu0 %v919
    %952 = vmatprep.subr.mxu0 0.0
    %953 = vmatpush1.msra.mxu0 %v920
    %954 = vmatprep.subr.mxu0 0.0
    %955 = vmatpush1.msra.mxu0 %v921
    %956 = vmatprep.subr.mxu0 0.0
    %957 = vmatpush1.msra.mxu0 %v922
    %958 = vmatprep.subr.mxu0 0.0
    %959 = vmatpush1.msra.mxu0 %v923
    %960 = vmatprep.subr.mxu0 0.0
    %961 = vmatpush1.msra.mxu0 %v924
    %962 = vmatprep.subr.mxu0 0.0
    %963 = vmatpush1.msra.mxu0 %v925
    %964 = vmatprep.subr.mxu0 0.0
    %965 = vmatpush1.msra.mxu0 %v926
    %966 = vmatprep.subr.mxu0 0.0
    %967 = vmatpush1.msra.mxu0 0.0
    %968 = vmatprep.subr.mxu0 0.0
    %969 = vmatpush1.msra.mxu0 0.0
    %970 = vmatprep.subr.mxu0 0.0
    %971 = vmatpush1.msra.mxu0 0.0
    %972 = vmatprep.subr.mxu0 0.0
    %973 = vmatpush1.msra.mxu0 0.0
    %974 = vmatprep.subr.mxu0 0.0
    %975 = vmatpush1.msra.mxu0 0.0
    %976 = vmatprep.subr.mxu0 0.0
    %977 = vmatpush1.msra.mxu0 0.0
    %978 = vmatprep.subr.mxu0 0.0
    %979 = vmatpush1.msra.mxu0 0.0
    %980 = vmatprep.subr.mxu0 0.0
    %981 = vmatpush1.msra.mxu0 0.0
    %982 = vmatprep.subr.mxu0 0.0
    %983 = vmatpush1.msra.mxu0 0.0
    %984 = vmatprep.subr.mxu0 0.0
    %985 = vmatpush1.msra.mxu0 0.0
    %986 = vmatprep.subr.mxu0 0.0
    %987 = vmatpush1.msra.mxu0 0.0
    %988 = vmatprep.subr.mxu0 0.0
    %989 = vmatpush1.msra.mxu0 0.0
    %990 = vmatprep.subr.mxu0 0.0
    %991 = vmatpush1.msra.mxu0 0.0
    %992 = vmatprep.subr.mxu0 0.0
    %993 = vmatpush1.msra.mxu0 0.0
    %994 = vmatprep.subr.mxu0 0.0
    %995 = vmatpush1.msra.mxu0 0.0
    %996 = vmatprep.subr.mxu0 0.0
    %997 = vmatpush1.msra.mxu0 0.0
    %998 = vmatprep.mubr.f32.mxu0 0.0
    %999 = vmatmul.mubr.f32.gmra.mrb[0].mxu0 %v910
    %v1000 = vpop.f32.mrb[0].mxu0
    %v1001 = vadd.f32 %v932, %v1000
    %v1002 = vpop.f32.mrb[0].mxu0
    %1003 = vdwg.mxu0
    %v1004 = vtanh.pop %v1001
    %v1005 = vld [vmem:[#allocation9] sm:$0xff]
    %v1006 = vld [vmem:[#allocation9 + $0x8] sm:$0xff]
    %v1007 = vld [vmem:[#allocation9 + $0x10] sm:$0xff]
    %v1008 = vld [vmem:[#allocation9 + $0x18] sm:$0xff]
    %v1009 = vld [vmem:[#allocation9 + $0x20] sm:$0xff]
    %v1010 = vld [vmem:[#allocation9 + $0x28] sm:$0xff]
    %v1011 = vld [vmem:[#allocation9 + $0x30] sm:$0xff]
    %v1012 = vld [vmem:[#allocation9 + $0x38] sm:$0xff]
    %v1013 = vld [vmem:[#allocation9 + $0x40] sm:$0xff]
    %v1014 = vld [vmem:[#allocation9 + $0x48] sm:$0xff]
    %v1015 = vld [vmem:[#allocation9 + $0x50] sm:$0xff]
    %v1016 = vld [vmem:[#allocation9 + $0x58] sm:$0xff]
    %v1017 = vld [vmem:[#allocation9 + $0x60] sm:$0xff]
    %v1018 = vld [vmem:[#allocation9 + $0x68] sm:$0xff]
    %v1019 = vld [vmem:[#allocation9 + $0x70] sm:$0xff]
    %v1020 = vld [vmem:[#allocation9 + $0x78] sm:$0xff]
    %v1021 = vld [vmem:[%s5] sm:$0x1]
    %v1023 = vlaneseq
    %v1024 = vshrl.u32 %v1023, 7
    %v1025 = vsub.s32 0, %v1024
    %v1026 = vrot.slane %v1021, %v1025
    %1028 = vmatprep.subr.mxu0 0.0
    %1029 = vmatpush1.msra.mxu0 %v1005
    %1030 = vmatprep.subr.mxu0 0.0
    %1031 = vmatpush1.msra.mxu0 %v1006
    %1032 = vmatprep.subr.mxu0 0.0
    %1033 = vmatpush1.msra.mxu0 %v1007
    %1034 = vmatprep.subr.mxu0 0.0
    %1035 = vmatpush1.msra.mxu0 %v1008
    %1036 = vmatprep.subr.mxu0 0.0
    %1037 = vmatpush1.msra.mxu0 %v1009
    %1038 = vmatprep.subr.mxu0 0.0
    %1039 = vmatpush1.msra.mxu0 %v1010
    %1040 = vmatprep.subr.mxu0 0.0
    %1041 = vmatpush1.msra.mxu0 %v1011
    %1042 = vmatprep.subr.mxu0 0.0
    %1043 = vmatpush1.msra.mxu0 %v1012
    %1044 = vmatprep.subr.mxu0 0.0
    %1045 = vmatpush1.msra.mxu0 %v1013
    %1046 = vmatprep.subr.mxu0 0.0
    %1047 = vmatpush1.msra.mxu0 %v1014
    %1048 = vmatprep.subr.mxu0 0.0
    %1049 = vmatpush1.msra.mxu0 %v1015
    %1050 = vmatprep.subr.mxu0 0.0
    %1051 = vmatpush1.msra.mxu0 %v1016
    %1052 = vmatprep.subr.mxu0 0.0
    %1053 = vmatpush1.msra.mxu0 %v1017
    %1054 = vmatprep.subr.mxu0 0.0
    %1055 = vmatpush1.msra.mxu0 %v1018
    %1056 = vmatprep.subr.mxu0 0.0
    %1057 = vmatpush1.msra.mxu0 %v1019
    %1058 = vmatprep.subr.mxu0 0.0
    %1059 = vmatpush1.msra.mxu0 %v1020
    %1060 = vmatprep.subr.mxu0 0.0
    %1061 = vmatpush1.msra.mxu0 0.0
    %1062 = vmatprep.subr.mxu0 0.0
    %1063 = vmatpush1.msra.mxu0 0.0
    %1064 = vmatprep.subr.mxu0 0.0
    %1065 = vmatpush1.msra.mxu0 0.0
    %1066 = vmatprep.subr.mxu0 0.0
    %1067 = vmatpush1.msra.mxu0 0.0
    %1068 = vmatprep.subr.mxu0 0.0
    %1069 = vmatpush1.msra.mxu0 0.0
    %1070 = vmatprep.subr.mxu0 0.0
    %1071 = vmatpush1.msra.mxu0 0.0
    %1072 = vmatprep.subr.mxu0 0.0
    %1073 = vmatpush1.msra.mxu0 0.0
    %1074 = vmatprep.subr.mxu0 0.0
    %1075 = vmatpush1.msra.mxu0 0.0
    %1076 = vmatprep.subr.mxu0 0.0
    %1077 = vmatpush1.msra.mxu0 0.0
    %1078 = vmatprep.subr.mxu0 0.0
    %1079 = vmatpush1.msra.mxu0 0.0
    %1080 = vmatprep.subr.mxu0 0.0
    %1081 = vmatpush1.msra.mxu0 0.0
    %1082 = vmatprep.subr.mxu0 0.0
    %1083 = vmatpush1.msra.mxu0 0.0
    %1084 = vmatprep.subr.mxu0 0.0
    %1085 = vmatpush1.msra.mxu0 0.0
    %1086 = vmatprep.subr.mxu0 0.0
    %1087 = vmatpush1.msra.mxu0 0.0
    %1088 = vmatprep.subr.mxu0 0.0
    %1089 = vmatpush1.msra.mxu0 0.0
    %1090 = vmatprep.subr.mxu0 0.0
    %1091 = vmatpush1.msra.mxu0 0.0
    %1092 = vmatprep.mubr.f32.mxu0 0.0
    %1093 = vmatmul.mubr.f32.gmra.mrb[0].mxu0 %v1004
    %v1094 = vpop.f32.mrb[0].mxu0
    %v1095 = vadd.f32 %v1026, %v1094
    %v1096 = vpop.f32.mrb[0].mxu0
    %1097 = vdwg.mxu0
    %1098 = vmax.xlane.f32.xlu0 %v1095
    %v1099 = vpop.xlane.xlu0 %1098
    %v1100 = vsub.f32 %v1095, %v1099
    %v1101 = vmul.f32 %v1100, 1.442695
    %v1102 = vpow.pop %v1101
    %1103 = vadd.xlane.f32.xlu0 %v1102
    %v1104 = vpop.xlane.xlu0 %1103
    %v1105 = vlog2.pop %v1104
    %v1106 = vmul.f32 %v1105, 0.6931472
    %v1107 = vsub.f32 %v1100, %v1106
    %s1108 = scalar_lea.vmem [#allocation11], 32
    %1109 = vst [vmem:[%s1108] sm:$0xff] %v1107
    %s1110 = scalar_lea.vmem [#allocation12], 32
    %1111 = vst [vmem:[%s1110] sm:$0xff] %v1004
    %1112 = vst [vmem:[#allocation2] sm:$0xff] %v1004
    %s1113 = scalar_lea.vmem [#allocation3], 40
    %v1114 = vld [vmem:[%s1113] sm:$0xff]
    %v1115 = vld [vmem:[#allocation2] sm:$0xff]
    %v1116 = vadd.f32 %v1114, %v1115
    %v1117 = vld [vmem:[#allocation8] sm:$0xff]
    %v1118 = vld [vmem:[#allocation8 + $0x8] sm:$0xff]
    %v1119 = vld [vmem:[#allocation8 + $0x10] sm:$0xff]
    %v1120 = vld [vmem:[#allocation8 + $0x18] sm:$0xff]
    %v1121 = vld [vmem:[#allocation8 + $0x20] sm:$0xff]
    %v1122 = vld [vmem:[#allocation8 + $0x28] sm:$0xff]
    %v1123 = vld [vmem:[#allocation8 + $0x30] sm:$0xff]
    %v1124 = vld [vmem:[#allocation8 + $0x38] sm:$0xff]
    %v1125 = vld [vmem:[#allocation8 + $0x40] sm:$0xff]
    %v1126 = vld [vmem:[#allocation8 + $0x48] sm:$0xff]
    %v1127 = vld [vmem:[#allocation8 + $0x50] sm:$0xff]
    %v1128 = vld [vmem:[#allocation8 + $0x58] sm:$0xff]
    %v1129 = vld [vmem:[#allocation8 + $0x60] sm:$0xff]
    %v1130 = vld [vmem:[#allocation8 + $0x68] sm:$0xff]
    %v1131 = vld [vmem:[#allocation8 + $0x70] sm:$0xff]
    %v1132 = vld [vmem:[#allocation8 + $0x78] sm:$0xff]
    %v1133 = vld [vmem:[%s3] sm:$0x1]
    %v1135 = vlaneseq
    %v1136 = vshrl.u32 %v1135, 7
    %v1137 = vsub.s32 0, %v1136
    %v1138 = vrot.slane %v1133, %v1137
    %1140 = vmatprep.subr.mxu0 0.0
    %1141 = vmatpush1.msra.mxu0 %v1117
    %1142 = vmatprep.subr.mxu0 0.0
    %1143 = vmatpush1.msra.mxu0 %v1118
    %1144 = vmatprep.subr.mxu0 0.0
    %1145 = vmatpush1.msra.mxu0 %v1119
    %1146 = vmatprep.subr.mxu0 0.0
    %1147 = vmatpush1.msra.mxu0 %v1120
    %1148 = vmatprep.subr.mxu0 0.0
    %1149 = vmatpush1.msra.mxu0 %v1121
    %1150 = vmatprep.subr.mxu0 0.0
    %1151 = vmatpush1.msra.mxu0 %v1122
    %1152 = vmatprep.subr.mxu0 0.0
    %1153 = vmatpush1.msra.mxu0 %v1123
    %1154 = vmatprep.subr.mxu0 0.0
    %1155 = vmatpush1.msra.mxu0 %v1124
    %1156 = vmatprep.subr.mxu0 0.0
    %1157 = vmatpush1.msra.mxu0 %v1125
    %1158 = vmatprep.subr.mxu0 0.0
    %1159 = vmatpush1.msra.mxu0 %v1126
    %1160 = vmatprep.subr.mxu0 0.0
    %1161 = vmatpush1.msra.mxu0 %v1127
    %1162 = vmatprep.subr.mxu0 0.0
    %1163 = vmatpush1.msra.mxu0 %v1128
    %1164 = vmatprep.subr.mxu0 0.0
    %1165 = vmatpush1.msra.mxu0 %v1129
    %1166 = vmatprep.subr.mxu0 0.0
    %1167 = vmatpush1.msra.mxu0 %v1130
    %1168 = vmatprep.subr.mxu0 0.0
    %1169 = vmatpush1.msra.mxu0 %v1131
    %1170 = vmatprep.subr.mxu0 0.0
    %1171 = vmatpush1.msra.mxu0 %v1132
    %1172 = vmatprep.subr.mxu0 0.0
    %1173 = vmatpush1.msra.mxu0 0.0
    %1174 = vmatprep.subr.mxu0 0.0
    %1175 = vmatpush1.msra.mxu0 0.0
    %1176 = vmatprep.subr.mxu0 0.0
    %1177 = vmatpush1.msra.mxu0 0.0
    %1178 = vmatprep.subr.mxu0 0.0
    %1179 = vmatpush1.msra.mxu0 0.0
    %1180 = vmatprep.subr.mxu0 0.0
    %1181 = vmatpush1.msra.mxu0 0.0
    %1182 = vmatprep.subr.mxu0 0.0
    %1183 = vmatpush1.msra.mxu0 0.0
    %1184 = vmatprep.subr.mxu0 0.0
    %1185 = vmatpush1.msra.mxu0 0.0
    %1186 = vmatprep.subr.mxu0 0.0
    %1187 = vmatpush1.msra.mxu0 0.0
    %1188 = vmatprep.subr.mxu0 0.0
    %1189 = vmatpush1.msra.mxu0 0.0
    %1190 = vmatprep.subr.mxu0 0.0
    %1191 = vmatpush1.msra.mxu0 0.0
    %1192 = vmatprep.subr.mxu0 0.0
    %1193 = vmatpush1.msra.mxu0 0.0
    %1194 = vmatprep.subr.mxu0 0.0
    %1195 = vmatpush1.msra.mxu0 0.0
    %1196 = vmatprep.subr.mxu0 0.0
    %1197 = vmatpush1.msra.mxu0 0.0
    %1198 = vmatprep.subr.mxu0 0.0
    %1199 = vmatpush1.msra.mxu0 0.0
    %1200 = vmatprep.subr.mxu0 0.0
    %1201 = vmatpush1.msra.mxu0 0.0
    %1202 = vmatprep.subr.mxu0 0.0
    %1203 = vmatpush1.msra.mxu0 0.0
    %1204 = vmatprep.mubr.f32.mxu0 0.0
    %1205 = vmatmul.mubr.f32.gmra.mrb[0].mxu0 %v1116
    %v1206 = vpop.f32.mrb[0].mxu0
    %v1207 = vadd.f32 %v1138, %v1206
    %v1208 = vpop.f32.mrb[0].mxu0
    %1209 = vdwg.mxu0
    %v1210 = vtanh.pop %v1207
    %v1211 = vld [vmem:[#allocation9] sm:$0xff]
    %v1212 = vld [vmem:[#allocation9 + $0x8] sm:$0xff]
    %v1213 = vld [vmem:[#allocation9 + $0x10] sm:$0xff]
    %v1214 = vld [vmem:[#allocation9 + $0x18] sm:$0xff]
    %v1215 = vld [vmem:[#allocation9 + $0x20] sm:$0xff]
    %v1216 = vld [vmem:[#allocation9 + $0x28] sm:$0xff]
    %v1217 = vld [vmem:[#allocation9 + $0x30] sm:$0xff]
    %v1218 = vld [vmem:[#allocation9 + $0x38] sm:$0xff]
    %v1219 = vld [vmem:[#allocation9 + $0x40] sm:$0xff]
    %v1220 = vld [vmem:[#allocation9 + $0x48] sm:$0xff]
    %v1221 = vld [vmem:[#allocation9 + $0x50] sm:$0xff]
    %v1222 = vld [vmem:[#allocation9 + $0x58] sm:$0xff]
    %v1223 = vld [vmem:[#allocation9 + $0x60] sm:$0xff]
    %v1224 = vld [vmem:[#allocation9 + $0x68] sm:$0xff]
    %v1225 = vld [vmem:[#allocation9 + $0x70] sm:$0xff]
    %v1226 = vld [vmem:[#allocation9 + $0x78] sm:$0xff]
    %v1227 = vld [vmem:[%s5] sm:$0x1]
    %v1229 = vlaneseq
    %v1230 = vshrl.u32 %v1229, 7
    %v1231 = vsub.s32 0, %v1230
    %v1232 = vrot.slane %v1227, %v1231
    %1234 = vmatprep.subr.mxu0 0.0
    %1235 = vmatpush1.msra.mxu0 %v1211
    %1236 = vmatprep.subr.mxu0 0.0
    %1237 = vmatpush1.msra.mxu0 %v1212
    %1238 = vmatprep.subr.mxu0 0.0
    %1239 = vmatpush1.msra.mxu0 %v1213
    %1240 = vmatprep.subr.mxu0 0.0
    %1241 = vmatpush1.msra.mxu0 %v1214
    %1242 = vmatprep.subr.mxu0 0.0
    %1243 = vmatpush1.msra.mxu0 %v1215
    %1244 = vmatprep.subr.mxu0 0.0
    %1245 = vmatpush1.msra.mxu0 %v1216
    %1246 = vmatprep.subr.mxu0 0.0
    %1247 = vmatpush1.msra.mxu0 %v1217
    %1248 = vmatprep.subr.mxu0 0.0
    %1249 = vmatpush1.msra.mxu0 %v1218
    %1250 = vmatprep.subr.mxu0 0.0
    %1251 = vmatpush1.msra.mxu0 %v1219
    %1252 = vmatprep.subr.mxu0 0.0
    %1253 = vmatpush1.msra.mxu0 %v1220
    %1254 = vmatprep.subr.mxu0 0.0
    %1255 = vmatpush1.msra.mxu0 %v1221
    %1256 = vmatprep.subr.mxu0 0.0
    %1257 = vmatpush1.msra.mxu0 %v1222
    %1258 = vmatprep.subr.mxu0 0.0
    %1259 = vmatpush1.msra.mxu0 %v1223
    %1260 = vmatprep.subr.mxu0 0.0
    %1261 = vmatpush1.msra.mxu0 %v1224
    %1262 = vmatprep.subr.mxu0 0.0
    %1263 = vmatpush1.msra.mxu0 %v1225
    %1264 = vmatprep.subr.mxu0 0.0
    %1265 = vmatpush1.msra.mxu0 %v1226
    %1266 = vmatprep.subr.mxu0 0.0
    %1267 = vmatpush1.msra.mxu0 0.0
    %1268 = vmatprep.subr.mxu0 0.0
    %1269 = vmatpush1.msra.mxu0 0.0
    %1270 = vmatprep.subr.mxu0 0.0
    %1271 = vmatpush1.msra.mxu0 0.0
    %1272 = vmatprep.subr.mxu0 0.0
    %1273 = vmatpush1.msra.mxu0 0.0
    %1274 = vmatprep.subr.mxu0 0.0
    %1275 = vmatpush1.msra.mxu0 0.0
    %1276 = vmatprep.subr.mxu0 0.0
    %1277 = vmatpush1.msra.mxu0 0.0
    %1278 = vmatprep.subr.mxu0 0.0
    %1279 = vmatpush1.msra.mxu0 0.0
    %1280 = vmatprep.subr.mxu0 0.0
    %1281 = vmatpush1.msra.mxu0 0.0
    %1282 = vmatprep.subr.mxu0 0.0
    %1283 = vmatpush1.msra.mxu0 0.0
    %1284 = vmatprep.subr.mxu0 0.0
    %1285 = vmatpush1.msra.mxu0 0.0
    %1286 = vmatprep.subr.mxu0 0.0
    %1287 = vmatpush1.msra.mxu0 0.0
    %1288 = vmatprep.subr.mxu0 0.0
    %1289 = vmatpush1.msra.mxu0 0.0
    %1290 = vmatprep.subr.mxu0 0.0
    %1291 = vmatpush1.msra.mxu0 0.0
    %1292 = vmatprep.subr.mxu0 0.0
    %1293 = vmatpush1.msra.mxu0 0.0
    %1294 = vmatprep.subr.mxu0 0.0
    %1295 = vmatpush1.msra.mxu0 0.0
    %1296 = vmatprep.subr.mxu0 0.0
    %1297 = vmatpush1.msra.mxu0 0.0
    %1298 = vmatprep.mubr.f32.mxu0 0.0
    %1299 = vmatmul.mubr.f32.gmra.mrb[0].mxu0 %v1210
    %v1300 = vpop.f32.mrb[0].mxu0
    %v1301 = vadd.f32 %v1232, %v1300
    %v1302 = vpop.f32.mrb[0].mxu0
    %1303 = vdwg.mxu0
    %1304 = vmax.xlane.f32.xlu0 %v1301
    %v1305 = vpop.xlane.xlu0 %1304
    %v1306 = vsub.f32 %v1301, %v1305
    %v1307 = vmul.f32 %v1306, 1.442695
    %v1308 = vpow.pop %v1307
    %1309 = vadd.xlane.f32.xlu0 %v1308
    %v1310 = vpop.xlane.xlu0 %1309
    %v1311 = vlog2.pop %v1310
    %v1312 = vmul.f32 %v1311, 0.6931472
    %v1313 = vsub.f32 %v1306, %v1312
    %s1314 = scalar_lea.vmem [#allocation11], 40
    %1315 = vst [vmem:[%s1314] sm:$0xff] %v1313
    %s1316 = scalar_lea.vmem [#allocation12], 40
    %1317 = vst [vmem:[%s1316] sm:$0xff] %v1210
    %1318 = vst [vmem:[#allocation2] sm:$0xff] %v1210
    %s1319 = scalar_lea.vmem [#allocation3], 48
    %v1320 = vld [vmem:[%s1319] sm:$0xff]
    %v1321 = vld [vmem:[#allocation2] sm:$0xff]
    %v1322 = vadd.f32 %v1320, %v1321
    %v1323 = vld [vmem:[#allocation8] sm:$0xff]
    %v1324 = vld [vmem:[#allocation8 + $0x8] sm:$0xff]
    %v1325 = vld [vmem:[#allocation8 + $0x10] sm:$0xff]
    %v1326 = vld [vmem:[#allocation8 + $0x18] sm:$0xff]
    %v1327 = vld [vmem:[#allocation8 + $0x20] sm:$0xff]
    %v1328 = vld [vmem:[#allocation8 + $0x28] sm:$0xff]
    %v1329 = vld [vmem:[#allocation8 + $0x30] sm:$0xff]
    %v1330 = vld [vmem:[#allocation8 + $0x38] sm:$0xff]
    %v1331 = vld [vmem:[#allocation8 + $0x40] sm:$0xff]
    %v1332 = vld [vmem:[#allocation8 + $0x48] sm:$0xff]
    %v1333 = vld [vmem:[#allocation8 + $0x50] sm:$0xff]
    %v1334 = vld [vmem:[#allocation8 + $0x58] sm:$0xff]
    %v1335 = vld [vmem:[#allocation8 + $0x60] sm:$0xff]
    %v1336 = vld [vmem:[#allocation8 + $0x68] sm:$0xff]
    %v1337 = vld [vmem:[#allocation8 + $0x70] sm:$0xff]
    %v1338 = vld [vmem:[#allocation8 + $0x78] sm:$0xff]
    %v1339 = vld [vmem:[%s3] sm:$0x1]
    %v1341 = vlaneseq
    %v1342 = vshrl.u32 %v1341, 7
    %v1343 = vsub.s32 0, %v1342
    %v1344 = vrot.slane %v1339, %v1343
    %1346 = vmatprep.subr.mxu0 0.0
    %1347 = vmatpush1.msra.mxu0 %v1323
    %1348 = vmatprep.subr.mxu0 0.0
    %1349 = vmatpush1.msra.mxu0 %v1324
    %1350 = vmatprep.subr.mxu0 0.0
    %1351 = vmatpush1.msra.mxu0 %v1325
    %1352 = vmatprep.subr.mxu0 0.0
    %1353 = vmatpush1.msra.mxu0 %v1326
    %1354 = vmatprep.subr.mxu0 0.0
    %1355 = vmatpush1.msra.mxu0 %v1327
    %1356 = vmatprep.subr.mxu0 0.0
    %1357 = vmatpush1.msra.mxu0 %v1328
    %1358 = vmatprep.subr.mxu0 0.0
    %1359 = vmatpush1.msra.mxu0 %v1329
    %1360 = vmatprep.subr.mxu0 0.0
    %1361 = vmatpush1.msra.mxu0 %v1330
    %1362 = vmatprep.subr.mxu0 0.0
    %1363 = vmatpush1.msra.mxu0 %v1331
    %1364 = vmatprep.subr.mxu0 0.0
    %1365 = vmatpush1.msra.mxu0 %v1332
    %1366 = vmatprep.subr.mxu0 0.0
    %1367 = vmatpush1.msra.mxu0 %v1333
    %1368 = vmatprep.subr.mxu0 0.0
    %1369 = vmatpush1.msra.mxu0 %v1334
    %1370 = vmatprep.subr.mxu0 0.0
    %1371 = vmatpush1.msra.mxu0 %v1335
    %1372 = vmatprep.subr.mxu0 0.0
    %1373 = vmatpush1.msra.mxu0 %v1336
    %1374 = vmatprep.subr.mxu0 0.0
    %1375 = vmatpush1.msra.mxu0 %v1337
    %1376 = vmatprep.subr.mxu0 0.0
    %1377 = vmatpush1.msra.mxu0 %v1338
    %1378 = vmatprep.subr.mxu0 0.0
    %1379 = vmatpush1.msra.mxu0 0.0
    %1380 = vmatprep.subr.mxu0 0.0
    %1381 = vmatpush1.msra.mxu0 0.0
    %1382 = vmatprep.subr.mxu0 0.0
    %1383 = vmatpush1.msra.mxu0 0.0
    %1384 = vmatprep.subr.mxu0 0.0
    %1385 = vmatpush1.msra.mxu0 0.0
    %1386 = vmatprep.subr.mxu0 0.0
    %1387 = vmatpush1.msra.mxu0 0.0
    %1388 = vmatprep.subr.mxu0 0.0
    %1389 = vmatpush1.msra.mxu0 0.0
    %1390 = vmatprep.subr.mxu0 0.0
    %1391 = vmatpush1.msra.mxu0 0.0
    %1392 = vmatprep.subr.mxu0 0.0
    %1393 = vmatpush1.msra.mxu0 0.0
    %1394 = vmatprep.subr.mxu0 0.0
    %1395 = vmatpush1.msra.mxu0 0.0
    %1396 = vmatprep.subr.mxu0 0.0
    %1397 = vmatpush1.msra.mxu0 0.0
    %1398 = vmatprep.subr.mxu0 0.0
    %1399 = vmatpush1.msra.mxu0 0.0
    %1400 = vmatprep.subr.mxu0 0.0
    %1401 = vmatpush1.msra.mxu0 0.0
    %1402 = vmatprep.subr.mxu0 0.0
    %1403 = vmatpush1.msra.mxu0 0.0
    %1404 = vmatprep.subr.mxu0 0.0
    %1405 = vmatpush1.msra.mxu0 0.0
    %1406 = vmatprep.subr.mxu0 0.0
    %1407 = vmatpush1.msra.mxu0 0.0
    %1408 = vmatprep.subr.mxu0 0.0
    %1409 = vmatpush1.msra.mxu0 0.0
    %1410 = vmatprep.mubr.f32.mxu0 0.0
    %1411 = vmatmul.mubr.f32.gmra.mrb[0].mxu0 %v1322
    %v1412 = vpop.f32.mrb[0].mxu0
    %v1413 = vadd.f32 %v1344, %v1412
    %v1414 = vpop.f32.mrb[0].mxu0
    %1415 = vdwg.mxu0
    %v1416 = vtanh.pop %v1413
    %v1417 = vld [vmem:[#allocation9] sm:$0xff]
    %v1418 = vld [vmem:[#allocation9 + $0x8] sm:$0xff]
    %v1419 = vld [vmem:[#allocation9 + $0x10] sm:$0xff]
    %v1420 = vld [vmem:[#allocation9 + $0x18] sm:$0xff]
    %v1421 = vld [vmem:[#allocation9 + $0x20] sm:$0xff]
    %v1422 = vld [vmem:[#allocation9 + $0x28] sm:$0xff]
    %v1423 = vld [vmem:[#allocation9 + $0x30] sm:$0xff]
    %v1424 = vld [vmem:[#allocation9 + $0x38] sm:$0xff]
    %v1425 = vld [vmem:[#allocation9 + $0x40] sm:$0xff]
    %v1426 = vld [vmem:[#allocation9 + $0x48] sm:$0xff]
    %v1427 = vld [vmem:[#allocation9 + $0x50] sm:$0xff]
    %v1428 = vld [vmem:[#allocation9 + $0x58] sm:$0xff]
    %v1429 = vld [vmem:[#allocation9 + $0x60] sm:$0xff]
    %v1430 = vld [vmem:[#allocation9 + $0x68] sm:$0xff]
    %v1431 = vld [vmem:[#allocation9 + $0x70] sm:$0xff]
    %v1432 = vld [vmem:[#allocation9 + $0x78] sm:$0xff]
    %v1433 = vld [vmem:[%s5] sm:$0x1]
    %v1435 = vlaneseq
    %v1436 = vshrl.u32 %v1435, 7
    %v1437 = vsub.s32 0, %v1436
    %v1438 = vrot.slane %v1433, %v1437
    %1440 = vmatprep.subr.mxu0 0.0
    %1441 = vmatpush1.msra.mxu0 %v1417
    %1442 = vmatprep.subr.mxu0 0.0
    %1443 = vmatpush1.msra.mxu0 %v1418
    %1444 = vmatprep.subr.mxu0 0.0
    %1445 = vmatpush1.msra.mxu0 %v1419
    %1446 = vmatprep.subr.mxu0 0.0
    %1447 = vmatpush1.msra.mxu0 %v1420
    %1448 = vmatprep.subr.mxu0 0.0
    %1449 = vmatpush1.msra.mxu0 %v1421
    %1450 = vmatprep.subr.mxu0 0.0
    %1451 = vmatpush1.msra.mxu0 %v1422
    %1452 = vmatprep.subr.mxu0 0.0
    %1453 = vmatpush1.msra.mxu0 %v1423
    %1454 = vmatprep.subr.mxu0 0.0
    %1455 = vmatpush1.msra.mxu0 %v1424
    %1456 = vmatprep.subr.mxu0 0.0
    %1457 = vmatpush1.msra.mxu0 %v1425
    %1458 = vmatprep.subr.mxu0 0.0
    %1459 = vmatpush1.msra.mxu0 %v1426
    %1460 = vmatprep.subr.mxu0 0.0
    %1461 = vmatpush1.msra.mxu0 %v1427
    %1462 = vmatprep.subr.mxu0 0.0
    %1463 = vmatpush1.msra.mxu0 %v1428
    %1464 = vmatprep.subr.mxu0 0.0
    %1465 = vmatpush1.msra.mxu0 %v1429
    %1466 = vmatprep.subr.mxu0 0.0
    %1467 = vmatpush1.msra.mxu0 %v1430
    %1468 = vmatprep.subr.mxu0 0.0
    %1469 = vmatpush1.msra.mxu0 %v1431
    %1470 = vmatprep.subr.mxu0 0.0
    %1471 = vmatpush1.msra.mxu0 %v1432
    %1472 = vmatprep.subr.mxu0 0.0
    %1473 = vmatpush1.msra.mxu0 0.0
    %1474 = vmatprep.subr.mxu0 0.0
    %1475 = vmatpush1.msra.mxu0 0.0
    %1476 = vmatprep.subr.mxu0 0.0
    %1477 = vmatpush1.msra.mxu0 0.0
    %1478 = vmatprep.subr.mxu0 0.0
    %1479 = vmatpush1.msra.mxu0 0.0
    %1480 = vmatprep.subr.mxu0 0.0
    %1481 = vmatpush1.msra.mxu0 0.0
    %1482 = vmatprep.subr.mxu0 0.0
    %1483 = vmatpush1.msra.mxu0 0.0
    %1484 = vmatprep.subr.mxu0 0.0
    %1485 = vmatpush1.msra.mxu0 0.0
    %1486 = vmatprep.subr.mxu0 0.0
    %1487 = vmatpush1.msra.mxu0 0.0
    %1488 = vmatprep.subr.mxu0 0.0
    %1489 = vmatpush1.msra.mxu0 0.0
    %1490 = vmatprep.subr.mxu0 0.0
    %1491 = vmatpush1.msra.mxu0 0.0
    %1492 = vmatprep.subr.mxu0 0.0
    %1493 = vmatpush1.msra.mxu0 0.0
    %1494 = vmatprep.subr.mxu0 0.0
    %1495 = vmatpush1.msra.mxu0 0.0
    %1496 = vmatprep.subr.mxu0 0.0
    %1497 = vmatpush1.msra.mxu0 0.0
    %1498 = vmatprep.subr.mxu0 0.0
    %1499 = vmatpush1.msra.mxu0 0.0
    %1500 = vmatprep.subr.mxu0 0.0
    %1501 = vmatpush1.msra.mxu0 0.0
    %1502 = vmatprep.subr.mxu0 0.0
    %1503 = vmatpush1.msra.mxu0 0.0
    %1504 = vmatprep.mubr.f32.mxu0 0.0
    %1505 = vmatmul.mubr.f32.gmra.mrb[0].mxu0 %v1416
    %v1506 = vpop.f32.mrb[0].mxu0
    %v1507 = vadd.f32 %v1438, %v1506
    %v1508 = vpop.f32.mrb[0].mxu0
    %1509 = vdwg.mxu0
    %1510 = vmax.xlane.f32.xlu0 %v1507
    %v1511 = vpop.xlane.xlu0 %1510
    %v1512 = vsub.f32 %v1507, %v1511
    %v1513 = vmul.f32 %v1512, 1.442695
    %v1514 = vpow.pop %v1513
    %1515 = vadd.xlane.f32.xlu0 %v1514
    %v1516 = vpop.xlane.xlu0 %1515
    %v1517 = vlog2.pop %v1516
    %v1518 = vmul.f32 %v1517, 0.6931472
    %v1519 = vsub.f32 %v1512, %v1518
    %s1520 = scalar_lea.vmem [#allocation11], 48
    %1521 = vst [vmem:[%s1520] sm:$0xff] %v1519
    %s1522 = scalar_lea.vmem [#allocation12], 48
    %1523 = vst [vmem:[%s1522] sm:$0xff] %v1416
    %1524 = vst [vmem:[#allocation2] sm:$0xff] %v1416
    %s1525 = scalar_lea.vmem [#allocation3], 56
    %v1526 = vld [vmem:[%s1525] sm:$0xff]
    %v1527 = vld [vmem:[#allocation2] sm:$0xff]
    %v1528 = vadd.f32 %v1526, %v1527
    %v1529 = vld [vmem:[#allocation8] sm:$0xff]
    %v1530 = vld [vmem:[#allocation8 + $0x8] sm:$0xff]
    %v1531 = vld [vmem:[#allocation8 + $0x10] sm:$0xff]
    %v1532 = vld [vmem:[#allocation8 + $0x18] sm:$0xff]
    %v1533 = vld [vmem:[#allocation8 + $0x20] sm:$0xff]
    %v1534 = vld [vmem:[#allocation8 + $0x28] sm:$0xff]
    %v1535 = vld [vmem:[#allocation8 + $0x30] sm:$0xff]
    %v1536 = vld [vmem:[#allocation8 + $0x38] sm:$0xff]
    %v1537 = vld [vmem:[#allocation8 + $0x40] sm:$0xff]
    %v1538 = vld [vmem:[#allocation8 + $0x48] sm:$0xff]
    %v1539 = vld [vmem:[#allocation8 + $0x50] sm:$0xff]
    %v1540 = vld [vmem:[#allocation8 + $0x58] sm:$0xff]
    %v1541 = vld [vmem:[#allocation8 + $0x60] sm:$0xff]
    %v1542 = vld [vmem:[#allocation8 + $0x68] sm:$0xff]
    %v1543 = vld [vmem:[#allocation8 + $0x70] sm:$0xff]
    %v1544 = vld [vmem:[#allocation8 + $0x78] sm:$0xff]
    %v1545 = vld [vmem:[%s3] sm:$0x1]
    %v1547 = vlaneseq
    %v1548 = vshrl.u32 %v1547, 7
    %v1549 = vsub.s32 0, %v1548
    %v1550 = vrot.slane %v1545, %v1549
    %1552 = vmatprep.subr.mxu0 0.0
    %1553 = vmatpush1.msra.mxu0 %v1529
    %1554 = vmatprep.subr.mxu0 0.0
    %1555 = vmatpush1.msra.mxu0 %v1530
    %1556 = vmatprep.subr.mxu0 0.0
    %1557 = vmatpush1.msra.mxu0 %v1531
    %1558 = vmatprep.subr.mxu0 0.0
    %1559 = vmatpush1.msra.mxu0 %v1532
    %1560 = vmatprep.subr.mxu0 0.0
    %1561 = vmatpush1.msra.mxu0 %v1533
    %1562 = vmatprep.subr.mxu0 0.0
    %1563 = vmatpush1.msra.mxu0 %v1534
    %1564 = vmatprep.subr.mxu0 0.0
    %1565 = vmatpush1.msra.mxu0 %v1535
    %1566 = vmatprep.subr.mxu0 0.0
    %1567 = vmatpush1.msra.mxu0 %v1536
    %1568 = vmatprep.subr.mxu0 0.0
    %1569 = vmatpush1.msra.mxu0 %v1537
    %1570 = vmatprep.subr.mxu0 0.0
    %1571 = vmatpush1.msra.mxu0 %v1538
    %1572 = vmatprep.subr.mxu0 0.0
    %1573 = vmatpush1.msra.mxu0 %v1539
    %1574 = vmatprep.subr.mxu0 0.0
    %1575 = vmatpush1.msra.mxu0 %v1540
    %1576 = vmatprep.subr.mxu0 0.0
    %1577 = vmatpush1.msra.mxu0 %v1541
    %1578 = vmatprep.subr.mxu0 0.0
    %1579 = vmatpush1.msra.mxu0 %v1542
    %1580 = vmatprep.subr.mxu0 0.0
    %1581 = vmatpush1.msra.mxu0 %v1543
    %1582 = vmatprep.subr.mxu0 0.0
    %1583 = vmatpush1.msra.mxu0 %v1544
    %1584 = vmatprep.subr.mxu0 0.0
    %1585 = vmatpush1.msra.mxu0 0.0
    %1586 = vmatprep.subr.mxu0 0.0
    %1587 = vmatpush1.msra.mxu0 0.0
    %1588 = vmatprep.subr.mxu0 0.0
    %1589 = vmatpush1.msra.mxu0 0.0
    %1590 = vmatprep.subr.mxu0 0.0
    %1591 = vmatpush1.msra.mxu0 0.0
    %1592 = vmatprep.subr.mxu0 0.0
    %1593 = vmatpush1.msra.mxu0 0.0
    %1594 = vmatprep.subr.mxu0 0.0
    %1595 = vmatpush1.msra.mxu0 0.0
    %1596 = vmatprep.subr.mxu0 0.0
    %1597 = vmatpush1.msra.mxu0 0.0
    %1598 = vmatprep.subr.mxu0 0.0
    %1599 = vmatpush1.msra.mxu0 0.0
    %1600 = vmatprep.subr.mxu0 0.0
    %1601 = vmatpush1.msra.mxu0 0.0
    %1602 = vmatprep.subr.mxu0 0.0
    %1603 = vmatpush1.msra.mxu0 0.0
    %1604 = vmatprep.subr.mxu0 0.0
    %1605 = vmatpush1.msra.mxu0 0.0
    %1606 = vmatprep.subr.mxu0 0.0
    %1607 = vmatpush1.msra.mxu0 0.0
    %1608 = vmatprep.subr.mxu0 0.0
    %1609 = vmatpush1.msra.mxu0 0.0
    %1610 = vmatprep.subr.mxu0 0.0
    %1611 = vmatpush1.msra.mxu0 0.0
    %1612 = vmatprep.subr.mxu0 0.0
    %1613 = vmatpush1.msra.mxu0 0.0
    %1614 = vmatprep.subr.mxu0 0.0
    %1615 = vmatpush1.msra.mxu0 0.0
    %1616 = vmatprep.mubr.f32.mxu0 0.0
    %1617 = vmatmul.mubr.f32.gmra.mrb[0].mxu0 %v1528
    %v1618 = vpop.f32.mrb[0].mxu0
    %v1619 = vadd.f32 %v1550, %v1618
    %v1620 = vpop.f32.mrb[0].mxu0
    %1621 = vdwg.mxu0
    %v1622 = vtanh.pop %v1619
    %v1623 = vld [vmem:[#allocation9] sm:$0xff]
    %v1624 = vld [vmem:[#allocation9 + $0x8] sm:$0xff]
    %v1625 = vld [vmem:[#allocation9 + $0x10] sm:$0xff]
    %v1626 = vld [vmem:[#allocation9 + $0x18] sm:$0xff]
    %v1627 = vld [vmem:[#allocation9 + $0x20] sm:$0xff]
    %v1628 = vld [vmem:[#allocation9 + $0x28] sm:$0xff]
    %v1629 = vld [vmem:[#allocation9 + $0x30] sm:$0xff]
    %v1630 = vld [vmem:[#allocation9 + $0x38] sm:$0xff]
    %v1631 = vld [vmem:[#allocation9 + $0x40] sm:$0xff]
    %v1632 = vld [vmem:[#allocation9 + $0x48] sm:$0xff]
    %v1633 = vld [vmem:[#allocation9 + $0x50] sm:$0xff]
    %v1634 = vld [vmem:[#allocation9 + $0x58] sm:$0xff]
    %v1635 = vld [vmem:[#allocation9 + $0x60] sm:$0xff]
    %v1636 = vld [vmem:[#allocation9 + $0x68] sm:$0xff]
    %v1637 = vld [vmem:[#allocation9 + $0x70] sm:$0xff]
    %v1638 = vld [vmem:[#allocation9 + $0x78] sm:$0xff]
    %v1639 = vld [vmem:[%s5] sm:$0x1]
    %v1641 = vlaneseq
    %v1642 = vshrl.u32 %v1641, 7
    %v1643 = vsub.s32 0, %v1642
    %v1644 = vrot.slane %v1639, %v1643
    %1646 = vmatprep.subr.mxu0 0.0
    %1647 = vmatpush1.msra.mxu0 %v1623
    %1648 = vmatprep.subr.mxu0 0.0
    %1649 = vmatpush1.msra.mxu0 %v1624
    %1650 = vmatprep.subr.mxu0 0.0
    %1651 = vmatpush1.msra.mxu0 %v1625
    %1652 = vmatprep.subr.mxu0 0.0
    %1653 = vmatpush1.msra.mxu0 %v1626
    %1654 = vmatprep.subr.mxu0 0.0
    %1655 = vmatpush1.msra.mxu0 %v1627
    %1656 = vmatprep.subr.mxu0 0.0
    %1657 = vmatpush1.msra.mxu0 %v1628
    %1658 = vmatprep.subr.mxu0 0.0
    %1659 = vmatpush1.msra.mxu0 %v1629
    %1660 = vmatprep.subr.mxu0 0.0
    %1661 = vmatpush1.msra.mxu0 %v1630
    %1662 = vmatprep.subr.mxu0 0.0
    %1663 = vmatpush1.msra.mxu0 %v1631
    %1664 = vmatprep.subr.mxu0 0.0
    %1665 = vmatpush1.msra.mxu0 %v1632
    %1666 = vmatprep.subr.mxu0 0.0
    %1667 = vmatpush1.msra.mxu0 %v1633
    %1668 = vmatprep.subr.mxu0 0.0
    %1669 = vmatpush1.msra.mxu0 %v1634
    %1670 = vmatprep.subr.mxu0 0.0
    %1671 = vmatpush1.msra.mxu0 %v1635
    %1672 = vmatprep.subr.mxu0 0.0
    %1673 = vmatpush1.msra.mxu0 %v1636
    %1674 = vmatprep.subr.mxu0 0.0
    %1675 = vmatpush1.msra.mxu0 %v1637
    %1676 = vmatprep.subr.mxu0 0.0
    %1677 = vmatpush1.msra.mxu0 %v1638
    %1678 = vmatprep.subr.mxu0 0.0
    %1679 = vmatpush1.msra.mxu0 0.0
    %1680 = vmatprep.subr.mxu0 0.0
    %1681 = vmatpush1.msra.mxu0 0.0
    %1682 = vmatprep.subr.mxu0 0.0
    %1683 = vmatpush1.msra.mxu0 0.0
    %1684 = vmatprep.subr.mxu0 0.0
    %1685 = vmatpush1.msra.mxu0 0.0
    %1686 = vmatprep.subr.mxu0 0.0
    %1687 = vmatpush1.msra.mxu0 0.0
    %1688 = vmatprep.subr.mxu0 0.0
    %1689 = vmatpush1.msra.mxu0 0.0
    %1690 = vmatprep.subr.mxu0 0.0
    %1691 = vmatpush1.msra.mxu0 0.0
    %1692 = vmatprep.subr.mxu0 0.0
    %1693 = vmatpush1.msra.mxu0 0.0
    %1694 = vmatprep.subr.mxu0 0.0
    %1695 = vmatpush1.msra.mxu0 0.0
    %1696 = vmatprep.subr.mxu0 0.0
    %1697 = vmatpush1.msra.mxu0 0.0
    %1698 = vmatprep.subr.mxu0 0.0
    %1699 = vmatpush1.msra.mxu0 0.0
    %1700 = vmatprep.subr.mxu0 0.0
    %1701 = vmatpush1.msra.mxu0 0.0
    %1702 = vmatprep.subr.mxu0 0.0
    %1703 = vmatpush1.msra.mxu0 0.0
    %1704 = vmatprep.subr.mxu0 0.0
    %1705 = vmatpush1.msra.mxu0 0.0
    %1706 = vmatprep.subr.mxu0 0.0
    %1707 = vmatpush1.msra.mxu0 0.0
    %1708 = vmatprep.subr.mxu0 0.0
    %1709 = vmatpush1.msra.mxu0 0.0
    %1710 = vmatprep.mubr.f32.mxu0 0.0
    %1711 = vmatmul.mubr.f32.gmra.mrb[0].mxu0 %v1622
    %v1712 = vpop.f32.mrb[0].mxu0
    %v1713 = vadd.f32 %v1644, %v1712
    %v1714 = vpop.f32.mrb[0].mxu0
    %1715 = vdwg.mxu0
    %1716 = vmax.xlane.f32.xlu0 %v1713
    %v1717 = vpop.xlane.xlu0 %1716
    %v1718 = vsub.f32 %v1713, %v1717
    %v1719 = vmul.f32 %v1718, 1.442695
    %v1720 = vpow.pop %v1719
    %1721 = vadd.xlane.f32.xlu0 %v1720
    %v1722 = vpop.xlane.xlu0 %1721
    %v1723 = vlog2.pop %v1722
    %v1724 = vmul.f32 %v1723, 0.6931472
    %v1725 = vsub.f32 %v1718, %v1724
    %s1726 = scalar_lea.vmem [#allocation11], 56
    %1727 = vst [vmem:[%s1726] sm:$0xff] %v1725
    %s1728 = scalar_lea.vmem [#allocation12], 56
    %1729 = vst [vmem:[%s1728] sm:$0xff] %v1622
    %1730 = vst [vmem:[#allocation2] sm:$0xff] %v1622
    // Predicated region
    $region46: #{tpu_custom_call.1} parent=1 // pred_check
      _
    $region47: #{tpu_custom_call.1} parent=1 // pred_check_branch
      %1732 = sbr.rel (0) target = $region49
    $region48: #{tpu_custom_call.1} parent=1 // pred_region
      %s1734 = ssub.s32 1024, 1024
      %1735 = vsyncadd [#allocation5], %s1734
      %s1736 = sshll.u32 [#allocation11], 4
      %s1737 = int_to_ptr.vmem [resolvable:$true] %s1736
      %1742 = dma.vmem_to_hbm [thread:$0]  %s1737, 1024, %s6, [#allocation5], 128, 128, 8
    $region49: #{tpu_custom_call.1} parent=1 // pred_fallthru
      _
    // Predicated region
    $region50: #{tpu_custom_call.1} parent=1 // pred_check
      _
    $region51: #{tpu_custom_call.1} parent=1 // pred_check_branch
      %1744 = sbr.rel (0) target = $region53
    $region52: #{tpu_custom_call.1} parent=1 // pred_region
      %s1746 = ssub.s32 1024, 1024
      %1747 = vsyncadd [#allocation13], %s1746
      %s1748 = sshll.u32 [#allocation12], 4
      %s1749 = int_to_ptr.vmem [resolvable:$true] %s1748
      %1754 = dma.vmem_to_hbm [thread:$0]  %s1749, 1024, %s7, [#allocation13], 128, 128, 8
    $region53: #{tpu_custom_call.1} parent=1 // pred_fallthru
      _
    // Predicated region
    $region54: #{tpu_custom_call.1} parent=1 // pred_check
      _
    $region55: #{tpu_custom_call.1} parent=1 // pred_check_branch
      %1756 = sbr.rel (0) target = $region57
    $region56: #{tpu_custom_call.1} parent=1 // pred_region
      %1757 = dma.done [#allocation5], 1024
    $region57: #{tpu_custom_call.1} parent=1 // pred_fallthru
      _
    // Predicated region
    $region58: #{tpu_custom_call.1} parent=1 // pred_check
      _
    $region59: #{tpu_custom_call.1} parent=1 // pred_check_branch
      %1759 = sbr.rel (0) target = $region61
    $region60: #{tpu_custom_call.1} parent=1 // pred_region
      %1760 = dma.done [#allocation13], 1024
    $region61: #{tpu_custom_call.1} parent=1 // pred_fallthru
      _
    %1761 = vsyncpa [#allocation4], 1
    %1762 = vsyncpa [#allocation7], 1
    %1763 = vsyncpa [#allocation10], 1
    %1764 = vsyncpa [#allocation5], 1
    %1765 = vsyncpa [#allocation13], 1

// kernel: tpu_custom_call.1
$region0: #{tpu_custom_call.1}
  #allocation0 [shape = 'u32[]', space=smem, size = 0x4, offset = 0x4, fixed_abs, tag = 'smem constant byte address 0x4 - core index']
  #allocation1 [shape = 'u32[144,128]{1,0:T(1,128)}', space=vmem, size = 0x12000, scoped, tag = 'internal scratch']
  #allocation2 [shape = 'f32[8,128]{1,0:T(8,128)}', space=vmem, size = 0x1000, scoped, tag = 'scratch operand']
  %s0 = inlined_call_operand.hbm [shape: f32[8,8,128], index: 0, kind: input, shape index: {}]
  %s1 = inlined_call_operand.hbm [shape: f32[8,128], index: 1, kind: input, shape index: {}]
  %s2 = inlined_call_operand.hbm [shape: f32[128,128], index: 2, kind: input, shape index: {}]
  %s3 = inlined_call_operand.vmem [shape: f32[1,128], index: 3, kind: input, shape index: {}]
  %s4 = inlined_call_operand.hbm [shape: f32[128,128], index: 4, kind: input, shape index: {}]
  %s5 = inlined_call_operand.vmem [shape: f32[1,128], index: 5, kind: input, shape index: {}]
  %s6 = inlined_call_operand.hbm [shape: f32[8,8,128], index: 6, kind: output, shape index: {0}]
  %s7 = inlined_call_operand.hbm [shape: f32[8,8,128], index: 7, kind: output, shape index: {1}]
  %8 = xla_tuple %s6, %s7
  %s9 = sld [smem:[#allocation0]]
  $region62: #{tpu_custom_call.1} parent=0
    _
  %s11 = ssub.s32 1, %s9
  %s12 = scalar_select 0, %s11, %s9
  $region1: #{tpu_custom_call.1} parent=0
    #allocation3 [shape = 'u8[32768]{0}', space=vmem, size = 0x8000, scoped, tag = 'input window, operand 0, single buffered']
    #allocation4 [shape = 's32[1]{0}', space=sflag, size = 0x4, scoped, tag = 'scoped memory for tpu_custom_call.1']
    #allocation5 [shape = 's32[1]{0}', space=sflag, size = 0x4, scoped, tag = 'scoped memory for tpu_custom_call.1']
    #allocation6 [shape = 'u8[4096]{0}', space=vmem, size = 0x1000, scoped, tag = 'input window, operand 1, single buffered']
    #allocation7 [shape = 's32[1]{0}', space=sflag, size = 0x4, scoped, tag = 'scoped memory for tpu_custom_call.1']
    #allocation8 [shape = 'u8[65536]{0}', space=vmem, size = 0x10000, scoped, tag = 'input window, operand 2, single buffered']
    #allocation9 [shape = 'u8[65536]{0}', space=vmem, size = 0x10000, scoped, tag = 'input window, operand 4, single buffered']
    #allocation10 [shape = 's32[1]{0}', space=sflag, size = 0x4, scoped, tag = 'scoped memory for tpu_custom_call.1']
    #allocation11 [shape = 'u8[32768]{0}', space=vmem, size = 0x8000, scoped, tag = 'output window, operand 0, single buffered']
    #allocation12 [shape = 'u8[32768]{0}', space=vmem, size = 0x8000, scoped, tag = 'output window, operand 1, single buffered']
    #allocation13 [shape = 's32[1]{0}', space=sflag, size = 0x4, scoped, tag = 'scoped memory for tpu_custom_call.1']
    %13 = vsyncpa [#allocation4], 0
    %14 = vsyncpa [#allocation7], 0
    %15 = vsyncpa [#allocation10], 0
    %16 = vsyncpa [#allocation5], 0
    %17 = vsyncpa [#allocation13], 0
    // Predicated region
    $region2: #{tpu_custom_call.1} parent=1 // pred_check
      _
    $region3: #{tpu_custom_call.1} parent=1 // pred_check_branch
      %19 = sbr.rel (0) target = $region5
    $region4: #{tpu_custom_call.1} parent=1 // pred_region
      %s21 = ssub.s32 1024, 1024
      %22 = vsyncadd [#allocation4], %s21
      %s23 = sshll.u32 [#allocation3], 4
      %s24 = int_to_ptr.vmem [resolvable:$true] %s23
      %29 = dma.hbm_to_vmem [thread:$0]  %s0, 1024, %s24, [#allocation4], 128, 128, 8
    $region5: #{tpu_custom_call.1} parent=1 // pred_fallthru
      _
    // Predicated region
    $region6: #{tpu_custom_call.1} parent=1 // pred_check
      _
    $region7: #{tpu_custom_call.1} parent=1 // pred_check_branch
      %31 = sbr.rel (0) target = $region9
    $region8: #{tpu_custom_call.1} parent=1 // pred_region
      %s33 = ssub.s32 128, 128
      %34 = vsyncadd [#allocation7], %s33
      %s36 = sshll.u32 [#allocation6], 4
      %s37 = int_to_ptr.vmem [resolvable:$true] %s36
      %39 = dma.hbm_to_vmem [thread:$0]  %s1, 128, %s37, [#allocation7]
    $region9: #{tpu_custom_call.1} parent=1 // pred_fallthru
      _
    // Predicated region
    $region10: #{tpu_custom_call.1} parent=1 // pred_check
      _
    $region11: #{tpu_custom_call.1} parent=1 // pred_check_branch
      %41 = sbr.rel (0) target = $region13
    $region12: #{tpu_custom_call.1} parent=1 // pred_region
      %s43 = ssub.s32 2048, 2048
      %44 = vsyncadd [#allocation7], %s43
      %s45 = sshll.u32 [#allocation8], 4
      %s46 = int_to_ptr.vmem [resolvable:$true] %s45
      %51 = dma.hbm_to_vmem [thread:$0]  %s2, 2048, %s46, [#allocation7], 128, 128, 8
    $region13: #{tpu_custom_call.1} parent=1 // pred_fallthru
      _
    // Predicated region
    $region14: #{tpu_custom_call.1} parent=1 // pred_check
      _
    $region15: #{tpu_custom_call.1} parent=1 // pred_check_branch
      %53 = sbr.rel (0) target = $region17
    $region16: #{tpu_custom_call.1} parent=1 // pred_region
      _
    $region17: #{tpu_custom_call.1} parent=1 // pred_fallthru
      _
    // Predicated region
    $region18: #{tpu_custom_call.1} parent=1 // pred_check
      _
    $region19: #{tpu_custom_call.1} parent=1 // pred_check_branch
      %55 = sbr.rel (0) target = $region21
    $region20: #{tpu_custom_call.1} parent=1 // pred_region
      %s57 = ssub.s32 2048, 2048
      %58 = vsyncadd [#allocation10], %s57
      %s59 = sshll.u32 [#allocation9], 4
      %s60 = int_to_ptr.vmem [resolvable:$true] %s59
      %65 = dma.hbm_to_vmem [thread:$0]  %s4, 2048, %s60, [#allocation10], 128, 128, 8
    $region21: #{tpu_custom_call.1} parent=1 // pred_fallthru
      _
    // Predicated region
    $region22: #{tpu_custom_call.1} parent=1 // pred_check
      _
    $region23: #{tpu_custom_call.1} parent=1 // pred_check_branch
      %67 = sbr.rel (0) target = $region25
    $region24: #{tpu_custom_call.1} parent=1 // pred_region
      _
    $region25: #{tpu_custom_call.1} parent=1 // pred_fallthru
      _
    // Predicated region
    $region26: #{tpu_custom_call.1} parent=1 // pred_check
      _
    $region27: #{tpu_custom_call.1} parent=1 // pred_check_branch
      %69 = sbr.rel (0) target = $region29
    $region28: #{tpu_custom_call.1} parent=1 // pred_region
      %70 = dma.done [#allocation4], 1024
    $region29: #{tpu_custom_call.1} parent=1 // pred_fallthru
      _
    // Predicated region
    $region30: #{tpu_custom_call.1} parent=1 // pred_check
      _
    $region31: #{tpu_custom_call.1} parent=1 // pred_check_branch
      %72 = sbr.rel (0) target = $region33
    $region32: #{tpu_custom_call.1} parent=1 // pred_region
      %73 = dma.done [#allocation7], 128
    $region33: #{tpu_custom_call.1} parent=1 // pred_fallthru
      _
    // Predicated region
    $region34: #{tpu_custom_call.1} parent=1 // pred_check
      _
    $region35: #{tpu_custom_call.1} parent=1 // pred_check_branch
      %75 = sbr.rel (0) target = $region37
    $region36: #{tpu_custom_call.1} parent=1 // pred_region
      %76 = dma.done [#allocation7], 2048
    $region37: #{tpu_custom_call.1} parent=1 // pred_fallthru
      _
    // Predicated region
    $region38: #{tpu_custom_call.1} parent=1 // pred_check
      _
    $region39: #{tpu_custom_call.1} parent=1 // pred_check_branch
      %78 = sbr.rel (0) target = $region41
    $region40: #{tpu_custom_call.1} parent=1 // pred_region
      %79 = dma.done [#allocation10], 2048
    $region41: #{tpu_custom_call.1} parent=1 // pred_fallthru
      _
    %p80 = scmp.eq.s32.totalorder 0, 0
    // Predicated region
    $region42: #{tpu_custom_call.1} parent=1 // pred_check
      %p81 = pneg %p80
    $region43: #{tpu_custom_call.1} parent=1 // pred_check_branch
      %83 = sbr.rel (%p81) target = $region45
    $region44: #{tpu_custom_call.1} parent=1 // pred_region
      %v84 = vld [vmem:[#allocation6] sm:$0xff]
      %85 = vst [vmem:[#allocation2] sm:$0xff] %v84
    $region45: #{tpu_custom_call.1} parent=1 // pred_fallthru
      _
    %v86 = vld [vmem:[#allocation3] sm:$0xff]
    %v87 = vld [vmem:[#allocation2] sm:$0xff]
    %v88 = vadd.f32 %v86, %v87
    %v89 = vld [vmem:[#allocation8] sm:$0xff]
    %v90 = vld [vmem:[#allocation8 + $0x8] sm:$0xff]
    %v91 = vld [vmem:[#allocation8 + $0x10] sm:$0xff]
    %v92 = vld [vmem:[#allocation8 + $0x18] sm:$0xff]
    %v93 = vld [vmem:[#allocation8 + $0x20] sm:$0xff]
    %v94 = vld [vmem:[#allocation8 + $0x28] sm:$0xff]
    %v95 = vld [vmem:[#allocation8 + $0x30] sm:$0xff]
    %v96 = vld [vmem:[#allocation8 + $0x38] sm:$0xff]
    %v97 = vld [vmem:[#allocation8 + $0x40] sm:$0xff]
    %v98 = vld [vmem:[#allocation8 + $0x48] sm:$0xff]
    %v99 = vld [vmem:[#allocation8 + $0x50] sm:$0xff]
    %v100 = vld [vmem:[#allocation8 + $0x58] sm:$0xff]
    %v101 = vld [vmem:[#allocation8 + $0x60] sm:$0xff]
    %v102 = vld [vmem:[#allocation8 + $0x68] sm:$0xff]
    %v103 = vld [vmem:[#allocation8 + $0x70] sm:$0xff]
    %v104 = vld [vmem:[#allocation8 + $0x78] sm:$0xff]
    %v105 = vld [vmem:[%s3] sm:$0x1]
    %v107 = vlaneseq
    %v108 = vshrl.u32 %v107, 7
    %v109 = vsub.s32 0, %v108
    %v110 = vrot.slane %v105, %v109
    %112 = vmatprep.subr.mxu0 0.0
    %113 = vmatpush1.msra.mxu0 %v89
    %114 = vmatprep.subr.mxu0 0.0
    %115 = vmatpush1.msra.mxu0 %v90
    %116 = vmatprep.subr.mxu0 0.0
    %117 = vmatpush1.msra.mxu0 %v91
    %118 = vmatprep.subr.mxu0 0.0
    %119 = vmatpush1.msra.mxu0 %v92
    %120 = vmatprep.subr.mxu0 0.0
    %121 = vmatpush1.msra.mxu0 %v93
    %122 = vmatprep.subr.mxu0 0.0
    %123 = vmatpush1.msra.mxu0 %v94
    %124 = vmatprep.subr.mxu0 0.0
    %125 = vmatpush1.msra.mxu0 %v95
    %126 = vmatprep.subr.mxu0 0.0
    %127 = vmatpush1.msra.mxu0 %v96
    %128 = vmatprep.subr.mxu0 0.0
    %129 = vmatpush1.msra.mxu0 %v97
    %130 = vmatprep.subr.mxu0 0.0
    %131 = vmatpush1.msra.mxu0 %v98
    %132 = vmatprep.subr.mxu0 0.0
    %133 = vmatpush1.msra.mxu0 %v99
    %134 = vmatprep.subr.mxu0 0.0
    %135 = vmatpush1.msra.mxu0 %v100
    %136 = vmatprep.subr.mxu0 0.0
    %137 = vmatpush1.msra.mxu0 %v101
    %138 = vmatprep.subr.mxu0 0.0
    %139 = vmatpush1.msra.mxu0 %v102
    %140 = vmatprep.subr.mxu0 0.0
    %141 = vmatpush1.msra.mxu0 %v103
    %142 = vmatprep.subr.mxu0 0.0
    %143 = vmatpush1.msra.mxu0 %v104
    %144 = vmatprep.subr.mxu0 0.0
    %145 = vmatpush1.msra.mxu0 0.0
    %146 = vmatprep.subr.mxu0 0.0
    %147 = vmatpush1.msra.mxu0 0.0
    %148 = vmatprep.subr.mxu0 0.0
    %149 = vmatpush1.msra.mxu0 0.0
    %150 = vmatprep.subr.mxu0 0.0
    %151 = vmatpush1.msra.mxu0 0.0
    %152 = vmatprep.subr.mxu0 0.0
    %153 = vmatpush1.msra.mxu0 0.0
    %154 = vmatprep.subr.mxu0 0.0
    %155 = vmatpush1.msra.mxu0 0.0
    %156 = vmatprep.subr.mxu0 0.0
    %157 = vmatpush1.msra.mxu0 0.0
    %158 = vmatprep.subr.mxu0 0.0
    %159 = vmatpush1.msra.mxu0 0.0
    %160 = vmatprep.subr.mxu0 0.0
    %161 = vmatpush1.msra.mxu0 0.0
    %162 = vmatprep.subr.mxu0 0.0
    %163 = vmatpush1.msra.mxu0 0.0
    %164 = vmatprep.subr.mxu0 0.0
    %165 = vmatpush1.msra.mxu0 0.0
    %166 = vmatprep.subr.mxu0 0.0
    %167 = vmatpush1.msra.mxu0 0.0
    %168 = vmatprep.subr.mxu0 0.0
    %169 = vmatpush1.msra.mxu0 0.0
    %170 = vmatprep.subr.mxu0 0.0
    %171 = vmatpush1.msra.mxu0 0.0
    %172 = vmatprep.subr.mxu0 0.0
    %173 = vmatpush1.msra.mxu0 0.0
    %174 = vmatprep.subr.mxu0 0.0
    %175 = vmatpush1.msra.mxu0 0.0
    %176 = vmatprep.mubr.f32.mxu0 0.0
    %177 = vmatmul.mubr.f32.gmra.mrb[0].mxu0 %v88
    %v178 = vpop.f32.mrb[0].mxu0
    %v179 = vadd.f32 %v110, %v178
    %v180 = vpop.f32.mrb[0].mxu0
    %181 = vdwg.mxu0
    %v182 = vtanh.pop %v179
    %v183 = vld [vmem:[#allocation9] sm:$0xff]
    %v184 = vld [vmem:[#allocation9 + $0x8] sm:$0xff]
    %v185 = vld [vmem:[#allocation9 + $0x10] sm:$0xff]
    %v186 = vld [vmem:[#allocation9 + $0x18] sm:$0xff]
    %v187 = vld [vmem:[#allocation9 + $0x20] sm:$0xff]
    %v188 = vld [vmem:[#allocation9 + $0x28] sm:$0xff]
    %v189 = vld [vmem:[#allocation9 + $0x30] sm:$0xff]
    %v190 = vld [vmem:[#allocation9 + $0x38] sm:$0xff]
    %v191 = vld [vmem:[#allocation9 + $0x40] sm:$0xff]
    %v192 = vld [vmem:[#allocation9 + $0x48] sm:$0xff]
    %v193 = vld [vmem:[#allocation9 + $0x50] sm:$0xff]
    %v194 = vld [vmem:[#allocation9 + $0x58] sm:$0xff]
    %v195 = vld [vmem:[#allocation9 + $0x60] sm:$0xff]
    %v196 = vld [vmem:[#allocation9 + $0x68] sm:$0xff]
    %v197 = vld [vmem:[#allocation9 + $0x70] sm:$0xff]
    %v198 = vld [vmem:[#allocation9 + $0x78] sm:$0xff]
    %v199 = vld [vmem:[%s5] sm:$0x1]
    %v201 = vlaneseq
    %v202 = vshrl.u32 %v201, 7
    %v203 = vsub.s32 0, %v202
    %v204 = vrot.slane %v199, %v203
    %206 = vmatprep.subr.mxu0 0.0
    %207 = vmatpush1.msra.mxu0 %v183
    %208 = vmatprep.subr.mxu0 0.0
    %209 = vmatpush1.msra.mxu0 %v184
    %210 = vmatprep.subr.mxu0 0.0
    %211 = vmatpush1.msra.mxu0 %v185
    %212 = vmatprep.subr.mxu0 0.0
    %213 = vmatpush1.msra.mxu0 %v186
    %214 = vmatprep.subr.mxu0 0.0
    %215 = vmatpush1.msra.mxu0 %v187
    %216 = vmatprep.subr.mxu0 0.0
    %217 = vmatpush1.msra.mxu0 %v188
    %218 = vmatprep.subr.mxu0 0.0
    %219 = vmatpush1.msra.mxu0 %v189
    %220 = vmatprep.subr.mxu0 0.0
    %221 = vmatpush1.msra.mxu0 %v190
    %222 = vmatprep.subr.mxu0 0.0
    %223 = vmatpush1.msra.mxu0 %v191
    %224 = vmatprep.subr.mxu0 0.0
    %225 = vmatpush1.msra.mxu0 %v192
    %226 = vmatprep.subr.mxu0 0.0
    %227 = vmatpush1.msra.mxu0 %v193
    %228 = vmatprep.subr.mxu0 0.0
    %229 = vmatpush1.msra.mxu0 %v194
    %230 = vmatprep.subr.mxu0 0.0
    %231 = vmatpush1.msra.mxu0 %v195
    %232 = vmatprep.subr.mxu0 0.0
    %233 = vmatpush1.msra.mxu0 %v196
    %234 = vmatprep.subr.mxu0 0.0
    %235 = vmatpush1.msra.mxu0 %v197
    %236 = vmatprep.subr.mxu0 0.0
    %237 = vmatpush1.msra.mxu0 %v198
    %238 = vmatprep.subr.mxu0 0.0
    %239 = vmatpush1.msra.mxu0 0.0
    %240 = vmatprep.subr.mxu0 0.0
    %241 = vmatpush1.msra.mxu0 0.0
    %242 = vmatprep.subr.mxu0 0.0
    %243 = vmatpush1.msra.mxu0 0.0
    %244 = vmatprep.subr.mxu0 0.0
    %245 = vmatpush1.msra.mxu0 0.0
    %246 = vmatprep.subr.mxu0 0.0
    %247 = vmatpush1.msra.mxu0 0.0
    %248 = vmatprep.subr.mxu0 0.0
    %249 = vmatpush1.msra.mxu0 0.0
    %250 = vmatprep.subr.mxu0 0.0
    %251 = vmatpush1.msra.mxu0 0.0
    %252 = vmatprep.subr.mxu0 0.0
    %253 = vmatpush1.msra.mxu0 0.0
    %254 = vmatprep.subr.mxu0 0.0
    %255 = vmatpush1.msra.mxu0 0.0
    %256 = vmatprep.subr.mxu0 0.0
    %257 = vmatpush1.msra.mxu0 0.0
    %258 = vmatprep.subr.mxu0 0.0
    %259 = vmatpush1.msra.mxu0 0.0
    %260 = vmatprep.subr.mxu0 0.0
    %261 = vmatpush1.msra.mxu0 0.0
    %262 = vmatprep.subr.mxu0 0.0
    %263 = vmatpush1.msra.mxu0 0.0
    %264 = vmatprep.subr.mxu0 0.0
    %265 = vmatpush1.msra.mxu0 0.0
    %266 = vmatprep.subr.mxu0 0.0
    %267 = vmatpush1.msra.mxu0 0.0
    %268 = vmatprep.subr.mxu0 0.0
    %269 = vmatpush1.msra.mxu0 0.0
    %270 = vmatprep.mubr.f32.mxu0 0.0
    %271 = vmatmul.mubr.f32.gmra.mrb[0].mxu0 %v182
    %v272 = vpop.f32.mrb[0].mxu0
    %v273 = vadd.f32 %v204, %v272
    %v274 = vpop.f32.mrb[0].mxu0
    %275 = vdwg.mxu0
    %276 = vmax.xlane.f32.xlu0 %v273
    %v277 = vpop.xlane.xlu0 %276
    %v278 = vsub.f32 %v273, %v277
    %v279 = vmul.f32 %v278, 1.442695
    %v280 = vpow.pop %v279
    %281 = vadd.xlane.f32.xlu0 %v280
    %v282 = vpop.xlane.xlu0 %281
    %v283 = vlog2.pop %v282
    %v284 = vmul.f32 %v283, 0.6931472
    %v285 = vsub.f32 %v278, %v284
    %286 = vst [vmem:[#allocation11] sm:$0xff] %v285
    %287 = vst [vmem:[#allocation12] sm:$0xff] %v182
    %288 = vst [vmem:[#allocation2] sm:$0xff] %v182
    %s289 = scalar_lea.vmem [#allocation3], 8
    %v290 = vld [vmem:[%s289] sm:$0xff]
    %v291 = vld [vmem:[#allocation2] sm:$0xff]
    %v292 = vadd.f32 %v290, %v291
    %v293 = vld [vmem:[#allocation8] sm:$0xff]
    %v294 = vld [vmem:[#allocation8 + $0x8] sm:$0xff]
    %v295 = vld [vmem:[#allocation8 + $0x10] sm:$0xff]
    %v296 = vld [vmem:[#allocation8 + $0x18] sm:$0xff]
    %v297 = vld [vmem:[#allocation8 + $0x20] sm:$0xff]
    %v298 = vld [vmem:[#allocation8 + $0x28] sm:$0xff]
    %v299 = vld [vmem:[#allocation8 + $0x30] sm:$0xff]
    %v300 = vld [vmem:[#allocation8 + $0x38] sm:$0xff]
    %v301 = vld [vmem:[#allocation8 + $0x40] sm:$0xff]
    %v302 = vld [vmem:[#allocation8 + $0x48] sm:$0xff]
    %v303 = vld [vmem:[#allocation8 + $0x50] sm:$0xff]
    %v304 = vld [vmem:[#allocation8 + $0x58] sm:$0xff]
    %v305 = vld [vmem:[#allocation8 + $0x60] sm:$0xff]
    %v306 = vld [vmem:[#allocation8 + $0x68] sm:$0xff]
    %v307 = vld [vmem:[#allocation8 + $0x70] sm:$0xff]
    %v308 = vld [vmem:[#allocation8 + $0x78] sm:$0xff]
    %v309 = vld [vmem:[%s3] sm:$0x1]
    %v311 = vlaneseq
    %v312 = vshrl.u32 %v311, 7
    %v313 = vsub.s32 0, %v312
    %v314 = vrot.slane %v309, %v313
    %316 = vmatprep.subr.mxu0 0.0
    %317 = vmatpush1.msra.mxu0 %v293
    %318 = vmatprep.subr.mxu0 0.0
    %319 = vmatpush1.msra.mxu0 %v294
    %320 = vmatprep.subr.mxu0 0.0
    %321 = vmatpush1.msra.mxu0 %v295
    %322 = vmatprep.subr.mxu0 0.0
    %323 = vmatpush1.msra.mxu0 %v296
    %324 = vmatprep.subr.mxu0 0.0
    %325 = vmatpush1.msra.mxu0 %v297
    %326 = vmatprep.subr.mxu0 0.0
    %327 = vmatpush1.msra.mxu0 %v298
    %328 = vmatprep.subr.mxu0 0.0
    %329 = vmatpush1.msra.mxu0 %v299
    %330 = vmatprep.subr.mxu0 0.0
    %331 = vmatpush1.msra.mxu0 %v300
    %332 = vmatprep.subr.mxu0 0.0
    %333 = vmatpush1.msra.mxu0 %v301
    %334 = vmatprep.subr.mxu0 0.0
    %335 = vmatpush1.msra.mxu0 %v302
    %336 = vmatprep.subr.mxu0 0.0
    %337 = vmatpush1.msra.mxu0 %v303
    %338 = vmatprep.subr.mxu0 0.0
    %339 = vmatpush1.msra.mxu0 %v304
    %340 = vmatprep.subr.mxu0 0.0
    %341 = vmatpush1.msra.mxu0 %v305
    %342 = vmatprep.subr.mxu0 0.0
    %343 = vmatpush1.msra.mxu0 %v306
    %344 = vmatprep.subr.mxu0 0.0
    %345 = vmatpush1.msra.mxu0 %v307
    %346 = vmatprep.subr.mxu0 0.0
    %347 = vmatpush1.msra.mxu0 %v308
    %348 = vmatprep.subr.mxu0 0.0
    %349 = vmatpush1.msra.mxu0 0.0
    %350 = vmatprep.subr.mxu0 0.0
    %351 = vmatpush1.msra.mxu0 0.0
    %352 = vmatprep.subr.mxu0 0.0
    %353 = vmatpush1.msra.mxu0 0.0
    %354 = vmatprep.subr.mxu0 0.0
    %355 = vmatpush1.msra.mxu0 0.0
    %356 = vmatprep.subr.mxu0 0.0
    %357 = vmatpush1.msra.mxu0 0.0
    %358 = vmatprep.subr.mxu0 0.0
    %359 = vmatpush1.msra.mxu0 0.0
    %360 = vmatprep.subr.mxu0 0.0
    %361 = vmatpush1.msra.mxu0 0.0
    %362 = vmatprep.subr.mxu0 0.0
    %363 = vmatpush1.msra.mxu0 0.0
    %364 = vmatprep.subr.mxu0 0.0
    %365 = vmatpush1.msra.mxu0 0.0
    %366 = vmatprep.subr.mxu0 0.0
    %367 = vmatpush1.msra.mxu0 0.0
    %368 = vmatprep.subr.mxu0 0.0
    %369 = vmatpush1.msra.mxu0 0.0
    %370 = vmatprep.subr.mxu0 0.0
    %371 = vmatpush1.msra.mxu0 0.0
    %372 = vmatprep.subr.mxu0 0.0
    %373 = vmatpush1.msra.mxu0 0.0
    %374 = vmatprep.subr.mxu0 0.0
    %375 = vmatpush1.msra.mxu0 0.0
    %376 = vmatprep.subr.mxu0 0.0
    %377 = vmatpush1.msra.mxu0 0.0
    %378 = vmatprep.subr.mxu0 0.0
    %379 = vmatpush1.msra.mxu0 0.0
    %380 = vmatprep.mubr.f32.mxu0 0.0
    %381 = vmatmul.mubr.f32.gmra.mrb[0].mxu0 %v292
    %v382 = vpop.f32.mrb[0].mxu0
    %v383 = vadd.f32 %v314, %v382
    %v384 = vpop.f32.mrb[0].mxu0
    %385 = vdwg.mxu0
    %v386 = vtanh.pop %v383
    %v387 = vld [vmem:[#allocation9] sm:$0xff]
    %v388 = vld [vmem:[#allocation9 + $0x8] sm:$0xff]
    %v389 = vld [vmem:[#allocation9 + $0x10] sm:$0xff]
    %v390 = vld [vmem:[#allocation9 + $0x18] sm:$0xff]
    %v391 = vld [vmem:[#allocation9 + $0x20] sm:$0xff]
    %v392 = vld [vmem:[#allocation9 + $0x28] sm:$0xff]
    %v393 = vld [vmem:[#allocation9 + $0x30] sm:$0xff]
    %v394 = vld [vmem:[#allocation9 + $0x38] sm:$0xff]
    %v395 = vld [vmem:[#allocation9 + $0x40] sm:$0xff]
    %v396 = vld [vmem:[#allocation9 + $0x48] sm:$0xff]
    %v397 = vld [vmem:[#allocation9 + $0x50] sm:$0xff]
    %v398 = vld [vmem:[#allocation9 + $0x58] sm:$0xff]
    %v399 = vld [vmem:[#allocation9 + $0x60] sm:$0xff]
    %v400 = vld [vmem:[#allocation9 + $0x68] sm:$0xff]
    %v401 = vld [vmem:[#allocation9 + $0x70] sm:$0xff]
    %v402 = vld [vmem:[#allocation9 + $0x78] sm:$0xff]
    %v403 = vld [vmem:[%s5] sm:$0x1]
    %v405 = vlaneseq
    %v406 = vshrl.u32 %v405, 7
    %v407 = vsub.s32 0, %v406
    %v408 = vrot.slane %v403, %v407
    %410 = vmatprep.subr.mxu0 0.0
    %411 = vmatpush1.msra.mxu0 %v387
    %412 = vmatprep.subr.mxu0 0.0
    %413 = vmatpush1.msra.mxu0 %v388
    %414 = vmatprep.subr.mxu0 0.0
    %415 = vmatpush1.msra.mxu0 %v389
    %416 = vmatprep.subr.mxu0 0.0
    %417 = vmatpush1.msra.mxu0 %v390
    %418 = vmatprep.subr.mxu0 0.0
    %419 = vmatpush1.msra.mxu0 %v391
    %420 = vmatprep.subr.mxu0 0.0
    %421 = vmatpush1.msra.mxu0 %v392
    %422 = vmatprep.subr.mxu0 0.0
    %423 = vmatpush1.msra.mxu0 %v393
    %424 = vmatprep.subr.mxu0 0.0
    %425 = vmatpush1.msra.mxu0 %v394
    %426 = vmatprep.subr.mxu0 0.0
    %427 = vmatpush1.msra.mxu0 %v395
    %428 = vmatprep.subr.mxu0 0.0
    %429 = vmatpush1.msra.mxu0 %v396
    %430 = vmatprep.subr.mxu0 0.0
    %431 = vmatpush1.msra.mxu0 %v397
    %432 = vmatprep.subr.mxu0 0.0
    %433 = vmatpush1.msra.mxu0 %v398
    %434 = vmatprep.subr.mxu0 0.0
    %435 = vmatpush1.msra.mxu0 %v399
    %436 = vmatprep.subr.mxu0 0.0
    %437 = vmatpush1.msra.mxu0 %v400
    %438 = vmatprep.subr.mxu0 0.0
    %439 = vmatpush1.msra.mxu0 %v401
    %440 = vmatprep.subr.mxu0 0.0
    %441 = vmatpush1.msra.mxu0 %v402
    %442 = vmatprep.subr.mxu0 0.0
    %443 = vmatpush1.msra.mxu0 0.0
    %444 = vmatprep.subr.mxu0 0.0
    %445 = vmatpush1.msra.mxu0 0.0
    %446 = vmatprep.subr.mxu0 0.0
    %447 = vmatpush1.msra.mxu0 0.0
    %448 = vmatprep.subr.mxu0 0.0
    %449 = vmatpush1.msra.mxu0 0.0
    %450 = vmatprep.subr.mxu0 0.0
    %451 = vmatpush1.msra.mxu0 0.0
    %452 = vmatprep.subr.mxu0 0.0
    %453 = vmatpush1.msra.mxu0 0.0
    %454 = vmatprep.subr.mxu0 0.0
    %455 = vmatpush1.msra.mxu0 0.0
    %456 = vmatprep.subr.mxu0 0.0
    %457 = vmatpush1.msra.mxu0 0.0
    %458 = vmatprep.subr.mxu0 0.0
    %459 = vmatpush1.msra.mxu0 0.0
    %460 = vmatprep.subr.mxu0 0.0
    %461 = vmatpush1.msra.mxu0 0.0
    %462 = vmatprep.subr.mxu0 0.0
    %463 = vmatpush1.msra.mxu0 0.0
    %464 = vmatprep.subr.mxu0 0.0
    %465 = vmatpush1.msra.mxu0 0.0
    %466 = vmatprep.subr.mxu0 0.0
    %467 = vmatpush1.msra.mxu0 0.0
    %468 = vmatprep.subr.mxu0 0.0
    %469 = vmatpush1.msra.mxu0 0.0
    %470 = vmatprep.subr.mxu0 0.0
    %471 = vmatpush1.msra.mxu0 0.0
    %472 = vmatprep.subr.mxu0 0.0
    %473 = vmatpush1.msra.mxu0 0.0
    %474 = vmatprep.mubr.f32.mxu0 0.0
    %475 = vmatmul.mubr.f32.gmra.mrb[0].mxu0 %v386
    %v476 = vpop.f32.mrb[0].mxu0
    %v477 = vadd.f32 %v408, %v476
    %v478 = vpop.f32.mrb[0].mxu0
    %479 = vdwg.mxu0
    %480 = vmax.xlane.f32.xlu0 %v477
    %v481 = vpop.xlane.xlu0 %480
    %v482 = vsub.f32 %v477, %v481
    %v483 = vmul.f32 %v482, 1.442695
    %v484 = vpow.pop %v483
    %485 = vadd.xlane.f32.xlu0 %v484
    %v486 = vpop.xlane.xlu0 %485
    %v487 = vlog2.pop %v486
    %v488 = vmul.f32 %v487, 0.6931472
    %v489 = vsub.f32 %v482, %v488
    %s490 = scalar_lea.vmem [#allocation11], 8
    %491 = vst [vmem:[%s490] sm:$0xff] %v489
    %s492 = scalar_lea.vmem [#allocation12], 8
    %493 = vst [vmem:[%s492] sm:$0xff] %v386
    %494 = vst [vmem:[#allocation2] sm:$0xff] %v386
    %s495 = scalar_lea.vmem [#allocation3], 16
    %v496 = vld [vmem:[%s495] sm:$0xff]
    %v497 = vld [vmem:[#allocation2] sm:$0xff]
    %v498 = vadd.f32 %v496, %v497
    %v499 = vld [vmem:[#allocation8] sm:$0xff]
    %v500 = vld [vmem:[#allocation8 + $0x8] sm:$0xff]
    %v501 = vld [vmem:[#allocation8 + $0x10] sm:$0xff]
    %v502 = vld [vmem:[#allocation8 + $0x18] sm:$0xff]
    %v503 = vld [vmem:[#allocation8 + $0x20] sm:$0xff]
    %v504 = vld [vmem:[#allocation8 + $0x28] sm:$0xff]
    %v505 = vld [vmem:[#allocation8 + $0x30] sm:$0xff]
    %v506 = vld [vmem:[#allocation8 + $0x38] sm:$0xff]
    %v507 = vld [vmem:[#allocation8 + $0x40] sm:$0xff]
    %v508 = vld [vmem:[#allocation8 + $0x48] sm:$0xff]
    %v509 = vld [vmem:[#allocation8 + $0x50] sm:$0xff]
    %v510 = vld [vmem:[#allocation8 + $0x58] sm:$0xff]
    %v511 = vld [vmem:[#allocation8 + $0x60] sm:$0xff]
    %v512 = vld [vmem:[#allocation8 + $0x68] sm:$0xff]
    %v513 = vld [vmem:[#allocation8 + $0x70] sm:$0xff]
    %v514 = vld [vmem:[#allocation8 + $0x78] sm:$0xff]
    %v515 = vld [vmem:[%s3] sm:$0x1]
    %v517 = vlaneseq
    %v518 = vshrl.u32 %v517, 7
    %v519 = vsub.s32 0, %v518
    %v520 = vrot.slane %v515, %v519
    %522 = vmatprep.subr.mxu0 0.0
    %523 = vmatpush1.msra.mxu0 %v499
    %524 = vmatprep.subr.mxu0 0.0
    %525 = vmatpush1.msra.mxu0 %v500
    %526 = vmatprep.subr.mxu0 0.0
    %527 = vmatpush1.msra.mxu0 %v501
    %528 = vmatprep.subr.mxu0 0.0
    %529 = vmatpush1.msra.mxu0 %v502
    %530 = vmatprep.subr.mxu0 0.0
    %531 = vmatpush1.msra.mxu0 %v503
    %532 = vmatprep.subr.mxu0 0.0
    %533 = vmatpush1.msra.mxu0 %v504
    %534 = vmatprep.subr.mxu0 0.0
    %535 = vmatpush1.msra.mxu0 %v505
    %536 = vmatprep.subr.mxu0 0.0
    %537 = vmatpush1.msra.mxu0 %v506
    %538 = vmatprep.subr.mxu0 0.0
    %539 = vmatpush1.msra.mxu0 %v507
    %540 = vmatprep.subr.mxu0 0.0
    %541 = vmatpush1.msra.mxu0 %v508
    %542 = vmatprep.subr.mxu0 0.0
    %543 = vmatpush1.msra.mxu0 %v509
    %544 = vmatprep.subr.mxu0 0.0
    %545 = vmatpush1.msra.mxu0 %v510
    %546 = vmatprep.subr.mxu0 0.0
    %547 = vmatpush1.msra.mxu0 %v511
    %548 = vmatprep.subr.mxu0 0.0
    %549 = vmatpush1.msra.mxu0 %v512
    %550 = vmatprep.subr.mxu0 0.0
    %551 = vmatpush1.msra.mxu0 %v513
    %552 = vmatprep.subr.mxu0 0.0
    %553 = vmatpush1.msra.mxu0 %v514
    %554 = vmatprep.subr.mxu0 0.0
    %555 = vmatpush1.msra.mxu0 0.0
    %556 = vmatprep.subr.mxu0 0.0
    %557 = vmatpush1.msra.mxu0 0.0
    %558 = vmatprep.subr.mxu0 0.0
    %559 = vmatpush1.msra.mxu0 0.0
    %560 = vmatprep.subr.mxu0 0.0
    %561 = vmatpush1.msra.mxu0 0.0
    %562 = vmatprep.subr.mxu0 0.0
    %563 = vmatpush1.msra.mxu0 0.0
    %564 = vmatprep.subr.mxu0 0.0
    %565 = vmatpush1.msra.mxu0 0.0
    %566 = vmatprep.subr.mxu0 0.0
    %567 = vmatpush1.msra.mxu0 0.0
    %568 = vmatprep.subr.mxu0 0.0
    %569 = vmatpush1.msra.mxu0 0.0
    %570 = vmatprep.subr.mxu0 0.0
    %571 = vmatpush1.msra.mxu0 0.0
    %572 = vmatprep.subr.mxu0 0.0
    %573 = vmatpush1.msra.mxu0 0.0
    %574 = vmatprep.subr.mxu0 0.0
    %575 = vmatpush1.msra.mxu0 0.0
    %576 = vmatprep.subr.mxu0 0.0
    %577 = vmatpush1.msra.mxu0 0.0
    %578 = vmatprep.subr.mxu0 0.0
    %579 = vmatpush1.msra.mxu0 0.0
    %580 = vmatprep.subr.mxu0 0.0
    %581 = vmatpush1.msra.mxu0 0.0
    %582 = vmatprep.subr.mxu0 0.0
    %583 = vmatpush1.msra.mxu0 0.0
    %584 = vmatprep.subr.mxu0 0.0
    %585 = vmatpush1.msra.mxu0 0.0
    %586 = vmatprep.mubr.f32.mxu0 0.0
    %587 = vmatmul.mubr.f32.gmra.mrb[0].mxu0 %v498
    %v588 = vpop.f32.mrb[0].mxu0
    %v589 = vadd.f32 %v520, %v588
    %v590 = vpop.f32.mrb[0].mxu0
    %591 = vdwg.mxu0
    %v592 = vtanh.pop %v589
    %v593 = vld [vmem:[#allocation9] sm:$0xff]
    %v594 = vld [vmem:[#allocation9 + $0x8] sm:$0xff]
    %v595 = vld [vmem:[#allocation9 + $0x10] sm:$0xff]
    %v596 = vld [vmem:[#allocation9 + $0x18] sm:$0xff]
    %v597 = vld [vmem:[#allocation9 + $0x20] sm:$0xff]
    %v598 = vld [vmem:[#allocation9 + $0x28] sm:$0xff]
    %v599 = vld [vmem:[#allocation9 + $0x30] sm:$0xff]
    %v600 = vld [vmem:[#allocation9 + $0x38] sm:$0xff]
    %v601 = vld [vmem:[#allocation9 + $0x40] sm:$0xff]
    %v602 = vld [vmem:[#allocation9 + $0x48] sm:$0xff]
    %v603 = vld [vmem:[#allocation9 + $0x50] sm:$0xff]
    %v604 = vld [vmem:[#allocation9 + $0x58] sm:$0xff]
    %v605 = vld [vmem:[#allocation9 + $0x60] sm:$0xff]
    %v606 = vld [vmem:[#allocation9 + $0x68] sm:$0xff]
    %v607 = vld [vmem:[#allocation9 + $0x70] sm:$0xff]
    %v608 = vld [vmem:[#allocation9 + $0x78] sm:$0xff]
    %v609 = vld [vmem:[%s5] sm:$0x1]
    %v611 = vlaneseq
    %v612 = vshrl.u32 %v611, 7
    %v613 = vsub.s32 0, %v612
    %v614 = vrot.slane %v609, %v613
    %616 = vmatprep.subr.mxu0 0.0
    %617 = vmatpush1.msra.mxu0 %v593
    %618 = vmatprep.subr.mxu0 0.0
    %619 = vmatpush1.msra.mxu0 %v594
    %620 = vmatprep.subr.mxu0 0.0
    %621 = vmatpush1.msra.mxu0 %v595
    %622 = vmatprep.subr.mxu0 0.0
    %623 = vmatpush1.msra.mxu0 %v596
    %624 = vmatprep.subr.mxu0 0.0
    %625 = vmatpush1.msra.mxu0 %v597
    %626 = vmatprep.subr.mxu0 0.0
    %627 = vmatpush1.msra.mxu0 %v598
    %628 = vmatprep.subr.mxu0 0.0
    %629 = vmatpush1.msra.mxu0 %v599
    %630 = vmatprep.subr.mxu0 0.0
    %631 = vmatpush1.msra.mxu0 %v600
    %632 = vmatprep.subr.mxu0 0.0
    %633 = vmatpush1.msra.mxu0 %v601
    %634 = vmatprep.subr.mxu0 0.0
    %635 = vmatpush1.msra.mxu0 %v602
    %636 = vmatprep.subr.mxu0 0.0
    %637 = vmatpush1.msra.mxu0 %v603
    %638 = vmatprep.subr.mxu0 0.0
    %639 = vmatpush1.msra.mxu0 %v604
    %640 = vmatprep.subr.mxu0 0.0
    %641 = vmatpush1.msra.mxu0 %v605
    %642 = vmatprep.subr.mxu0 0.0
    %643 = vmatpush1.msra.mxu0 %v606
    %644 = vmatprep.subr.mxu0 0.0
    %645 = vmatpush1.msra.mxu0 %v607
    %646 = vmatprep.subr.mxu0 0.0
    %647 = vmatpush1.msra.mxu0 %v608
    %648 = vmatprep.subr.mxu0 0.0
    %649 = vmatpush1.msra.mxu0 0.0
    %650 = vmatprep.subr.mxu0 0.0
    %651 = vmatpush1.msra.mxu0 0.0
    %652 = vmatprep.subr.mxu0 0.0
    %653 = vmatpush1.msra.mxu0 0.0
    %654 = vmatprep.subr.mxu0 0.0
    %655 = vmatpush1.msra.mxu0 0.0
    %656 = vmatprep.subr.mxu0 0.0
    %657 = vmatpush1.msra.mxu0 0.0
    %658 = vmatprep.subr.mxu0 0.0
    %659 = vmatpush1.msra.mxu0 0.0
    %660 = vmatprep.subr.mxu0 0.0
    %661 = vmatpush1.msra.mxu0 0.0
    %662 = vmatprep.subr.mxu0 0.0
    %663 = vmatpush1.msra.mxu0 0.0
    %664 = vmatprep.subr.mxu0 0.0
    %665 = vmatpush1.msra.mxu0 0.0
    %666 = vmatprep.subr.mxu0 0.0
    %667 = vmatpush1.msra.mxu0 0.0
    %668 = vmatprep.subr.mxu0 0.0
    %669 = vmatpush1.msra.mxu0 0.0
    %670 = vmatprep.subr.mxu0 0.0
    %671 = vmatpush1.msra.mxu0 0.0
    %672 = vmatprep.subr.mxu0 0.0
    %673 = vmatpush1.msra.mxu0 0.0
    %674 = vmatprep.subr.mxu0 0.0
    %675 = vmatpush1.msra.mxu0 0.0
    %676 = vmatprep.subr.mxu0 0.0
    %677 = vmatpush1.msra.mxu0 0.0
    %678 = vmatprep.subr.mxu0 0.0
    %679 = vmatpush1.msra.mxu0 0.0
    %680 = vmatprep.mubr.f32.mxu0 0.0
    %681 = vmatmul.mubr.f32.gmra.mrb[0].mxu0 %v592
    %v682 = vpop.f32.mrb[0].mxu0
    %v683 = vadd.f32 %v614, %v682
    %v684 = vpop.f32.mrb[0].mxu0
    %685 = vdwg.mxu0
    %686 = vmax.xlane.f32.xlu0 %v683
    %v687 = vpop.xlane.xlu0 %686
    %v688 = vsub.f32 %v683, %v687
    %v689 = vmul.f32 %v688, 1.442695
    %v690 = vpow.pop %v689
    %691 = vadd.xlane.f32.xlu0 %v690
    %v692 = vpop.xlane.xlu0 %691
    %v693 = vlog2.pop %v692
    %v694 = vmul.f32 %v693, 0.6931472
    %v695 = vsub.f32 %v688, %v694
    %s696 = scalar_lea.vmem [#allocation11], 16
    %697 = vst [vmem:[%s696] sm:$0xff] %v695
    %s698 = scalar_lea.vmem [#allocation12], 16
    %699 = vst [vmem:[%s698] sm:$0xff] %v592
    %700 = vst [vmem:[#allocation2] sm:$0xff] %v592
    %s701 = scalar_lea.vmem [#allocation3], 24
    %v702 = vld [vmem:[%s701] sm:$0xff]
    %v703 = vld [vmem:[#allocation2] sm:$0xff]
    %v704 = vadd.f32 %v702, %v703
    %v705 = vld [vmem:[#allocation8] sm:$0xff]
    %v706 = vld [vmem:[#allocation8 + $0x8] sm:$0xff]
    %v707 = vld [vmem:[#allocation8 + $0x10] sm:$0xff]
    %v708 = vld [vmem:[#allocation8 + $0x18] sm:$0xff]
    %v709 = vld [vmem:[#allocation8 + $0x20] sm:$0xff]
    %v710 = vld [vmem:[#allocation8 + $0x28] sm:$0xff]
    %v711 = vld [vmem:[#allocation8 + $0x30] sm:$0xff]
    %v712 = vld [vmem:[#allocation8 + $0x38] sm:$0xff]
    %v713 = vld [vmem:[#allocation8 + $0x40] sm:$0xff]
    %v714 = vld [vmem:[#allocation8 + $0x48] sm:$0xff]
    %v715 = vld [vmem:[#allocation8 + $0x50] sm:$0xff]
    %v716 = vld [vmem:[#allocation8 + $0x58] sm:$0xff]
    %v717 = vld [vmem:[#allocation8 + $0x60] sm:$0xff]
    %v718 = vld [vmem:[#allocation8 + $0x68] sm:$0xff]
    %v719 = vld [vmem:[#allocation8 + $0x70] sm:$0xff]
    %v720 = vld [vmem:[#allocation8 + $0x78] sm:$0xff]
    %v721 = vld [vmem:[%s3] sm:$0x1]
    %v723 = vlaneseq
    %v724 = vshrl.u32 %v723, 7
    %v725 = vsub.s32 0, %v724
    %v726 = vrot.slane %v721, %v725
    %728 = vmatprep.subr.mxu0 0.0
    %729 = vmatpush1.msra.mxu0 %v705
    %730 = vmatprep.subr.mxu0 0.0
    %731 = vmatpush1.msra.mxu0 %v706
    %732 = vmatprep.subr.mxu0 0.0
    %733 = vmatpush1.msra.mxu0 %v707
    %734 = vmatprep.subr.mxu0 0.0
    %735 = vmatpush1.msra.mxu0 %v708
    %736 = vmatprep.subr.mxu0 0.0
    %737 = vmatpush1.msra.mxu0 %v709
    %738 = vmatprep.subr.mxu0 0.0
    %739 = vmatpush1.msra.mxu0 %v710
    %740 = vmatprep.subr.mxu0 0.0
    %741 = vmatpush1.msra.mxu0 %v711
    %742 = vmatprep.subr.mxu0 0.0
    %743 = vmatpush1.msra.mxu0 %v712
    %744 = vmatprep.subr.mxu0 0.0
    %745 = vmatpush1.msra.mxu0 %v713
    %746 = vmatprep.subr.mxu0 0.0
    %747 = vmatpush1.msra.mxu0 %v714
    %748 = vmatprep.subr.mxu0 0.0
    %749 = vmatpush1.msra.mxu0 %v715
    %750 = vmatprep.subr.mxu0 0.0
    %751 = vmatpush1.msra.mxu0 %v716
    %752 = vmatprep.subr.mxu0 0.0
    %753 = vmatpush1.msra.mxu0 %v717
    %754 = vmatprep.subr.mxu0 0.0
    %755 = vmatpush1.msra.mxu0 %v718
    %756 = vmatprep.subr.mxu0 0.0
    %757 = vmatpush1.msra.mxu0 %v719
    %758 = vmatprep.subr.mxu0 0.0
    %759 = vmatpush1.msra.mxu0 %v720
    %760 = vmatprep.subr.mxu0 0.0
    %761 = vmatpush1.msra.mxu0 0.0
    %762 = vmatprep.subr.mxu0 0.0
    %763 = vmatpush1.msra.mxu0 0.0
    %764 = vmatprep.subr.mxu0 0.0
    %765 = vmatpush1.msra.mxu0 0.0
    %766 = vmatprep.subr.mxu0 0.0
    %767 = vmatpush1.msra.mxu0 0.0
    %768 = vmatprep.subr.mxu0 0.0
    %769 = vmatpush1.msra.mxu0 0.0
    %770 = vmatprep.subr.mxu0 0.0
    %771 = vmatpush1.msra.mxu0 0.0
    %772 = vmatprep.subr.mxu0 0.0
    %773 = vmatpush1.msra.mxu0 0.0
    %774 = vmatprep.subr.mxu0 0.0
    %775 = vmatpush1.msra.mxu0 0.0
    %776 = vmatprep.subr.mxu0 0.0
    %777 = vmatpush1.msra.mxu0 0.0
    %778 = vmatprep.subr.mxu0 0.0
    %779 = vmatpush1.msra.mxu0 0.0
    %780 = vmatprep.subr.mxu0 0.0
    %781 = vmatpush1.msra.mxu0 0.0
    %782 = vmatprep.subr.mxu0 0.0
    %783 = vmatpush1.msra.mxu0 0.0
    %784 = vmatprep.subr.mxu0 0.0
    %785 = vmatpush1.msra.mxu0 0.0
    %786 = vmatprep.subr.mxu0 0.0
    %787 = vmatpush1.msra.mxu0 0.0
    %788 = vmatprep.subr.mxu0 0.0
    %789 = vmatpush1.msra.mxu0 0.0
    %790 = vmatprep.subr.mxu0 0.0
    %791 = vmatpush1.msra.mxu0 0.0
    %792 = vmatprep.mubr.f32.mxu0 0.0
    %793 = vmatmul.mubr.f32.gmra.mrb[0].mxu0 %v704
    %v794 = vpop.f32.mrb[0].mxu0
    %v795 = vadd.f32 %v726, %v794
    %v796 = vpop.f32.mrb[0].mxu0
    %797 = vdwg.mxu0
    %v798 = vtanh.pop %v795
    %v799 = vld [vmem:[#allocation9] sm:$0xff]
    %v800 = vld [vmem:[#allocation9 + $0x8] sm:$0xff]
    %v801 = vld [vmem:[#allocation9 + $0x10] sm:$0xff]
    %v802 = vld [vmem:[#allocation9 + $0x18] sm:$0xff]
    %v803 = vld [vmem:[#allocation9 + $0x20] sm:$0xff]
    %v804 = vld [vmem:[#allocation9 + $0x28] sm:$0xff]
    %v805 = vld [vmem:[#allocation9 + $0x30] sm:$0xff]
    %v806 = vld [vmem:[#allocation9 + $0x38] sm:$0xff]
    %v807 = vld [vmem:[#allocation9 + $0x40] sm:$0xff]
    %v808 = vld [vmem:[#allocation9 + $0x48] sm:$0xff]
    %v809 = vld [vmem:[#allocation9 + $0x50] sm:$0xff]
    %v810 = vld [vmem:[#allocation9 + $0x58] sm:$0xff]
    %v811 = vld [vmem:[#allocation9 + $0x60] sm:$0xff]
    %v812 = vld [vmem:[#allocation9 + $0x68] sm:$0xff]
    %v813 = vld [vmem:[#allocation9 + $0x70] sm:$0xff]
    %v814 = vld [vmem:[#allocation9 + $0x78] sm:$0xff]
    %v815 = vld [vmem:[%s5] sm:$0x1]
    %v817 = vlaneseq
    %v818 = vshrl.u32 %v817, 7
    %v819 = vsub.s32 0, %v818
    %v820 = vrot.slane %v815, %v819
    %822 = vmatprep.subr.mxu0 0.0
    %823 = vmatpush1.msra.mxu0 %v799
    %824 = vmatprep.subr.mxu0 0.0
    %825 = vmatpush1.msra.mxu0 %v800
    %826 = vmatprep.subr.mxu0 0.0
    %827 = vmatpush1.msra.mxu0 %v801
    %828 = vmatprep.subr.mxu0 0.0
    %829 = vmatpush1.msra.mxu0 %v802
    %830 = vmatprep.subr.mxu0 0.0
    %831 = vmatpush1.msra.mxu0 %v803
    %832 = vmatprep.subr.mxu0 0.0
    %833 = vmatpush1.msra.mxu0 %v804
    %834 = vmatprep.subr.mxu0 0.0
    %835 = vmatpush1.msra.mxu0 %v805
    %836 = vmatprep.subr.mxu0 0.0
    %837 = vmatpush1.msra.mxu0 %v806
    %838 = vmatprep.subr.mxu0 0.0
    %839 = vmatpush1.msra.mxu0 %v807
    %840 = vmatprep.subr.mxu0 0.0
    %841 = vmatpush1.msra.mxu0 %v808
    %842 = vmatprep.subr.mxu0 0.0
    %843 = vmatpush1.msra.mxu0 %v809
    %844 = vmatprep.subr.mxu0 0.0
    %845 = vmatpush1.msra.mxu0 %v810
    %846 = vmatprep.subr.mxu0 0.0
    %847 = vmatpush1.msra.mxu0 %v811
    %848 = vmatprep.subr.mxu0 0.0
    %849 = vmatpush1.msra.mxu0 %v812
    %850 = vmatprep.subr.mxu0 0.0
    %851 = vmatpush1.msra.mxu0 %v813
    %852 = vmatprep.subr.mxu0 0.0
    %853 = vmatpush1.msra.mxu0 %v814
    %854 = vmatprep.subr.mxu0 0.0
    %855 = vmatpush1.msra.mxu0 0.0
    %856 = vmatprep.subr.mxu0 0.0
    %857 = vmatpush1.msra.mxu0 0.0
    %858 = vmatprep.subr.mxu0 0.0
    %859 = vmatpush1.msra.mxu0 0.0
    %860 = vmatprep.subr.mxu0 0.0
    %861 = vmatpush1.msra.mxu0 0.0
    %862 = vmatprep.subr.mxu0 0.0
    %863 = vmatpush1.msra.mxu0 0.0
    %864 = vmatprep.subr.mxu0 0.0
    %865 = vmatpush1.msra.mxu0 0.0
    %866 = vmatprep.subr.mxu0 0.0
    %867 = vmatpush1.msra.mxu0 0.0
    %868 = vmatprep.subr.mxu0 0.0
    %869 = vmatpush1.msra.mxu0 0.0
    %870 = vmatprep.subr.mxu0 0.0
    %871 = vmatpush1.msra.mxu0 0.0
    %872 = vmatprep.subr.mxu0 0.0
    %873 = vmatpush1.msra.mxu0 0.0
    %874 = vmatprep.subr.mxu0 0.0
    %875 = vmatpush1.msra.mxu0 0.0
    %876 = vmatprep.subr.mxu0 0.0
    %877 = vmatpush1.msra.mxu0 0.0
    %878 = vmatprep.subr.mxu0 0.0
    %879 = vmatpush1.msra.mxu0 0.0
    %880 = vmatprep.subr.mxu0 0.0
    %881 = vmatpush1.msra.mxu0 0.0
    %882 = vmatprep.subr.mxu0 0.0
    %883 = vmatpush1.msra.mxu0 0.0
    %884 = vmatprep.subr.mxu0 0.0
    %885 = vmatpush1.msra.mxu0 0.0
    %886 = vmatprep.mubr.f32.mxu0 0.0
    %887 = vmatmul.mubr.f32.gmra.mrb[0].mxu0 %v798
    %v888 = vpop.f32.mrb[0].mxu0
    %v889 = vadd.f32 %v820, %v888
    %v890 = vpop.f32.mrb[0].mxu0
    %891 = vdwg.mxu0
    %892 = vmax.xlane.f32.xlu0 %v889
    %v893 = vpop.xlane.xlu0 %892
    %v894 = vsub.f32 %v889, %v893
    %v895 = vmul.f32 %v894, 1.442695
    %v896 = vpow.pop %v895
    %897 = vadd.xlane.f32.xlu0 %v896
    %v898 = vpop.xlane.xlu0 %897
    %v899 = vlog2.pop %v898
    %v900 = vmul.f32 %v899, 0.6931472
    %v901 = vsub.f32 %v894, %v900
    %s902 = scalar_lea.vmem [#allocation11], 24
    %903 = vst [vmem:[%s902] sm:$0xff] %v901
    %s904 = scalar_lea.vmem [#allocation12], 24
    %905 = vst [vmem:[%s904] sm:$0xff] %v798
    %906 = vst [vmem:[#allocation2] sm:$0xff] %v798
    %s907 = scalar_lea.vmem [#allocation3], 32
    %v908 = vld [vmem:[%s907] sm:$0xff]
    %v909 = vld [vmem:[#allocation2] sm:$0xff]
    %v910 = vadd.f32 %v908, %v909
    %v911 = vld [vmem:[#allocation8] sm:$0xff]
    %v912 = vld [vmem:[#allocation8 + $0x8] sm:$0xff]
    %v913 = vld [vmem:[#allocation8 + $0x10] sm:$0xff]
    %v914 = vld [vmem:[#allocation8 + $0x18] sm:$0xff]
    %v915 = vld [vmem:[#allocation8 + $0x20] sm:$0xff]
    %v916 = vld [vmem:[#allocation8 + $0x28] sm:$0xff]
    %v917 = vld [vmem:[#allocation8 + $0x30] sm:$0xff]
    %v918 = vld [vmem:[#allocation8 + $0x38] sm:$0xff]
    %v919 = vld [vmem:[#allocation8 + $0x40] sm:$0xff]
    %v920 = vld [vmem:[#allocation8 + $0x48] sm:$0xff]
    %v921 = vld [vmem:[#allocation8 + $0x50] sm:$0xff]
    %v922 = vld [vmem:[#allocation8 + $0x58] sm:$0xff]
    %v923 = vld [vmem:[#allocation8 + $0x60] sm:$0xff]
    %v924 = vld [vmem:[#allocation8 + $0x68] sm:$0xff]
    %v925 = vld [vmem:[#allocation8 + $0x70] sm:$0xff]
    %v926 = vld [vmem:[#allocation8 + $0x78] sm:$0xff]
    %v927 = vld [vmem:[%s3] sm:$0x1]
    %v929 = vlaneseq
    %v930 = vshrl.u32 %v929, 7
    %v931 = vsub.s32 0, %v930
    %v932 = vrot.slane %v927, %v931
    %934 = vmatprep.subr.mxu0 0.0
    %935 = vmatpush1.msra.mxu0 %v911
    %936 = vmatprep.subr.mxu0 0.0
    %937 = vmatpush1.msra.mxu0 %v912
    %938 = vmatprep.subr.mxu0 0.0
    %939 = vmatpush1.msra.mxu0 %v913
    %940 = vmatprep.subr.mxu0 0.0
    %941 = vmatpush1.msra.mxu0 %v914
    %942 = vmatprep.subr.mxu0 0.0
    %943 = vmatpush1.msra.mxu0 %v915
    %944 = vmatprep.subr.mxu0 0.0
    %945 = vmatpush1.msra.mxu0 %v916
    %946 = vmatprep.subr.mxu0 0.0
    %947 = vmatpush1.msra.mxu0 %v917
    %948 = vmatprep.subr.mxu0 0.0
    %949 = vmatpush1.msra.mxu0 %v918
    %950 = vmatprep.subr.mxu0 0.0
    %951 = vmatpush1.msra.mxu0 %v919
    %952 = vmatprep.subr.mxu0 0.0
    %953 = vmatpush1.msra.mxu0 %v920
    %954 = vmatprep.subr.mxu0 0.0
    %955 = vmatpush1.msra.mxu0 %v921
    %956 = vmatprep.subr.mxu0 0.0
    %957 = vmatpush1.msra.mxu0 %v922
    %958 = vmatprep.subr.mxu0 0.0
    %959 = vmatpush1.msra.mxu0 %v923
    %960 = vmatprep.subr.mxu0 0.0
    %961 = vmatpush1.msra.mxu0 %v924
    %962 = vmatprep.subr.mxu0 0.0
    %963 = vmatpush1.msra.mxu0 %v925
    %964 = vmatprep.subr.mxu0 0.0
    %965 = vmatpush1.msra.mxu0 %v926
    %966 = vmatprep.subr.mxu0 0.0
    %967 = vmatpush1.msra.mxu0 0.0
    %968 = vmatprep.subr.mxu0 0.0
    %969 = vmatpush1.msra.mxu0 0.0
    %970 = vmatprep.subr.mxu0 0.0
    %971 = vmatpush1.msra.mxu0 0.0
    %972 = vmatprep.subr.mxu0 0.0
    %973 = vmatpush1.msra.mxu0 0.0
    %974 = vmatprep.subr.mxu0 0.0
    %975 = vmatpush1.msra.mxu0 0.0
    %976 = vmatprep.subr.mxu0 0.0
    %977 = vmatpush1.msra.mxu0 0.0
    %978 = vmatprep.subr.mxu0 0.0
    %979 = vmatpush1.msra.mxu0 0.0
    %980 = vmatprep.subr.mxu0 0.0
    %981 = vmatpush1.msra.mxu0 0.0
    %982 = vmatprep.subr.mxu0 0.0
    %983 = vmatpush1.msra.mxu0 0.0
    %984 = vmatprep.subr.mxu0 0.0
    %985 = vmatpush1.msra.mxu0 0.0
    %986 = vmatprep.subr.mxu0 0.0
    %987 = vmatpush1.msra.mxu0 0.0
    %988 = vmatprep.subr.mxu0 0.0
    %989 = vmatpush1.msra.mxu0 0.0
    %990 = vmatprep.subr.mxu0 0.0
    %991 = vmatpush1.msra.mxu0 0.0
    %992 = vmatprep.subr.mxu0 0.0
    %993 = vmatpush1.msra.mxu0 0.0
    %994 = vmatprep.subr.mxu0 0.0
    %995 = vmatpush1.msra.mxu0 0.0
    %996 = vmatprep.subr.mxu0 0.0
    %997 = vmatpush1.msra.mxu0 0.0
    %998 = vmatprep.mubr.f32.mxu0 0.0
    %999 = vmatmul.mubr.f32.gmra.mrb[0].mxu0 %v910
    %v1000 = vpop.f32.mrb[0].mxu0
    %v1001 = vadd.f32 %v932, %v1000
    %v1002 = vpop.f32.mrb[0].mxu0
    %1003 = vdwg.mxu0
    %v1004 = vtanh.pop %v1001
    %v1005 = vld [vmem:[#allocation9] sm:$0xff]
    %v1006 = vld [vmem:[#allocation9 + $0x8] sm:$0xff]
    %v1007 = vld [vmem:[#allocation9 + $0x10] sm:$0xff]
    %v1008 = vld [vmem:[#allocation9 + $0x18] sm:$0xff]
    %v1009 = vld [vmem:[#allocation9 + $0x20] sm:$0xff]
    %v1010 = vld [vmem:[#allocation9 + $0x28] sm:$0xff]
    %v1011 = vld [vmem:[#allocation9 + $0x30] sm:$0xff]
    %v1012 = vld [vmem:[#allocation9 + $0x38] sm:$0xff]
    %v1013 = vld [vmem:[#allocation9 + $0x40] sm:$0xff]
    %v1014 = vld [vmem:[#allocation9 + $0x48] sm:$0xff]
    %v1015 = vld [vmem:[#allocation9 + $0x50] sm:$0xff]
    %v1016 = vld [vmem:[#allocation9 + $0x58] sm:$0xff]
    %v1017 = vld [vmem:[#allocation9 + $0x60] sm:$0xff]
    %v1018 = vld [vmem:[#allocation9 + $0x68] sm:$0xff]
    %v1019 = vld [vmem:[#allocation9 + $0x70] sm:$0xff]
    %v1020 = vld [vmem:[#allocation9 + $0x78] sm:$0xff]
    %v1021 = vld [vmem:[%s5] sm:$0x1]
    %v1023 = vlaneseq
    %v1024 = vshrl.u32 %v1023, 7
    %v1025 = vsub.s32 0, %v1024
    %v1026 = vrot.slane %v1021, %v1025
    %1028 = vmatprep.subr.mxu0 0.0
    %1029 = vmatpush1.msra.mxu0 %v1005
    %1030 = vmatprep.subr.mxu0 0.0
    %1031 = vmatpush1.msra.mxu0 %v1006
    %1032 = vmatprep.subr.mxu0 0.0
    %1033 = vmatpush1.msra.mxu0 %v1007
    %1034 = vmatprep.subr.mxu0 0.0
    %1035 = vmatpush1.msra.mxu0 %v1008
    %1036 = vmatprep.subr.mxu0 0.0
    %1037 = vmatpush1.msra.mxu0 %v1009
    %1038 = vmatprep.subr.mxu0 0.0
    %1039 = vmatpush1.msra.mxu0 %v1010
    %1040 = vmatprep.subr.mxu0 0.0
    %1041 = vmatpush1.msra.mxu0 %v1011
    %1042 = vmatprep.subr.mxu0 0.0
    %1043 = vmatpush1.msra.mxu0 %v1012
    %1044 = vmatprep.subr.mxu0 0.0
    %1045 = vmatpush1.msra.mxu0 %v1013
    %1046 = vmatprep.subr.mxu0 0.0
    %1047 = vmatpush1.msra.mxu0 %v1014
    %1048 = vmatprep.subr.mxu0 0.0
    %1049 = vmatpush1.msra.mxu0 %v1015
    %1050 = vmatprep.subr.mxu0 0.0
    %1051 = vmatpush1.msra.mxu0 %v1016
    %1052 = vmatprep.subr.mxu0 0.0
    %1053 = vmatpush1.msra.mxu0 %v1017
    %1054 = vmatprep.subr.mxu0 0.0
    %1055 = vmatpush1.msra.mxu0 %v1018
    %1056 = vmatprep.subr.mxu0 0.0
    %1057 = vmatpush1.msra.mxu0 %v1019
    %1058 = vmatprep.subr.mxu0 0.0
    %1059 = vmatpush1.msra.mxu0 %v1020
    %1060 = vmatprep.subr.mxu0 0.0
    %1061 = vmatpush1.msra.mxu0 0.0
    %1062 = vmatprep.subr.mxu0 0.0
    %1063 = vmatpush1.msra.mxu0 0.0
    %1064 = vmatprep.subr.mxu0 0.0
    %1065 = vmatpush1.msra.mxu0 0.0
    %1066 = vmatprep.subr.mxu0 0.0
    %1067 = vmatpush1.msra.mxu0 0.0
    %1068 = vmatprep.subr.mxu0 0.0
    %1069 = vmatpush1.msra.mxu0 0.0
    %1070 = vmatprep.subr.mxu0 0.0
    %1071 = vmatpush1.msra.mxu0 0.0
    %1072 = vmatprep.subr.mxu0 0.0
    %1073 = vmatpush1.msra.mxu0 0.0
    %1074 = vmatprep.subr.mxu0 0.0
    %1075 = vmatpush1.msra.mxu0 0.0
    %1076 = vmatprep.subr.mxu0 0.0
    %1077 = vmatpush1.msra.mxu0 0.0
    %1078 = vmatprep.subr.mxu0 0.0
    %1079 = vmatpush1.msra.mxu0 0.0
    %1080 = vmatprep.subr.mxu0 0.0
    %1081 = vmatpush1.msra.mxu0 0.0
    %1082 = vmatprep.subr.mxu0 0.0
    %1083 = vmatpush1.msra.mxu0 0.0
    %1084 = vmatprep.subr.mxu0 0.0
    %1085 = vmatpush1.msra.mxu0 0.0
    %1086 = vmatprep.subr.mxu0 0.0
    %1087 = vmatpush1.msra.mxu0 0.0
    %1088 = vmatprep.subr.mxu0 0.0
    %1089 = vmatpush1.msra.mxu0 0.0
    %1090 = vmatprep.subr.mxu0 0.0
    %1091 = vmatpush1.msra.mxu0 0.0
    %1092 = vmatprep.mubr.f32.mxu0 0.0
    %1093 = vmatmul.mubr.f32.gmra.mrb[0].mxu0 %v1004
    %v1094 = vpop.f32.mrb[0].mxu0
    %v1095 = vadd.f32 %v1026, %v1094
    %v1096 = vpop.f32.mrb[0].mxu0
    %1097 = vdwg.mxu0
    %1098 = vmax.xlane.f32.xlu0 %v1095
    %v1099 = vpop.xlane.xlu0 %1098
    %v1100 = vsub.f32 %v1095, %v1099
    %v1101 = vmul.f32 %v1100, 1.442695
    %v1102 = vpow.pop %v1101
    %1103 = vadd.xlane.f32.xlu0 %v1102
    %v1104 = vpop.xlane.xlu0 %1103
    %v1105 = vlog2.pop %v1104
    %v1106 = vmul.f32 %v1105, 0.6931472
    %v1107 = vsub.f32 %v1100, %v1106
    %s1108 = scalar_lea.vmem [#allocation11], 32
    %1109 = vst [vmem:[%s1108] sm:$0xff] %v1107
    %s1110 = scalar_lea.vmem [#allocation12], 32
    %1111 = vst [vmem:[%s1110] sm:$0xff] %v1004
    %1112 = vst [vmem:[#allocation2] sm:$0xff] %v1004
    %s1113 = scalar_lea.vmem [#allocation3], 40
    %v1114 = vld [vmem:[%s1113] sm:$0xff]
    %v1115 = vld [vmem:[#allocation2] sm:$0xff]
    %v1116 = vadd.f32 %v1114, %v1115
    %v1117 = vld [vmem:[#allocation8] sm:$0xff]
    %v1118 = vld [vmem:[#allocation8 + $0x8] sm:$0xff]
    %v1119 = vld [vmem:[#allocation8 + $0x10] sm:$0xff]
    %v1120 = vld [vmem:[#allocation8 + $0x18] sm:$0xff]
    %v1121 = vld [vmem:[#allocation8 + $0x20] sm:$0xff]
    %v1122 = vld [vmem:[#allocation8 + $0x28] sm:$0xff]
    %v1123 = vld [vmem:[#allocation8 + $0x30] sm:$0xff]
    %v1124 = vld [vmem:[#allocation8 + $0x38] sm:$0xff]
    %v1125 = vld [vmem:[#allocation8 + $0x40] sm:$0xff]
    %v1126 = vld [vmem:[#allocation8 + $0x48] sm:$0xff]
    %v1127 = vld [vmem:[#allocation8 + $0x50] sm:$0xff]
    %v1128 = vld [vmem:[#allocation8 + $0x58] sm:$0xff]
    %v1129 = vld [vmem:[#allocation8 + $0x60] sm:$0xff]
    %v1130 = vld [vmem:[#allocation8 + $0x68] sm:$0xff]
    %v1131 = vld [vmem:[#allocation8 + $0x70] sm:$0xff]
    %v1132 = vld [vmem:[#allocation8 + $0x78] sm:$0xff]
    %v1133 = vld [vmem:[%s3] sm:$0x1]
    %v1135 = vlaneseq
    %v1136 = vshrl.u32 %v1135, 7
    %v1137 = vsub.s32 0, %v1136
    %v1138 = vrot.slane %v1133, %v1137
    %1140 = vmatprep.subr.mxu0 0.0
    %1141 = vmatpush1.msra.mxu0 %v1117
    %1142 = vmatprep.subr.mxu0 0.0
    %1143 = vmatpush1.msra.mxu0 %v1118
    %1144 = vmatprep.subr.mxu0 0.0
    %1145 = vmatpush1.msra.mxu0 %v1119
    %1146 = vmatprep.subr.mxu0 0.0
    %1147 = vmatpush1.msra.mxu0 %v1120
    %1148 = vmatprep.subr.mxu0 0.0
    %1149 = vmatpush1.msra.mxu0 %v1121
    %1150 = vmatprep.subr.mxu0 0.0
    %1151 = vmatpush1.msra.mxu0 %v1122
    %1152 = vmatprep.subr.mxu0 0.0
    %1153 = vmatpush1.msra.mxu0 %v1123
    %1154 = vmatprep.subr.mxu0 0.0
    %1155 = vmatpush1.msra.mxu0 %v1124
    %1156 = vmatprep.subr.mxu0 0.0
    %1157 = vmatpush1.msra.mxu0 %v1125
    %1158 = vmatprep.subr.mxu0 0.0
    %1159 = vmatpush1.msra.mxu0 %v1126
    %1160 = vmatprep.subr.mxu0 0.0
    %1161 = vmatpush1.msra.mxu0 %v1127
    %1162 = vmatprep.subr.mxu0 0.0
    %1163 = vmatpush1.msra.mxu0 %v1128
    %1164 = vmatprep.subr.mxu0 0.0
    %1165 = vmatpush1.msra.mxu0 %v1129
    %1166 = vmatprep.subr.mxu0 0.0
    %1167 = vmatpush1.msra.mxu0 %v1130
    %1168 = vmatprep.subr.mxu0 0.0
    %1169 = vmatpush1.msra.mxu0 %v1131
    %1170 = vmatprep.subr.mxu0 0.0
    %1171 = vmatpush1.msra.mxu0 %v1132
    %1172 = vmatprep.subr.mxu0 0.0
    %1173 = vmatpush1.msra.mxu0 0.0
    %1174 = vmatprep.subr.mxu0 0.0
    %1175 = vmatpush1.msra.mxu0 0.0
    %1176 = vmatprep.subr.mxu0 0.0
    %1177 = vmatpush1.msra.mxu0 0.0
    %1178 = vmatprep.subr.mxu0 0.0
    %1179 = vmatpush1.msra.mxu0 0.0
    %1180 = vmatprep.subr.mxu0 0.0
    %1181 = vmatpush1.msra.mxu0 0.0
    %1182 = vmatprep.subr.mxu0 0.0
    %1183 = vmatpush1.msra.mxu0 0.0
    %1184 = vmatprep.subr.mxu0 0.0
    %1185 = vmatpush1.msra.mxu0 0.0
    %1186 = vmatprep.subr.mxu0 0.0
    %1187 = vmatpush1.msra.mxu0 0.0
    %1188 = vmatprep.subr.mxu0 0.0
    %1189 = vmatpush1.msra.mxu0 0.0
    %1190 = vmatprep.subr.mxu0 0.0
    %1191 = vmatpush1.msra.mxu0 0.0
    %1192 = vmatprep.subr.mxu0 0.0
    %1193 = vmatpush1.msra.mxu0 0.0
    %1194 = vmatprep.subr.mxu0 0.0
    %1195 = vmatpush1.msra.mxu0 0.0
    %1196 = vmatprep.subr.mxu0 0.0
    %1197 = vmatpush1.msra.mxu0 0.0
    %1198 = vmatprep.subr.mxu0 0.0
    %1199 = vmatpush1.msra.mxu0 0.0
    %1200 = vmatprep.subr.mxu0 0.0
    %1201 = vmatpush1.msra.mxu0 0.0
    %1202 = vmatprep.subr.mxu0 0.0
    %1203 = vmatpush1.msra.mxu0 0.0
    %1204 = vmatprep.mubr.f32.mxu0 0.0
    %1205 = vmatmul.mubr.f32.gmra.mrb[0].mxu0 %v1116
    %v1206 = vpop.f32.mrb[0].mxu0
    %v1207 = vadd.f32 %v1138, %v1206
    %v1208 = vpop.f32.mrb[0].mxu0
    %1209 = vdwg.mxu0
    %v1210 = vtanh.pop %v1207
    %v1211 = vld [vmem:[#allocation9] sm:$0xff]
    %v1212 = vld [vmem:[#allocation9 + $0x8] sm:$0xff]
    %v1213 = vld [vmem:[#allocation9 + $0x10] sm:$0xff]
    %v1214 = vld [vmem:[#allocation9 + $0x18] sm:$0xff]
    %v1215 = vld [vmem:[#allocation9 + $0x20] sm:$0xff]
    %v1216 = vld [vmem:[#allocation9 + $0x28] sm:$0xff]
    %v1217 = vld [vmem:[#allocation9 + $0x30] sm:$0xff]
    %v1218 = vld [vmem:[#allocation9 + $0x38] sm:$0xff]
    %v1219 = vld [vmem:[#allocation9 + $0x40] sm:$0xff]
    %v1220 = vld [vmem:[#allocation9 + $0x48] sm:$0xff]
    %v1221 = vld [vmem:[#allocation9 + $0x50] sm:$0xff]
    %v1222 = vld [vmem:[#allocation9 + $0x58] sm:$0xff]
    %v1223 = vld [vmem:[#allocation9 + $0x60] sm:$0xff]
    %v1224 = vld [vmem:[#allocation9 + $0x68] sm:$0xff]
    %v1225 = vld [vmem:[#allocation9 + $0x70] sm:$0xff]
    %v1226 = vld [vmem:[#allocation9 + $0x78] sm:$0xff]
    %v1227 = vld [vmem:[%s5] sm:$0x1]
    %v1229 = vlaneseq
    %v1230 = vshrl.u32 %v1229, 7
    %v1231 = vsub.s32 0, %v1230
    %v1232 = vrot.slane %v1227, %v1231
    %1234 = vmatprep.subr.mxu0 0.0
    %1235 = vmatpush1.msra.mxu0 %v1211
    %1236 = vmatprep.subr.mxu0 0.0
    %1237 = vmatpush1.msra.mxu0 %v1212
    %1238 = vmatprep.subr.mxu0 0.0
    %1239 = vmatpush1.msra.mxu0 %v1213
    %1240 = vmatprep.subr.mxu0 0.0
    %1241 = vmatpush1.msra.mxu0 %v1214
    %1242 = vmatprep.subr.mxu0 0.0
    %1243 = vmatpush1.msra.mxu0 %v1215
    %1244 = vmatprep.subr.mxu0 0.0
    %1245 = vmatpush1.msra.mxu0 %v1216
    %1246 = vmatprep.subr.mxu0 0.0
    %1247 = vmatpush1.msra.mxu0 %v1217
    %1248 = vmatprep.subr.mxu0 0.0
    %1249 = vmatpush1.msra.mxu0 %v1218
    %1250 = vmatprep.subr.mxu0 0.0
    %1251 = vmatpush1.msra.mxu0 %v1219
    %1252 = vmatprep.subr.mxu0 0.0
    %1253 = vmatpush1.msra.mxu0 %v1220
    %1254 = vmatprep.subr.mxu0 0.0
    %1255 = vmatpush1.msra.mxu0 %v1221
    %1256 = vmatprep.subr.mxu0 0.0
    %1257 = vmatpush1.msra.mxu0 %v1222
    %1258 = vmatprep.subr.mxu0 0.0
    %1259 = vmatpush1.msra.mxu0 %v1223
    %1260 = vmatprep.subr.mxu0 0.0
    %1261 = vmatpush1.msra.mxu0 %v1224
    %1262 = vmatprep.subr.mxu0 0.0
    %1263 = vmatpush1.msra.mxu0 %v1225
    %1264 = vmatprep.subr.mxu0 0.0
    %1265 = vmatpush1.msra.mxu0 %v1226
    %1266 = vmatprep.subr.mxu0 0.0
    %1267 = vmatpush1.msra.mxu0 0.0
    %1268 = vmatprep.subr.mxu0 0.0
    %1269 = vmatpush1.msra.mxu0 0.0
    %1270 = vmatprep.subr.mxu0 0.0
    %1271 = vmatpush1.msra.mxu0 0.0
    %1272 = vmatprep.subr.mxu0 0.0
    %1273 = vmatpush1.msra.mxu0 0.0
    %1274 = vmatprep.subr.mxu0 0.0
    %1275 = vmatpush1.msra.mxu0 0.0
    %1276 = vmatprep.subr.mxu0 0.0
    %1277 = vmatpush1.msra.mxu0 0.0
    %1278 = vmatprep.subr.mxu0 0.0
    %1279 = vmatpush1.msra.mxu0 0.0
    %1280 = vmatprep.subr.mxu0 0.0
    %1281 = vmatpush1.msra.mxu0 0.0
    %1282 = vmatprep.subr.mxu0 0.0
    %1283 = vmatpush1.msra.mxu0 0.0
    %1284 = vmatprep.subr.mxu0 0.0
    %1285 = vmatpush1.msra.mxu0 0.0
    %1286 = vmatprep.subr.mxu0 0.0
    %1287 = vmatpush1.msra.mxu0 0.0
    %1288 = vmatprep.subr.mxu0 0.0
    %1289 = vmatpush1.msra.mxu0 0.0
    %1290 = vmatprep.subr.mxu0 0.0
    %1291 = vmatpush1.msra.mxu0 0.0
    %1292 = vmatprep.subr.mxu0 0.0
    %1293 = vmatpush1.msra.mxu0 0.0
    %1294 = vmatprep.subr.mxu0 0.0
    %1295 = vmatpush1.msra.mxu0 0.0
    %1296 = vmatprep.subr.mxu0 0.0
    %1297 = vmatpush1.msra.mxu0 0.0
    %1298 = vmatprep.mubr.f32.mxu0 0.0
    %1299 = vmatmul.mubr.f32.gmra.mrb[0].mxu0 %v1210
    %v1300 = vpop.f32.mrb[0].mxu0
    %v1301 = vadd.f32 %v1232, %v1300
    %v1302 = vpop.f32.mrb[0].mxu0
    %1303 = vdwg.mxu0
    %1304 = vmax.xlane.f32.xlu0 %v1301
    %v1305 = vpop.xlane.xlu0 %1304
    %v1306 = vsub.f32 %v1301, %v1305
    %v1307 = vmul.f32 %v1306, 1.442695
    %v1308 = vpow.pop %v1307
    %1309 = vadd.xlane.f32.xlu0 %v1308
    %v1310 = vpop.xlane.xlu0 %1309
    %v1311 = vlog2.pop %v1310
    %v1312 = vmul.f32 %v1311, 0.6931472
    %v1313 = vsub.f32 %v1306, %v1312
    %s1314 = scalar_lea.vmem [#allocation11], 40
    %1315 = vst [vmem:[%s1314] sm:$0xff] %v1313
    %s1316 = scalar_lea.vmem [#allocation12], 40
    %1317 = vst [vmem:[%s1316] sm:$0xff] %v1210
    %1318 = vst [vmem:[#allocation2] sm:$0xff] %v1210
    %s1319 = scalar_lea.vmem [#allocation3], 48
    %v1320 = vld [vmem:[%s1319] sm:$0xff]
    %v1321 = vld [vmem:[#allocation2] sm:$0xff]
    %v1322 = vadd.f32 %v1320, %v1321
    %v1323 = vld [vmem:[#allocation8] sm:$0xff]
    %v1324 = vld [vmem:[#allocation8 + $0x8] sm:$0xff]
    %v1325 = vld [vmem:[#allocation8 + $0x10] sm:$0xff]
    %v1326 = vld [vmem:[#allocation8 + $0x18] sm:$0xff]
    %v1327 = vld [vmem:[#allocation8 + $0x20] sm:$0xff]
    %v1328 = vld [vmem:[#allocation8 + $0x28] sm:$0xff]
    %v1329 = vld [vmem:[#allocation8 + $0x30] sm:$0xff]
    %v1330 = vld [vmem:[#allocation8 + $0x38] sm:$0xff]
    %v1331 = vld [vmem:[#allocation8 + $0x40] sm:$0xff]
    %v1332 = vld [vmem:[#allocation8 + $0x48] sm:$0xff]
    %v1333 = vld [vmem:[#allocation8 + $0x50] sm:$0xff]
    %v1334 = vld [vmem:[#allocation8 + $0x58] sm:$0xff]
    %v1335 = vld [vmem:[#allocation8 + $0x60] sm:$0xff]
    %v1336 = vld [vmem:[#allocation8 + $0x68] sm:$0xff]
    %v1337 = vld [vmem:[#allocation8 + $0x70] sm:$0xff]
    %v1338 = vld [vmem:[#allocation8 + $0x78] sm:$0xff]
    %v1339 = vld [vmem:[%s3] sm:$0x1]
    %v1341 = vlaneseq
    %v1342 = vshrl.u32 %v1341, 7
    %v1343 = vsub.s32 0, %v1342
    %v1344 = vrot.slane %v1339, %v1343
    %1346 = vmatprep.subr.mxu0 0.0
    %1347 = vmatpush1.msra.mxu0 %v1323
    %1348 = vmatprep.subr.mxu0 0.0
    %1349 = vmatpush1.msra.mxu0 %v1324
    %1350 = vmatprep.subr.mxu0 0.0
    %1351 = vmatpush1.msra.mxu0 %v1325
    %1352 = vmatprep.subr.mxu0 0.0
    %1353 = vmatpush1.msra.mxu0 %v1326
    %1354 = vmatprep.subr.mxu0 0.0
    %1355 = vmatpush1.msra.mxu0 %v1327
    %1356 = vmatprep.subr.mxu0 0.0
    %1357 = vmatpush1.msra.mxu0 %v1328
    %1358 = vmatprep.subr.mxu0 0.0
    %1359 = vmatpush1.msra.mxu0 %v1329
    %1360 = vmatprep.subr.mxu0 0.0
    %1361 = vmatpush1.msra.mxu0 %v1330
    %1362 = vmatprep.subr.mxu0 0.0
    %1363 = vmatpush1.msra.mxu0 %v1331
    %1364 = vmatprep.subr.mxu0 0.0
    %1365 = vmatpush1.msra.mxu0 %v1332
    %1366 = vmatprep.subr.mxu0 0.0
    %1367 = vmatpush1.msra.mxu0 %v1333
    %1368 = vmatprep.subr.mxu0 0.0
    %1369 = vmatpush1.msra.mxu0 %v1334
    %1370 = vmatprep.subr.mxu0 0.0
    %1371 = vmatpush1.msra.mxu0 %v1335
    %1372 = vmatprep.subr.mxu0 0.0
    %1373 = vmatpush1.msra.mxu0 %v1336
    %1374 = vmatprep.subr.mxu0 0.0
    %1375 = vmatpush1.msra.mxu0 %v1337
    %1376 = vmatprep.subr.mxu0 0.0
    %1377 = vmatpush1.msra.mxu0 %v1338
    %1378 = vmatprep.subr.mxu0 0.0
    %1379 = vmatpush1.msra.mxu0 0.0
    %1380 = vmatprep.subr.mxu0 0.0
    %1381 = vmatpush1.msra.mxu0 0.0
    %1382 = vmatprep.subr.mxu0 0.0
    %1383 = vmatpush1.msra.mxu0 0.0
    %1384 = vmatprep.subr.mxu0 0.0
    %1385 = vmatpush1.msra.mxu0 0.0
    %1386 = vmatprep.subr.mxu0 0.0
    %1387 = vmatpush1.msra.mxu0 0.0
    %1388 = vmatprep.subr.mxu0 0.0
    %1389 = vmatpush1.msra.mxu0 0.0
    %1390 = vmatprep.subr.mxu0 0.0
    %1391 = vmatpush1.msra.mxu0 0.0
    %1392 = vmatprep.subr.mxu0 0.0
    %1393 = vmatpush1.msra.mxu0 0.0
    %1394 = vmatprep.subr.mxu0 0.0
    %1395 = vmatpush1.msra.mxu0 0.0
    %1396 = vmatprep.subr.mxu0 0.0
    %1397 = vmatpush1.msra.mxu0 0.0
    %1398 = vmatprep.subr.mxu0 0.0
    %1399 = vmatpush1.msra.mxu0 0.0
    %1400 = vmatprep.subr.mxu0 0.0
    %1401 = vmatpush1.msra.mxu0 0.0
    %1402 = vmatprep.subr.mxu0 0.0
    %1403 = vmatpush1.msra.mxu0 0.0
    %1404 = vmatprep.subr.mxu0 0.0
    %1405 = vmatpush1.msra.mxu0 0.0
    %1406 = vmatprep.subr.mxu0 0.0
    %1407 = vmatpush1.msra.mxu0 0.0
    %1408 = vmatprep.subr.mxu0 0.0
    %1409 = vmatpush1.msra.mxu0 0.0
    %1410 = vmatprep.mubr.f32.mxu0 0.0
    %1411 = vmatmul.mubr.f32.gmra.mrb[0].mxu0 %v1322
    %v1412 = vpop.f32.mrb[0].mxu0
    %v1413 = vadd.f32 %v1344, %v1412
    %v1414 = vpop.f32.mrb[0].mxu0
    %1415 = vdwg.mxu0
    %v1416 = vtanh.pop %v1413
    %v1417 = vld [vmem:[#allocation9] sm:$0xff]
    %v1418 = vld [vmem:[#allocation9 + $0x8] sm:$0xff]
    %v1419 = vld [vmem:[#allocation9 + $0x10] sm:$0xff]
    %v1420 = vld [vmem:[#allocation9 + $0x18] sm:$0xff]
    %v1421 = vld [vmem:[#allocation9 + $0x20] sm:$0xff]
    %v1422 = vld [vmem:[#allocation9 + $0x28] sm:$0xff]
    %v1423 = vld [vmem:[#allocation9 + $0x30] sm:$0xff]
    %v1424 = vld [vmem:[#allocation9 + $0x38] sm:$0xff]
    %v1425 = vld [vmem:[#allocation9 + $0x40] sm:$0xff]
    %v1426 = vld [vmem:[#allocation9 + $0x48] sm:$0xff]
    %v1427 = vld [vmem:[#allocation9 + $0x50] sm:$0xff]
    %v1428 = vld [vmem:[#allocation9 + $0x58] sm:$0xff]
    %v1429 = vld [vmem:[#allocation9 + $0x60] sm:$0xff]
    %v1430 = vld [vmem:[#allocation9 + $0x68] sm:$0xff]
    %v1431 = vld [vmem:[#allocation9 + $0x70] sm:$0xff]
    %v1432 = vld [vmem:[#allocation9 + $0x78] sm:$0xff]
    %v1433 = vld [vmem:[%s5] sm:$0x1]
    %v1435 = vlaneseq
    %v1436 = vshrl.u32 %v1435, 7
    %v1437 = vsub.s32 0, %v1436
    %v1438 = vrot.slane %v1433, %v1437
    %1440 = vmatprep.subr.mxu0 0.0
    %1441 = vmatpush1.msra.mxu0 %v1417
    %1442 = vmatprep.subr.mxu0 0.0
    %1443 = vmatpush1.msra.mxu0 %v1418
    %1444 = vmatprep.subr.mxu0 0.0
    %1445 = vmatpush1.msra.mxu0 %v1419
    %1446 = vmatprep.subr.mxu0 0.0
    %1447 = vmatpush1.msra.mxu0 %v1420
    %1448 = vmatprep.subr.mxu0 0.0
    %1449 = vmatpush1.msra.mxu0 %v1421
    %1450 = vmatprep.subr.mxu0 0.0
    %1451 = vmatpush1.msra.mxu0 %v1422
    %1452 = vmatprep.subr.mxu0 0.0
    %1453 = vmatpush1.msra.mxu0 %v1423
    %1454 = vmatprep.subr.mxu0 0.0
    %1455 = vmatpush1.msra.mxu0 %v1424
    %1456 = vmatprep.subr.mxu0 0.0
    %1457 = vmatpush1.msra.mxu0 %v1425
    %1458 = vmatprep.subr.mxu0 0.0
    %1459 = vmatpush1.msra.mxu0 %v1426
    %1460 = vmatprep.subr.mxu0 0.0
    %1461 = vmatpush1.msra.mxu0 %v1427
    %1462 = vmatprep.subr.mxu0 0.0
    %1463 = vmatpush1.msra.mxu0 %v1428
    %1464 = vmatprep.subr.mxu0 0.0
    %1465 = vmatpush1.msra.mxu0 %v1429
    %1466 = vmatprep.subr.mxu0 0.0
    %1467 = vmatpush1.msra.mxu0 %v1430
    %1468 = vmatprep.subr.mxu0 0.0
    %1469 = vmatpush1.msra.mxu0 %v1431
    %1470 = vmatprep.subr.mxu0 0.0
    %1471 = vmatpush1.msra.mxu0 %v1432
    %1472 = vmatprep.subr.mxu0 0.0
    %1473 = vmatpush1.msra.mxu0 0.0
    %1474 = vmatprep.subr.mxu0 0.0
    %1475 = vmatpush1.msra.mxu0 0.0
    %1476 = vmatprep.subr.mxu0 0.0
    %1477 = vmatpush1.msra.mxu0 0.0
    %1478 = vmatprep.subr.mxu0 0.0
    %1479 = vmatpush1.msra.mxu0 0.0
    %1480 = vmatprep.subr.mxu0 0.0
    %1481 = vmatpush1.msra.mxu0 0.0
    %1482 = vmatprep.subr.mxu0 0.0
    %1483 = vmatpush1.msra.mxu0 0.0
    %1484 = vmatprep.subr.mxu0 0.0
    %1485 = vmatpush1.msra.mxu0 0.0
    %1486 = vmatprep.subr.mxu0 0.0
    %1487 = vmatpush1.msra.mxu0 0.0
    %1488 = vmatprep.subr.mxu0 0.0
    %1489 = vmatpush1.msra.mxu0 0.0
    %1490 = vmatprep.subr.mxu0 0.0
    %1491 = vmatpush1.msra.mxu0 0.0
    %1492 = vmatprep.subr.mxu0 0.0
    %1493 = vmatpush1.msra.mxu0 0.0
    %1494 = vmatprep.subr.mxu0 0.0
    %1495 = vmatpush1.msra.mxu0 0.0
    %1496 = vmatprep.subr.mxu0 0.0
    %1497 = vmatpush1.msra.mxu0 0.0
    %1498 = vmatprep.subr.mxu0 0.0
    %1499 = vmatpush1.msra.mxu0 0.0
    %1500 = vmatprep.subr.mxu0 0.0
    %1501 = vmatpush1.msra.mxu0 0.0
    %1502 = vmatprep.subr.mxu0 0.0
    %1503 = vmatpush1.msra.mxu0 0.0
    %1504 = vmatprep.mubr.f32.mxu0 0.0
    %1505 = vmatmul.mubr.f32.gmra.mrb[0].mxu0 %v1416
    %v1506 = vpop.f32.mrb[0].mxu0
    %v1507 = vadd.f32 %v1438, %v1506
    %v1508 = vpop.f32.mrb[0].mxu0
    %1509 = vdwg.mxu0
    %1510 = vmax.xlane.f32.xlu0 %v1507
    %v1511 = vpop.xlane.xlu0 %1510
    %v1512 = vsub.f32 %v1507, %v1511
    %v1513 = vmul.f32 %v1512, 1.442695
    %v1514 = vpow.pop %v1513
    %1515 = vadd.xlane.f32.xlu0 %v1514
    %v1516 = vpop.xlane.xlu0 %1515
    %v1517 = vlog2.pop %v1516
    %v1518 = vmul.f32 %v1517, 0.6931472
    %v1519 = vsub.f32 %v1512, %v1518
    %s1520 = scalar_lea.vmem [#allocation11], 48
    %1521 = vst [vmem:[%s1520] sm:$0xff] %v1519
    %s1522 = scalar_lea.vmem [#allocation12], 48
    %1523 = vst [vmem:[%s1522] sm:$0xff] %v1416
    %1524 = vst [vmem:[#allocation2] sm:$0xff] %v1416
    %s1525 = scalar_lea.vmem [#allocation3], 56
    %v1526 = vld [vmem:[%s1525] sm:$0xff]
    %v1527 = vld [vmem:[#allocation2] sm:$0xff]
    %v1528 = vadd.f32 %v1526, %v1527
    %v1529 = vld [vmem:[#allocation8] sm:$0xff]
    %v1530 = vld [vmem:[#allocation8 + $0x8] sm:$0xff]
    %v1531 = vld [vmem:[#allocation8 + $0x10] sm:$0xff]
    %v1532 = vld [vmem:[#allocation8 + $0x18] sm:$0xff]
    %v1533 = vld [vmem:[#allocation8 + $0x20] sm:$0xff]
    %v1534 = vld [vmem:[#allocation8 + $0x28] sm:$0xff]
    %v1535 = vld [vmem:[#allocation8 + $0x30] sm:$0xff]
    %v1536 = vld [vmem:[#allocation8 + $0x38] sm:$0xff]
    %v1537 = vld [vmem:[#allocation8 + $0x40] sm:$0xff]
    %v1538 = vld [vmem:[#allocation8 + $0x48] sm:$0xff]
    %v1539 = vld [vmem:[#allocation8 + $0x50] sm:$0xff]
    %v1540 = vld [vmem:[#allocation8 + $0x58] sm:$0xff]
    %v1541 = vld [vmem:[#allocation8 + $0x60] sm:$0xff]
    %v1542 = vld [vmem:[#allocation8 + $0x68] sm:$0xff]
    %v1543 = vld [vmem:[#allocation8 + $0x70] sm:$0xff]
    %v1544 = vld [vmem:[#allocation8 + $0x78] sm:$0xff]
    %v1545 = vld [vmem:[%s3] sm:$0x1]
    %v1547 = vlaneseq
    %v1548 = vshrl.u32 %v1547, 7
    %v1549 = vsub.s32 0, %v1548
    %v1550 = vrot.slane %v1545, %v1549
    %1552 = vmatprep.subr.mxu0 0.0
    %1553 = vmatpush1.msra.mxu0 %v1529
    %1554 = vmatprep.subr.mxu0 0.0
    %1555 = vmatpush1.msra.mxu0 %v1530
    %1556 = vmatprep.subr.mxu0 0.0
    %1557 = vmatpush1.msra.mxu0 %v1531
    %1558 = vmatprep.subr.mxu0 0.0
    %1559 = vmatpush1.msra.mxu0 %v1532
    %1560 = vmatprep.subr.mxu0 0.0
    %1561 = vmatpush1.msra.mxu0 %v1533
    %1562 = vmatprep.subr.mxu0 0.0
    %1563 = vmatpush1.msra.mxu0 %v1534
    %1564 = vmatprep.subr.mxu0 0.0
    %1565 = vmatpush1.msra.mxu0 %v1535
    %1566 = vmatprep.subr.mxu0 0.0
    %1567 = vmatpush1.msra.mxu0 %v1536
    %1568 = vmatprep.subr.mxu0 0.0
    %1569 = vmatpush1.msra.mxu0 %v1537
    %1570 = vmatprep.subr.mxu0 0.0
    %1571 = vmatpush1.msra.mxu0 %v1538
    %1572 = vmatprep.subr.mxu0 0.0
    %1573 = vmatpush1.msra.mxu0 %v1539
    %1574 = vmatprep.subr.mxu0 0.0
    %1575 = vmatpush1.msra.mxu0 %v1540
    %1576 = vmatprep.subr.mxu0 0.0
    %1577 = vmatpush1.msra.mxu0 %v1541
    %1578 = vmatprep.subr.mxu0 0.0
    %1579 = vmatpush1.msra.mxu0 %v1542
    %1580 = vmatprep.subr.mxu0 0.0
    %1581 = vmatpush1.msra.mxu0 %v1543
    %1582 = vmatprep.subr.mxu0 0.0
    %1583 = vmatpush1.msra.mxu0 %v1544
    %1584 = vmatprep.subr.mxu0 0.0
    %1585 = vmatpush1.msra.mxu0 0.0
    %1586 = vmatprep.subr.mxu0 0.0
    %1587 = vmatpush1.msra.mxu0 0.0
    %1588 = vmatprep.subr.mxu0 0.0
    %1589 = vmatpush1.msra.mxu0 0.0
    %1590 = vmatprep.subr.mxu0 0.0
    %1591 = vmatpush1.msra.mxu0 0.0
    %1592 = vmatprep.subr.mxu0 0.0
    %1593 = vmatpush1.msra.mxu0 0.0
    %1594 = vmatprep.subr.mxu0 0.0
    %1595 = vmatpush1.msra.mxu0 0.0
    %1596 = vmatprep.subr.mxu0 0.0
    %1597 = vmatpush1.msra.mxu0 0.0
    %1598 = vmatprep.subr.mxu0 0.0
    %1599 = vmatpush1.msra.mxu0 0.0
    %1600 = vmatprep.subr.mxu0 0.0
    %1601 = vmatpush1.msra.mxu0 0.0
    %1602 = vmatprep.subr.mxu0 0.0
    %1603 = vmatpush1.msra.mxu0 0.0
    %1604 = vmatprep.subr.mxu0 0.0
    %1605 = vmatpush1.msra.mxu0 0.0
    %1606 = vmatprep.subr.mxu0 0.0
    %1607 = vmatpush1.msra.mxu0 0.0
    %1608 = vmatprep.subr.mxu0 0.0
    %1609 = vmatpush1.msra.mxu0 0.0
    %1610 = vmatprep.subr.mxu0 0.0
    %1611 = vmatpush1.msra.mxu0 0.0
    %1612 = vmatprep.subr.mxu0 0.0
    %1613 = vmatpush1.msra.mxu0 0.0
    %1614 = vmatprep.subr.mxu0 0.0
    %1615 = vmatpush1.msra.mxu0 0.0
    %1616 = vmatprep.mubr.f32.mxu0 0.0
    %1617 = vmatmul.mubr.f32.gmra.mrb[0].mxu0 %v1528
    %v1618 = vpop.f32.mrb[0].mxu0
    %v1619 = vadd.f32 %v1550, %v1618
    %v1620 = vpop.f32.mrb[0].mxu0
    %1621 = vdwg.mxu0
    %v1622 = vtanh.pop %v1619
    %v1623 = vld [vmem:[#allocation9] sm:$0xff]
    %v1624 = vld [vmem:[#allocation9 + $0x8] sm:$0xff]
    %v1625 = vld [vmem:[#allocation9 + $0x10] sm:$0xff]
    %v1626 = vld [vmem:[#allocation9 + $0x18] sm:$0xff]
    %v1627 = vld [vmem:[#allocation9 + $0x20] sm:$0xff]
    %v1628 = vld [vmem:[#allocation9 + $0x28] sm:$0xff]
    %v1629 = vld [vmem:[#allocation9 + $0x30] sm:$0xff]
    %v1630 = vld [vmem:[#allocation9 + $0x38] sm:$0xff]
    %v1631 = vld [vmem:[#allocation9 + $0x40] sm:$0xff]
    %v1632 = vld [vmem:[#allocation9 + $0x48] sm:$0xff]
    %v1633 = vld [vmem:[#allocation9 + $0x50] sm:$0xff]
    %v1634 = vld [vmem:[#allocation9 + $0x58] sm:$0xff]
    %v1635 = vld [vmem:[#allocation9 + $0x60] sm:$0xff]
    %v1636 = vld [vmem:[#allocation9 + $0x68] sm:$0xff]
    %v1637 = vld [vmem:[#allocation9 + $0x70] sm:$0xff]
    %v1638 = vld [vmem:[#allocation9 + $0x78] sm:$0xff]
    %v1639 = vld [vmem:[%s5] sm:$0x1]
    %v1641 = vlaneseq
    %v1642 = vshrl.u32 %v1641, 7
    %v1643 = vsub.s32 0, %v1642
    %v1644 = vrot.slane %v1639, %v1643
    %1646 = vmatprep.subr.mxu0 0.0
    %1647 = vmatpush1.msra.mxu0 %v1623
    %1648 = vmatprep.subr.mxu0 0.0
    %1649 = vmatpush1.msra.mxu0 %v1624
    %1650 = vmatprep.subr.mxu0 0.0
    %1651 = vmatpush1.msra.mxu0 %v1625
    %1652 = vmatprep.subr.mxu0 0.0
    %1653 = vmatpush1.msra.mxu0 %v1626
    %1654 = vmatprep.subr.mxu0 0.0
    %1655 = vmatpush1.msra.mxu0 %v1627
    %1656 = vmatprep.subr.mxu0 0.0
    %1657 = vmatpush1.msra.mxu0 %v1628
    %1658 = vmatprep.subr.mxu0 0.0
    %1659 = vmatpush1.msra.mxu0 %v1629
    %1660 = vmatprep.subr.mxu0 0.0
    %1661 = vmatpush1.msra.mxu0 %v1630
    %1662 = vmatprep.subr.mxu0 0.0
    %1663 = vmatpush1.msra.mxu0 %v1631
    %1664 = vmatprep.subr.mxu0 0.0
    %1665 = vmatpush1.msra.mxu0 %v1632
    %1666 = vmatprep.subr.mxu0 0.0
    %1667 = vmatpush1.msra.mxu0 %v1633
    %1668 = vmatprep.subr.mxu0 0.0
    %1669 = vmatpush1.msra.mxu0 %v1634
    %1670 = vmatprep.subr.mxu0 0.0
    %1671 = vmatpush1.msra.mxu0 %v1635
    %1672 = vmatprep.subr.mxu0 0.0
    %1673 = vmatpush1.msra.mxu0 %v1636
    %1674 = vmatprep.subr.mxu0 0.0
    %1675 = vmatpush1.msra.mxu0 %v1637
    %1676 = vmatprep.subr.mxu0 0.0
    %1677 = vmatpush1.msra.mxu0 %v1638
    %1678 = vmatprep.subr.mxu0 0.0
    %1679 = vmatpush1.msra.mxu0 0.0
    %1680 = vmatprep.subr.mxu0 0.0
    %1681 = vmatpush1.msra.mxu0 0.0
    %1682 = vmatprep.subr.mxu0 0.0
    %1683 = vmatpush1.msra.mxu0 0.0
    %1684 = vmatprep.subr.mxu0 0.0
    %1685 = vmatpush1.msra.mxu0 0.0
    %1686 = vmatprep.subr.mxu0 0.0
    %1687 = vmatpush1.msra.mxu0 0.0
    %1688 = vmatprep.subr.mxu0 0.0
    %1689 = vmatpush1.msra.mxu0 0.0
    %1690 = vmatprep.subr.mxu0 0.0
    %1691 = vmatpush1.msra.mxu0 0.0
    %1692 = vmatprep.subr.mxu0 0.0
    %1693 = vmatpush1.msra.mxu0 0.0
    %1694 = vmatprep.subr.mxu0 0.0
    %1695 = vmatpush1.msra.mxu0 0.0
    %1696 = vmatprep.subr.mxu0 0.0
    %1697 = vmatpush1.msra.mxu0 0.0
    %1698 = vmatprep.subr.mxu0 0.0
    %1699 = vmatpush1.msra.mxu0 0.0
    %1700 = vmatprep.subr.mxu0 0.0
    %1701 = vmatpush1.msra.mxu0 0.0
    %1702 = vmatprep.subr.mxu0 0.0
    %1703 = vmatpush1.msra.mxu0 0.0
    %1704 = vmatprep.subr.mxu0 0.0
    %1705 = vmatpush1.msra.mxu0 0.0
    %1706 = vmatprep.subr.mxu0 0.0
    %1707 = vmatpush1.msra.mxu0 0.0
    %1708 = vmatprep.subr.mxu0 0.0
    %1709 = vmatpush1.msra.mxu0 0.0
    %1710 = vmatprep.mubr.f32.mxu0 0.0
    %1711 = vmatmul.mubr.f32.gmra.mrb[0].mxu0 %v1622
    %v1712 = vpop.f32.mrb[0].mxu0
    %v1713 = vadd.f32 %v1644, %v1712
    %v1714 = vpop.f32.mrb[0].mxu0
    %1715 = vdwg.mxu0
    %1716 = vmax.xlane.f32.xlu0 %v1713
    %v1717 = vpop.xlane.xlu0 %1716
    %v1718 = vsub.f32 %v1713, %v1717
    %v1719 = vmul.f32 %v1718, 1.442695
    %v1720 = vpow.pop %v1719
    %1721 = vadd.xlane.f32.xlu0 %v1720
    %v1722 = vpop.xlane.xlu0 %1721
    %v1723 = vlog2.pop %v1722
    %v1724 = vmul.f32 %v1723, 0.6931472
    %v1725 = vsub.f32 %v1718, %v1724
    %s1726 = scalar_lea.vmem [#allocation11], 56
    %1727 = vst [vmem:[%s1726] sm:$0xff] %v1725
    %s1728 = scalar_lea.vmem [#allocation12], 56
    %1729 = vst [vmem:[%s1728] sm:$0xff] %v1622
    %1730 = vst [vmem:[#allocation2] sm:$0xff] %v1622
    // Predicated region
    $region46: #{tpu_custom_call.1} parent=1 // pred_check
      _
    $region47: #{tpu_custom_call.1} parent=1 // pred_check_branch
      %1732 = sbr.rel (0) target = $region49
    $region48: #{tpu_custom_call.1} parent=1 // pred_region
      %s1734 = ssub.s32 1024, 1024
      %1735 = vsyncadd [#allocation5], %s1734
      %s1736 = sshll.u32 [#allocation11], 4
      %s1737 = int_to_ptr.vmem [resolvable:$true] %s1736
      %1742 = dma.vmem_to_hbm [thread:$0]  %s1737, 1024, %s6, [#allocation5], 128, 128, 8
    $region49: #{tpu_custom_call.1} parent=1 // pred_fallthru
      _
    // Predicated region
    $region50: #{tpu_custom_call.1} parent=1 // pred_check
      _
    $region51: #{tpu_custom_call.1} parent=1 // pred_check_branch
      %1744 = sbr.rel (0) target = $region53
    $region52: #{tpu_custom_call.1} parent=1 // pred_region
      %s1746 = ssub.s32 1024, 1024
      %1747 = vsyncadd [#allocation13], %s1746
      %s1748 = sshll.u32 [#allocation12], 4
      %s1749 = int_to_ptr.vmem [resolvable:$true] %s1748
      %1754 = dma.vmem_to_hbm [thread:$0]  %s1749, 1024, %s7, [#allocation13], 128, 128, 8
    $region53: #{tpu_custom_call.1} parent=1 // pred_fallthru
      _
    // Predicated region
    $region54: #{tpu_custom_call.1} parent=1 // pred_check
      _
    $region55: #{tpu_custom_call.1} parent=1 // pred_check_branch
      %1756 = sbr.rel (0) target = $region57
    $region56: #{tpu_custom_call.1} parent=1 // pred_region
      %1757 = dma.done [#allocation5], 1024
    $region57: #{tpu_custom_call.1} parent=1 // pred_fallthru
      _
    // Predicated region
    $region58: #{tpu_custom_call.1} parent=1 // pred_check
      _
    $region59: #{tpu_custom_call.1} parent=1 // pred_check_branch
      %1759 = sbr.rel (0) target = $region61
    $region60: #{tpu_custom_call.1} parent=1 // pred_region
      %1760 = dma.done [#allocation13], 1024
    $region61: #{tpu_custom_call.1} parent=1 // pred_fallthru
      _
    %1761 = vsyncpa [#allocation4], 1
    %1762 = vsyncpa [#allocation7], 1
    %1763 = vsyncpa [#allocation10], 1
    %1764 = vsyncpa [#allocation5], 1
    %1765 = vsyncpa [#allocation13], 1

</llo_original>
